<compile_context>
chip_gen: v7x
topology: tpu7x:2x2x1
jax: 0.10.0
libtpu: 0.0.40
codegen_flags: <defaults>
</compile_context>

<pallas_src>
import functools

import jax
import jax.numpy as jnp
from jax import lax
from jax.experimental import pallas as pl
from jax.experimental.pallas import tpu as pltpu


def _sigmoid(x):
    # Single EUP transcendental instead of exp + divide.
    return 0.5 * jnp.tanh(0.5 * x) + 0.5


# ---------------------------------------------------------------------------
# The fused kernel.
# ---------------------------------------------------------------------------
def densemd_kernel(x_ref, wcat_ref, bcat_ref, whh_ref, wphi_ref, wpsi_ref,
                   wsum_ref, bsum_ref, out_ref, rnn_ref, *, total_w, chunk):
    """Fused 4-direction MDLSTM + positional embedding + (conv1x1 + residual).

    Shapes (B == 1, Ht == Wd == Hh required by the PyTorch module):
      x_ref    : (T, Wt, 2C) bf16  time-major rows, channels = [x_up | x_left]
      wcat_ref : (2C, G)     bf16  input->gate weights, G = 16*Hh
                                   column layout: gate-major, then direction
      bcat_ref : (1, G)      f32   combined LSTM biases, same column layout
      whh_ref  : (4*Hh, G)   bf16  block-structured hidden->gate weights
      wphi_ref : (1, Hh)     f32   W_phi.weight[:, 0]
      wpsi_ref : (1, Hh)     f32   W_psi.weight[:, 0]
      wsum_ref : (Hh, T)     bf16  conv1x1.weight + residual.weight (1x1)
      bsum_ref : (Hh, 1)     f32   conv1x1.bias + residual.bias
      out_ref  : (Hh, Wt*Hh) f32   lane-dense output slab (this width tile)
      rnn_ref  : VMEM (T, Wt, Hh) f32 scratch -- summed + pos-embedded features
    """
    T, Wt, Hh = rnn_ref.shape
    C2 = x_ref.shape[-1]
    G = whh_ref.shape[1]
    GH = G // 4                         # one gate block across the 4 directions
    n_chunks = T // chunk

    # Hoist loop-invariant operand loads / broadcasts out of the recurrence.
    wcat = wcat_ref[...]                # bf16 (2C, G)
    whh = whh_ref[...]                  # bf16 (4*Hh, G)
    bcat = bcat_ref[...]                # f32  (1, G)
    wphi = wphi_ref[...]                # f32  (1, Hh)
    wpsi = wpsi_ref[...]                # f32  (1, Hh)

    # Loop-invariant column positional slab (uses GLOBAL width index of tile).
    w0 = pl.program_id(0) * Wt
    col = (w0 + lax.broadcasted_iota(jnp.int32, (Wt, 1), 0)).astype(jnp.float32)
    col_slab = col * (1.0 / float(max(total_w - 1, 1))) * wpsi      # (Wt, Hh)
    inv_t = 1.0 / float(max(T - 1, 1))

    # ---- 4-direction recurrence, chunked input projection, unrolled steps.
    # NOTE: the PyTorch reference feeds the same, un-reversed sequences to all
    # four nn.LSTMs, so all four directions legitimately share the forward
    # scan order here (only the weights differ).
    def chunk_body(c, carry):
        h, cell = carry                              # (Wt, 4*Hh) f32 each
        t0 = pl.multiple_of(c * chunk, chunk)
        # Projection for `chunk` steps ahead: one MXU matmul, bias folded once.
        xg = (jnp.dot(x_ref[pl.ds(t0, chunk)].reshape(chunk * Wt, C2), wcat,
                      preferred_element_type=jnp.float32)
              + bcat)                                # (chunk*Wt, G) f32

        for tl in range(chunk):                      # fully unrolled
            g = xg[tl * Wt:(tl + 1) * Wt, :] + jnp.dot(
                h.astype(jnp.bfloat16), whh,
                preferred_element_type=jnp.float32)  # (Wt, G) f32
            # TODO(synk): the block-diagonal whh does 4x redundant MXU FLOPs;
            # only split it per-direction if profiling shows MXU-bound.
            gi = _sigmoid(g[:, 0 * GH:1 * GH])
            gf = _sigmoid(g[:, 1 * GH:2 * GH])
            gg = jnp.tanh(g[:, 2 * GH:3 * GH])
            go = _sigmoid(g[:, 3 * GH:4 * GH])
            cell = gf * cell + gi * gg
            h = go * jnp.tanh(cell)
            # Sum the four directions and fuse the positional embedding.
            # (time index == height, sequence index == width; valid because
            #  Ht == Wd and B == 1, matching the PyTorch permute/view algebra.)
            h_sum = (h[:, 0 * Hh:1 * Hh] + h[:, 1 * Hh:2 * Hh]
                     + h[:, 2 * Hh:3 * Hh] + h[:, 3 * Hh:4 * Hh])
            t_glob = c * chunk + tl
            row_term = (t_glob.astype(jnp.float32) * inv_t) * wphi   # (1, Hh)
            rnn_ref[t_glob] = h_sum + row_term + col_slab            # (Wt, Hh)
        return (h, cell)

    zeros = jnp.zeros((Wt, 4 * Hh), jnp.float32)
    lax.fori_loop(0, n_chunks, chunk_body, (zeros, zeros))

    # ---- Epilogue: fused (conv1x1 + residual) = one lane-dense matmul.
    # NCHW Conv2d applied to an NHWC tensor => the height (time) axis is the
    # "channel" axis, i.e. the contraction runs over T.
    f2d = rnn_ref[...].reshape(T, Wt * Hh).astype(jnp.bfloat16)
    out_ref[...] = (jnp.dot(wsum_ref[...], f2d,
                            preferred_element_type=jnp.float32)
                    + bsum_ref[...])


# ---------------------------------------------------------------------------
# Parameter packing: fold the 4 per-direction LSTMs into one lane-dense layout.
# Column index of the G = 16*Hh gate axis: col = gate*4*Hh + dir*Hh + k, with
# PyTorch gate order [i, f, g, o] and direction order [up, down, left, right].
# Input rows 0:C drive up/down (they read x_up); rows C:2C drive left/right.
# ---------------------------------------------------------------------------
def build_fused_params(params, c_in, hidden):
    dirs = ("up", "down", "left", "right")
    H = hidden
    wcat = jnp.zeros((2 * c_in, 4, 4, H), jnp.float32)
    whh_bd = jnp.zeros((4, H, 4, 4, H), jnp.float32)
    bcat = jnp.zeros((4, 4, H), jnp.float32)
    for d, name in enumerate(dirs):
        wih_t, whh_t, b = params[name]       # b stands for (b_ih + b_hh)
        r0 = 0 if d < 2 else c_in
        wcat = wcat.at[r0:r0 + c_in, :, d, :].set(wih_t.reshape(c_in, 4, H))
        whh_bd = whh_bd.at[d, :, :, d, :].set(whh_t.reshape(H, 4, H))
        bcat = bcat.at[:, d, :].set(b.reshape(4, H))
    return (wcat.reshape(2 * c_in, 16 * H),
            whh_bd.reshape(4 * H, 16 * H),
            bcat.reshape(1, 16 * H))


def _choose_width_tiles(bseq):
    """2 width tiles on v7x (2 TensorCores/chip); monolithic elsewhere."""
    try:
        kind = jax.devices()[0].device_kind.lower()
    except Exception:
        return 1
    if ("v7" in kind) or ("tpu7" in kind):
        if bseq % 2 == 0 and (bseq // 2) % 8 == 0:
            return 2
    return 1


def _replicated_spec(arr):
    nd = arr.ndim
    return pl.BlockSpec(arr.shape, lambda i, _nd=nd: (0,) * _nd)


# ---------------------------------------------------------------------------
# Module forward (wrapper = pure layout plumbing + one pallas_call).
# ---------------------------------------------------------------------------
def dense_md_forward(x_feat, params, *, num_width_tiles=None, chunk=8):
    # TODO(synk): the DenseNet backbone class is not defined in the source
    # module; x_feat stands in for the NHWC feature map it would produce.
    B, Ht, Wd, C = x_feat.shape
    Hh = params["up"][1].shape[0]
    assert B == 1, "W_phi/W_psi .view() in the reference requires batch == 1"
    assert Ht == Wd, "MDLSTM output sum requires height == width"
    assert Ht == Hh, "NCHW Conv2d applied to NHWC requires height == hidden"

    T, Bseq, G = Ht, B * Wd, 16 * Hh
    assert Bseq % 8 == 0, "sequence (width) axis must be sublane-aligned"

    if num_width_tiles is None:
        num_width_tiles = _choose_width_tiles(Bseq)
    if Bseq % num_width_tiles != 0 or (Bseq // num_width_tiles) % 8 != 0:
        num_width_tiles = 1
    Wt = Bseq // num_width_tiles

    chunk = max(1, min(chunk, T))
    while T % chunk:
        chunk -= 1

    # PyTorch permute/view algebra (including the x_left reinterpretation).
    x_up = jnp.transpose(x_feat, (0, 2, 1, 3)).reshape(B * Wd, Ht, C)
    x_left = jnp.transpose(x_feat, (0, 1, 3, 2)).reshape(B * Ht, Wd, C)
    xu = jnp.transpose(x_up, (1, 0, 2))               # (T, Bseq, C) time-major
    xl = jnp.transpose(x_left, (1, 0, 2))
    x_cat = jnp.concatenate([xu, xl], axis=-1).astype(jnp.bfloat16)  # (T,Bseq,2C)

    wcat, whh_bd, bcat = build_fused_params(params, C, Hh)
    wcat = wcat.astype(jnp.bfloat16)
    whh_bd = whh_bd.astype(jnp.bfloat16)
    wsum = (params["w1"] + params["w2"]).astype(jnp.bfloat16)  # conv1x1+residual
    bsum = (params["b1"] + params["b2"]).astype(jnp.float32)
    wphi = params["wphi"].astype(jnp.float32)
    wpsi = params["wpsi"].astype(jnp.float32)

    kernel = functools.partial(densemd_kernel, total_w=Wd, chunk=chunk)

    out2d = pl.pallas_call(
        kernel,
        out_shape=jax.ShapeDtypeStruct((Hh, Bseq * Hh), jnp.float32),
        grid=(num_width_tiles,),
        in_specs=[
            pl.BlockSpec((T, Wt, 2 * C), lambda i: (0, i, 0)),
            _replicated_spec(wcat),
            _replicated_spec(bcat),
            _replicated_spec(whh_bd),
            _replicated_spec(wphi),
            _replicated_spec(wpsi),
            _replicated_spec(wsum),
            _replicated_spec(bsum),
        ],
        out_specs=pl.BlockSpec((Hh, Wt * Hh), lambda i: (0, i)),
        scratch_shapes=[pltpu.VMEM((T, Wt, Hh), jnp.float32)],
        compiler_params=pltpu.CompilerParams(
            dimension_semantics=("parallel",),
            vmem_limit_bytes=32 * 1024 * 1024),  # above v5e's 16 MiB default
    )(x_cat, wcat, bcat, whh_bd, wphi, wpsi, wsum, bsum)

    return out2d.reshape(B, Hh, Wd, Hh)


# ---------------------------------------------------------------------------
# Pure-JAX reference (direct transcription of the PyTorch module) for checking.
# ---------------------------------------------------------------------------
def _lstm_ref(x_btc, wih_t, whh_t, b):
    Bseq, _, _ = x_btc.shape
    H = whh_t.shape[0]

    def step(carry, xt):
        h, c = carry
        gates = xt @ wih_t + h @ whh_t + b
        i = jax.nn.sigmoid(gates[:, 0 * H:1 * H])
        f = jax.nn.sigmoid(gates[:, 1 * H:2 * H])
        g = jnp.tanh(gates[:, 2 * H:3 * H])
        o = jax.nn.sigmoid(gates[:, 3 * H:4 * H])
        c = f * c + i * g
        h = o * jnp.tanh(c)
        return (h, c), h

    zeros = jnp.zeros((Bseq, H), jnp.float32)
    _, hs = lax.scan(step, (zeros, zeros), jnp.transpose(x_btc, (1, 0, 2)))
    return jnp.transpose(hs, (1, 0, 2))


def dense_md_reference(x, params):
    B, Ht, Wd, C = x.shape
    x_up = jnp.transpose(x, (0, 2, 1, 3)).reshape(B * Wd, Ht, C)
    x_left = jnp.transpose(x, (0, 1, 3, 2)).reshape(B * Ht, Wd, C)
    out_up = _lstm_ref(x_up, *params["up"])
    out_down = _lstm_ref(x_up, *params["down"])
    out_left = _lstm_ref(x_left, *params["left"])
    out_right = _lstm_ref(x_left, *params["right"])
    Hh = out_up.shape[-1]
    out_up = jnp.transpose(out_up.reshape(B, Wd, Ht, Hh), (0, 2, 1, 3))
    out_down = jnp.transpose(out_down.reshape(B, Wd, Ht, Hh), (0, 2, 1, 3))
    out_left = jnp.transpose(out_left.reshape(B, Ht, Wd, Hh), (0, 2, 1, 3))
    out_right = jnp.transpose(out_right.reshape(B, Ht, Wd, Hh), (0, 2, 1, 3))
    rnn = out_up + out_down + out_left + out_right
    row = (jnp.arange(Ht, dtype=jnp.float32) / max(Ht - 1, 1))[None, :, None, None]
    col = (jnp.arange(Wd, dtype=jnp.float32) / max(Wd - 1, 1))[None, None, :, None]
    final = (rnn + row * params["wphi"].reshape(1, 1, 1, Hh)
             + col * params["wpsi"].reshape(1, 1, 1, Hh))
    w = params["w1"] + params["w2"]
    b = params["b1"] + params["b2"]
    return jnp.einsum("oh,bhwc->bowc", w, final) + b.reshape(1, Hh, 1, 1)


# ---------------------------------------------------------------------------
# Parameter construction + demo run.
# ---------------------------------------------------------------------------
def make_lstm_params(key, c_in, hidden):
    k1, k2, k3 = jax.random.split(key, 3)
    scale = 1.0 / float(hidden) ** 0.5
    wih_t = jax.random.uniform(k1, (c_in, 4 * hidden), jnp.float32, -scale, scale)
    whh_t = jax.random.uniform(k2, (hidden, 4 * hidden), jnp.float32, -scale, scale)
    b = jax.random.uniform(k3, (4 * hidden,), jnp.float32, -scale, scale)
    return wih_t, whh_t, b


if __name__ == "__main__":
    key = jax.random.PRNGKey(0)
    # The reference module implicitly requires batch == 1 (W_phi/W_psi .view),
    # height == width (MDLSTM sum) and height == hidden_channels (NCHW conv on
    # an NHWC tensor).  Small shapes consistent with that:
    B, HT, WD = 1, 32, 32
    HIDDEN = 32        # hidden_channels (== HT)
    C_FEAT = 64        # stand-in for num_init_features + sum(block_config)*growth_rate

    keys = jax.random.split(key, 11)
    params = {
        "up": make_lstm_params(keys[0], C_FEAT, HIDDEN),
        "down": make_lstm_params(keys[1], C_FEAT, HIDDEN),
        "left": make_lstm_params(keys[2], C_FEAT, HIDDEN),
        "right": make_lstm_params(keys[3], C_FEAT, HIDDEN),
        "wphi": jax.random.normal(keys[4], (1, HIDDEN), jnp.float32) * 0.1,
        "wpsi": jax.random.normal(keys[5], (1, HIDDEN), jnp.float32) * 0.1,
        "w1": jax.random.normal(keys[6], (HIDDEN, HIDDEN), jnp.float32) * 0.1,
        "b1": jax.random.normal(keys[7], (HIDDEN, 1), jnp.float32) * 0.1,
        "w2": jax.random.normal(keys[8], (HIDDEN, HIDDEN), jnp.float32) * 0.1,
        "b2": jax.random.normal(keys[9], (HIDDEN, 1), jnp.float32) * 0.1,
    }
    x = jax.random.normal(keys[10], (B, HT, WD, C_FEAT), jnp.float32)

    fwd = jax.jit(functools.partial(dense_md_forward, params=params))
    out = jax.block_until_ready(fwd(x))
    assert out.shape == (B, HIDDEN, WD, HIDDEN), out.shape
    assert bool(jnp.all(jnp.isfinite(out)))

    # Numerical check against a pure-JAX f32 transcription.  The 5e-2 budget is
    # the deliberate bf16-MXU tolerance (the f32-exact variant of this kernel
    # matches to ~1e-5); typical observed max-abs error is ~1e-2.
    ref = jax.block_until_ready(
        jax.jit(functools.partial(dense_md_reference, params=params))(x))
    max_err = float(jnp.max(jnp.abs(out - ref)))
    assert max_err < 5e-2, f"max abs error vs pure-JAX reference: {max_err}"

    print("KERNEL_OK")
</pallas_src>

<mosaic_0001>
module attributes {stable_mosaic.version = 11 : i64} {
  func.func @densemd_kernel(%arg0: i32, %arg1: memref<32x32x128xbf16, #tpu.memory_space<vmem>>, %arg2: memref<128x512xbf16, #tpu.memory_space<vmem>>, %arg3: memref<1x512xf32, #tpu.memory_space<vmem>>, %arg4: memref<128x512xbf16, #tpu.memory_space<vmem>>, %arg5: memref<1x32xf32, #tpu.memory_space<vmem>>, %arg6: memref<1x32xf32, #tpu.memory_space<vmem>>, %arg7: memref<32x32xbf16, #tpu.memory_space<vmem>>, %arg8: memref<32x1xf32, #tpu.memory_space<vmem>>, %arg9: memref<32x1024xf32, #tpu.memory_space<vmem>>, %arg10: memref<32x32x32xf32, #tpu.memory_space<vmem>>) attributes {dimension_semantics = [#tpu.dimension_semantics<parallel>], iteration_bounds = array<i64: 1>, scalar_prefetch = 0 : i64, scratch_operands = 1 : i64, tpu.core_type = #tpu.core_type<tc>, window_params = [{transform_indices = @transform_0, window_bounds = array<i64: 32, 32, 128>}, {pipeline_mode = #tpu.pipeline_mode<synchronous>, transform_indices = @transform_1, window_bounds = array<i64: 128, 512>}, {pipeline_mode = #tpu.pipeline_mode<synchronous>, transform_indices = @transform_2, window_bounds = array<i64: 1, 512>}, {pipeline_mode = #tpu.pipeline_mode<synchronous>, transform_indices = @transform_3, window_bounds = array<i64: 128, 512>}, {pipeline_mode = #tpu.pipeline_mode<synchronous>, transform_indices = @transform_4, window_bounds = array<i64: 1, 32>}, {pipeline_mode = #tpu.pipeline_mode<synchronous>, transform_indices = @transform_5, window_bounds = array<i64: 1, 32>}, {pipeline_mode = #tpu.pipeline_mode<synchronous>, transform_indices = @transform_6, window_bounds = array<i64: 32, 32>}, {pipeline_mode = #tpu.pipeline_mode<synchronous>, transform_indices = @transform_7, window_bounds = array<i64: 32, 1>}, {transform_indices = @transform_8, window_bounds = array<i64: 32, 1024>}]} {
    %c0 = arith.constant 0 : index
    %c0_0 = arith.constant 0 : index
    %0 = vector.load %arg2[%c0, %c0_0] : memref<128x512xbf16, #tpu.memory_space<vmem>>, vector<128x512xbf16>
    %c0_1 = arith.constant 0 : index
    %c0_2 = arith.constant 0 : index
    %1 = vector.load %arg4[%c0_1, %c0_2] : memref<128x512xbf16, #tpu.memory_space<vmem>>, vector<128x512xbf16>
    %c0_3 = arith.constant 0 : index
    %c0_4 = arith.constant 0 : index
    %2 = vector.load %arg3[%c0_3, %c0_4] : memref<1x512xf32, #tpu.memory_space<vmem>>, vector<1x512xf32>
    %c0_5 = arith.constant 0 : index
    %c0_6 = arith.constant 0 : index
    %3 = vector.load %arg5[%c0_5, %c0_6] : memref<1x32xf32, #tpu.memory_space<vmem>>, vector<1x32xf32>
    %c0_7 = arith.constant 0 : index
    %c0_8 = arith.constant 0 : index
    %4 = vector.load %arg6[%c0_7, %c0_8] : memref<1x32xf32, #tpu.memory_space<vmem>>, vector<1x32xf32>
    %c32_i32 = arith.constant 32 : i32
    %5 = arith.muli %arg0, %c32_i32 : i32
    %6 = tpu.iota {dimensions = array<i32: 0>} : vector<32x1xi32>
    %7 = vector.broadcast %5 : i32 to vector<32x1xi32>
    %8 = arith.addi %7, %6 : vector<32x1xi32>
    %9 = arith.sitofp %8 : vector<32x1xi32> to vector<32x1xf32>
    %cst = arith.constant 0.0322580636 : f32
    %10 = vector.broadcast %cst : f32 to vector<32x1xf32>
    %11 = arith.mulf %9, %10 : vector<32x1xf32>
    %12 = vector.broadcast %11 : vector<32x1xf32> to vector<32x32xf32>
    %13 = vector.broadcast %4 : vector<1x32xf32> to vector<32x32xf32>
    %14 = arith.mulf %12, %13 : vector<32x32xf32>
    %cst_9 = arith.constant 0.000000e+00 : f32
    %15 = vector.broadcast %cst_9 : f32 to vector<32x128xf32>
    %c0_i32 = arith.constant 0 : i32
    %c4_i32 = arith.constant 4 : i32
    %16 = arith.addi %c0_i32, %c4_i32 : i32
    %c1_i32 = arith.constant 1 : i32
    %17:2 = scf.for %arg11 = %c0_i32 to %16 step %c1_i32 iter_args(%arg12 = %15, %arg13 = %15) -> (vector<32x128xf32>, vector<32x128xf32>)  : i32 {
      %c8_i32 = arith.constant 8 : i32
      %27 = arith.muli %arg11, %c8_i32 : i32
      %28 = tpu.assume_multiple %27, 8 : i32
      %29 = arith.index_cast %28 : i32 to index
      %c0_21 = arith.constant 0 : index
      %c0_22 = arith.constant 0 : index
      %30 = vector.load %arg1[%29, %c0_21, %c0_22] : memref<32x32x128xbf16, #tpu.memory_space<vmem>>, vector<8x32x128xbf16>
      %31 = vector.shape_cast %30 : vector<8x32x128xbf16> to vector<256x128xbf16>
      %cst_23 = arith.constant dense<0.000000e+00> : vector<256x512xf32>
      %32 = tpu.matmul %31, %0, %cst_23 {dimension_numbers = #tpu.dot_dimension_numbers<[1], [0], [0], [1], [0, 0, 1, 1], [], []>} : vector<256x128xbf16>, vector<128x512xbf16>, vector<256x512xf32> -> vector<256x512xf32>
      %33 = vector.broadcast %2 : vector<1x512xf32> to vector<256x512xf32>
      %34 = arith.addf %32, %33 : vector<256x512xf32>
      %35 = vector.extract_strided_slice %34 {offsets = [0, 0], sizes = [32, 512], strides = [1, 1]} : vector<256x512xf32> to vector<32x512xf32>
      %36 = arith.truncf %arg12 : vector<32x128xf32> to vector<32x128xbf16>
      %cst_24 = arith.constant dense<0.000000e+00> : vector<32x512xf32>
      %37 = tpu.matmul %36, %1, %cst_24 {dimension_numbers = #tpu.dot_dimension_numbers<[1], [0], [0], [1], [0, 0, 1, 1], [], []>} : vector<32x128xbf16>, vector<128x512xbf16>, vector<32x512xf32> -> vector<32x512xf32>
      %38 = arith.addf %35, %37 : vector<32x512xf32>
      %39 = vector.extract_strided_slice %38 {offsets = [0, 0], sizes = [32, 128], strides = [1, 1]} : vector<32x512xf32> to vector<32x128xf32>
      %cst_25 = arith.constant 5.000000e-01 : f32
      %40 = vector.broadcast %cst_25 : f32 to vector<32x128xf32>
      %41 = arith.mulf %40, %39 : vector<32x128xf32>
      %42 = math.tanh %41 : vector<32x128xf32>
      %cst_26 = arith.constant 5.000000e-01 : f32
      %43 = vector.broadcast %cst_26 : f32 to vector<32x128xf32>
      %44 = arith.mulf %43, %42 : vector<32x128xf32>
      %cst_27 = arith.constant 5.000000e-01 : f32
      %45 = vector.broadcast %cst_27 : f32 to vector<32x128xf32>
      %46 = arith.addf %44, %45 : vector<32x128xf32>
      %47 = vector.extract_strided_slice %38 {offsets = [0, 128], sizes = [32, 128], strides = [1, 1]} : vector<32x512xf32> to vector<32x128xf32>
      %cst_28 = arith.constant 5.000000e-01 : f32
      %48 = vector.broadcast %cst_28 : f32 to vector<32x128xf32>
      %49 = arith.mulf %48, %47 : vector<32x128xf32>
      %50 = math.tanh %49 : vector<32x128xf32>
      %cst_29 = arith.constant 5.000000e-01 : f32
      %51 = vector.broadcast %cst_29 : f32 to vector<32x128xf32>
      %52 = arith.mulf %51, %50 : vector<32x128xf32>
      %cst_30 = arith.constant 5.000000e-01 : f32
      %53 = vector.broadcast %cst_30 : f32 to vector<32x128xf32>
      %54 = arith.addf %52, %53 : vector<32x128xf32>
      %55 = vector.extract_strided_slice %38 {offsets = [0, 256], sizes = [32, 128], strides = [1, 1]} : vector<32x512xf32> to vector<32x128xf32>
      %56 = math.tanh %55 : vector<32x128xf32>
      %57 = vector.extract_strided_slice %38 {offsets = [0, 384], sizes = [32, 128], strides = [1, 1]} : vector<32x512xf32> to vector<32x128xf32>
      %cst_31 = arith.constant 5.000000e-01 : f32
      %58 = vector.broadcast %cst_31 : f32 to vector<32x128xf32>
      %59 = arith.mulf %58, %57 : vector<32x128xf32>
      %60 = math.tanh %59 : vector<32x128xf32>
      %cst_32 = arith.constant 5.000000e-01 : f32
      %61 = vector.broadcast %cst_32 : f32 to vector<32x128xf32>
      %62 = arith.mulf %61, %60 : vector<32x128xf32>
      %cst_33 = arith.constant 5.000000e-01 : f32
      %63 = vector.broadcast %cst_33 : f32 to vector<32x128xf32>
      %64 = arith.addf %62, %63 : vector<32x128xf32>
      %65 = arith.mulf %54, %arg13 : vector<32x128xf32>
      %66 = arith.mulf %46, %56 : vector<32x128xf32>
      %67 = arith.addf %65, %66 : vector<32x128xf32>
      %68 = math.tanh %67 : vector<32x128xf32>
      %69 = arith.mulf %64, %68 : vector<32x128xf32>
      %70 = vector.extract_strided_slice %69 {offsets = [0, 0], sizes = [32, 32], strides = [1, 1]} : vector<32x128xf32> to vector<32x32xf32>
      %71 = vector.extract_strided_slice %69 {offsets = [0, 32], sizes = [32, 32], strides = [1, 1]} : vector<32x128xf32> to vector<32x32xf32>
      %72 = arith.addf %70, %71 : vector<32x32xf32>
      %73 = vector.extract_strided_slice %69 {offsets = [0, 64], sizes = [32, 32], strides = [1, 1]} : vector<32x128xf32> to vector<32x32xf32>
      %74 = arith.addf %72, %73 : vector<32x32xf32>
      %75 = vector.extract_strided_slice %69 {offsets = [0, 96], sizes = [32, 32], strides = [1, 1]} : vector<32x128xf32> to vector<32x32xf32>
      %76 = arith.addf %74, %75 : vector<32x32xf32>
      %c8_i32_34 = arith.constant 8 : i32
      %77 = arith.muli %arg11, %c8_i32_34 : i32
      %c0_i32_35 = arith.constant 0 : i32
      %78 = arith.addi %77, %c0_i32_35 : i32
      %79 = arith.sitofp %78 : i32 to f32
      %cst_36 = arith.constant 0.0322580636 : f32
      %80 = arith.mulf %79, %cst_36 : f32
      %81 = vector.broadcast %80 : f32 to vector<1x32xf32>
      %82 = arith.mulf %81, %3 : vector<1x32xf32>
      %83 = vector.broadcast %82 : vector<1x32xf32> to vector<32x32xf32>
      %84 = arith.addf %76, %83 : vector<32x32xf32>
      %85 = arith.addf %84, %14 : vector<32x32xf32>
      %86 = arith.index_cast %78 : i32 to index
      %c0_37 = arith.constant 0 : index
      %c0_38 = arith.constant 0 : index
      %87 = vector.load %arg10[%86, %c0_37, %c0_38] : memref<32x32x32xf32, #tpu.memory_space<vmem>>, vector<1x32x32xf32>
      %88 = vector.shape_cast %87 : vector<1x32x32xf32> to vector<32x32xf32>
      %89 = vector.shape_cast %85 : vector<32x32xf32> to vector<1x32x32xf32>
      tpu.vector_store %arg10[%86, %c0_37, %c0_38], %89 {strides = array<i32>} : memref<32x32x32xf32, #tpu.memory_space<vmem>>, vector<1x32x32xf32>,
      %90 = vector.extract_strided_slice %34 {offsets = [32, 0], sizes = [32, 512], strides = [1, 1]} : vector<256x512xf32> to vector<32x512xf32>
      %91 = arith.truncf %69 : vector<32x128xf32> to vector<32x128xbf16>
      %cst_39 = arith.constant dense<0.000000e+00> : vector<32x512xf32>
      %92 = tpu.matmul %91, %1, %cst_39 {dimension_numbers = #tpu.dot_dimension_numbers<[1], [0], [0], [1], [0, 0, 1, 1], [], []>} : vector<32x128xbf16>, vector<128x512xbf16>, vector<32x512xf32> -> vector<32x512xf32>
      %93 = arith.addf %90, %92 : vector<32x512xf32>
      %94 = vector.extract_strided_slice %93 {offsets = [0, 0], sizes = [32, 128], strides = [1, 1]} : vector<32x512xf32> to vector<32x128xf32>
      %cst_40 = arith.constant 5.000000e-01 : f32
      %95 = vector.broadcast %cst_40 : f32 to vector<32x128xf32>
      %96 = arith.mulf %95, %94 : vector<32x128xf32>
      %97 = math.tanh %96 : vector<32x128xf32>
      %cst_41 = arith.constant 5.000000e-01 : f32
      %98 = vector.broadcast %cst_41 : f32 to vector<32x128xf32>
      %99 = arith.mulf %98, %97 : vector<32x128xf32>
      %cst_42 = arith.constant 5.000000e-01 : f32
      %100 = vector.broadcast %cst_42 : f32 to vector<32x128xf32>
      %101 = arith.addf %99, %100 : vector<32x128xf32>
      %102 = vector.extract_strided_slice %93 {offsets = [0, 128], sizes = [32, 128], strides = [1, 1]} : vector<32x512xf32> to vector<32x128xf32>
      %cst_43 = arith.constant 5.000000e-01 : f32
      %103 = vector.broadcast %cst_43 : f32 to vector<32x128xf32>
      %104 = arith.mulf %103, %102 : vector<32x128xf32>
      %105 = math.tanh %104 : vector<32x128xf32>
      %cst_44 = arith.constant 5.000000e-01 : f32
      %106 = vector.broadcast %cst_44 : f32 to vector<32x128xf32>
      %107 = arith.mulf %106, %105 : vector<32x128xf32>
      %cst_45 = arith.constant 5.000000e-01 : f32
      %108 = vector.broadcast %cst_45 : f32 to vector<32x128xf32>
      %109 = arith.addf %107, %108 : vector<32x128xf32>
      %110 = vector.extract_strided_slice %93 {offsets = [0, 256], sizes = [32, 128], strides = [1, 1]} : vector<32x512xf32> to vector<32x128xf32>
      %111 = math.tanh %110 : vector<32x128xf32>
      %112 = vector.extract_strided_slice %93 {offsets = [0, 384], sizes = [32, 128], strides = [1, 1]} : vector<32x512xf32> to vector<32x128xf32>
      %cst_46 = arith.constant 5.000000e-01 : f32
      %113 = vector.broadcast %cst_46 : f32 to vector<32x128xf32>
      %114 = arith.mulf %113, %112 : vector<32x128xf32>
      %115 = math.tanh %114 : vector<32x128xf32>
      %cst_47 = arith.constant 5.000000e-01 : f32
      %116 = vector.broadcast %cst_47 : f32 to vector<32x128xf32>
      %117 = arith.mulf %116, %115 : vector<32x128xf32>
      %cst_48 = arith.constant 5.000000e-01 : f32
      %118 = vector.broadcast %cst_48 : f32 to vector<32x128xf32>
      %119 = arith.addf %117, %118 : vector<32x128xf32>
      %120 = arith.mulf %109, %67 : vector<32x128xf32>
      %121 = arith.mulf %101, %111 : vector<32x128xf32>
      %122 = arith.addf %120, %121 : vector<32x128xf32>
      %123 = math.tanh %122 : vector<32x128xf32>
      %124 = arith.mulf %119, %123 : vector<32x128xf32>
      %125 = vector.extract_strided_slice %124 {offsets = [0, 0], sizes = [32, 32], strides = [1, 1]} : vector<32x128xf32> to vector<32x32xf32>
      %126 = vector.extract_strided_slice %124 {offsets = [0, 32], sizes = [32, 32], strides = [1, 1]} : vector<32x128xf32> to vector<32x32xf32>
      %127 = arith.addf %125, %126 : vector<32x32xf32>
      %128 = vector.extract_strided_slice %124 {offsets = [0, 64], sizes = [32, 32], strides = [1, 1]} : vector<32x128xf32> to vector<32x32xf32>
      %129 = arith.addf %127, %128 : vector<32x32xf32>
      %130 = vector.extract_strided_slice %124 {offsets = [0, 96], sizes = [32, 32], strides = [1, 1]} : vector<32x128xf32> to vector<32x32xf32>
      %131 = arith.addf %129, %130 : vector<32x32xf32>
      %c8_i32_49 = arith.constant 8 : i32
      %132 = arith.muli %arg11, %c8_i32_49 : i32
      %c1_i32_50 = arith.constant 1 : i32
      %133 = arith.addi %132, %c1_i32_50 : i32
      %134 = arith.sitofp %133 : i32 to f32
      %cst_51 = arith.constant 0.0322580636 : f32
      %135 = arith.mulf %134, %cst_51 : f32
      %136 = vector.broadcast %135 : f32 to vector<1x32xf32>
      %137 = arith.mulf %136, %3 : vector<1x32xf32>
      %138 = vector.broadcast %137 : vector<1x32xf32> to vector<32x32xf32>
      %139 = arith.addf %131, %138 : vector<32x32xf32>
      %140 = arith.addf %139, %14 : vector<32x32xf32>
      %141 = arith.index_cast %133 : i32 to index
      %c0_52 = arith.constant 0 : index
      %c0_53 = arith.constant 0 : index
      %142 = vector.load %arg10[%141, %c0_52, %c0_53] : memref<32x32x32xf32, #tpu.memory_space<vmem>>, vector<1x32x32xf32>
      %143 = vector.shape_cast %142 : vector<1x32x32xf32> to vector<32x32xf32>
      %144 = vector.shape_cast %140 : vector<32x32xf32> to vector<1x32x32xf32>
      tpu.vector_store %arg10[%141, %c0_52, %c0_53], %144 {strides = array<i32>} : memref<32x32x32xf32, #tpu.memory_space<vmem>>, vector<1x32x32xf32>,
      %145 = vector.extract_strided_slice %34 {offsets = [64, 0], sizes = [32, 512], strides = [1, 1]} : vector<256x512xf32> to vector<32x512xf32>
      %146 = arith.truncf %124 : vector<32x128xf32> to vector<32x128xbf16>
      %cst_54 = arith.constant dense<0.000000e+00> : vector<32x512xf32>
      %147 = tpu.matmul %146, %1, %cst_54 {dimension_numbers = #tpu.dot_dimension_numbers<[1], [0], [0], [1], [0, 0, 1, 1], [], []>} : vector<32x128xbf16>, vector<128x512xbf16>, vector<32x512xf32> -> vector<32x512xf32>
      %148 = arith.addf %145, %147 : vector<32x512xf32>
      %149 = vector.extract_strided_slice %148 {offsets = [0, 0], sizes = [32, 128], strides = [1, 1]} : vector<32x512xf32> to vector<32x128xf32>
      %cst_55 = arith.constant 5.000000e-01 : f32
      %150 = vector.broadcast %cst_55 : f32 to vector<32x128xf32>
      %151 = arith.mulf %150, %149 : vector<32x128xf32>
      %152 = math.tanh %151 : vector<32x128xf32>
      %cst_56 = arith.constant 5.000000e-01 : f32
      %153 = vector.broadcast %cst_56 : f32 to vector<32x128xf32>
      %154 = arith.mulf %153, %152 : vector<32x128xf32>
      %cst_57 = arith.constant 5.000000e-01 : f32
      %155 = vector.broadcast %cst_57 : f32 to vector<32x128xf32>
      %156 = arith.addf %154, %155 : vector<32x128xf32>
      %157 = vector.extract_strided_slice %148 {offsets = [0, 128], sizes = [32, 128], strides = [1, 1]} : vector<32x512xf32> to vector<32x128xf32>
      %cst_58 = arith.constant 5.000000e-01 : f32
      %158 = vector.broadcast %cst_58 : f32 to vector<32x128xf32>
      %159 = arith.mulf %158, %157 : vector<32x128xf32>
      %160 = math.tanh %159 : vector<32x128xf32>
      %cst_59 = arith.constant 5.000000e-01 : f32
      %161 = vector.broadcast %cst_59 : f32 to vector<32x128xf32>
      %162 = arith.mulf %161, %160 : vector<32x128xf32>
      %cst_60 = arith.constant 5.000000e-01 : f32
      %163 = vector.broadcast %cst_60 : f32 to vector<32x128xf32>
      %164 = arith.addf %162, %163 : vector<32x128xf32>
      %165 = vector.extract_strided_slice %148 {offsets = [0, 256], sizes = [32, 128], strides = [1, 1]} : vector<32x512xf32> to vector<32x128xf32>
      %166 = math.tanh %165 : vector<32x128xf32>
      %167 = vector.extract_strided_slice %148 {offsets = [0, 384], sizes = [32, 128], strides = [1, 1]} : vector<32x512xf32> to vector<32x128xf32>
      %cst_61 = arith.constant 5.000000e-01 : f32
      %168 = vector.broadcast %cst_61 : f32 to vector<32x128xf32>
      %169 = arith.mulf %168, %167 : vector<32x128xf32>
      %170 = math.tanh %169 : vector<32x128xf32>
      %cst_62 = arith.constant 5.000000e-01 : f32
      %171 = vector.broadcast %cst_62 : f32 to vector<32x128xf32>
      %172 = arith.mulf %171, %170 : vector<32x128xf32>
      %cst_63 = arith.constant 5.000000e-01 : f32
      %173 = vector.broadcast %cst_63 : f32 to vector<32x128xf32>
      %174 = arith.addf %172, %173 : vector<32x128xf32>
      %175 = arith.mulf %164, %122 : vector<32x128xf32>
      %176 = arith.mulf %156, %166 : vector<32x128xf32>
      %177 = arith.addf %175, %176 : vector<32x128xf32>
      %178 = math.tanh %177 : vector<32x128xf32>
      %179 = arith.mulf %174, %178 : vector<32x128xf32>
      %180 = vector.extract_strided_slice %179 {offsets = [0, 0], sizes = [32, 32], strides = [1, 1]} : vector<32x128xf32> to vector<32x32xf32>
      %181 = vector.extract_strided_slice %179 {offsets = [0, 32], sizes = [32, 32], strides = [1, 1]} : vector<32x128xf32> to vector<32x32xf32>
      %182 = arith.addf %180, %181 : vector<32x32xf32>
      %183 = vector.extract_strided_slice %179 {offsets = [0, 64], sizes = [32, 32], strides = [1, 1]} : vector<32x128xf32> to vector<32x32xf32>
      %184 = arith.addf %182, %183 : vector<32x32xf32>
      %185 = vector.extract_strided_slice %179 {offsets = [0, 96], sizes = [32, 32], strides = [1, 1]} : vector<32x128xf32> to vector<32x32xf32>
      %186 = arith.addf %184, %185 : vector<32x32xf32>
      %c8_i32_64 = arith.constant 8 : i32
      %187 = arith.muli %arg11, %c8_i32_64 : i32
      %c2_i32 = arith.constant 2 : i32
      %188 = arith.addi %187, %c2_i32 : i32
      %189 = arith.sitofp %188 : i32 to f32
      %cst_65 = arith.constant 0.0322580636 : f32
      %190 = arith.mulf %189, %cst_65 : f32
      %191 = vector.broadcast %190 : f32 to vector<1x32xf32>
      %192 = arith.mulf %191, %3 : vector<1x32xf32>
      %193 = vector.broadcast %192 : vector<1x32xf32> to vector<32x32xf32>
      %194 = arith.addf %186, %193 : vector<32x32xf32>
      %195 = arith.addf %194, %14 : vector<32x32xf32>
      %196 = arith.index_cast %188 : i32 to index
      %c0_66 = arith.constant 0 : index
      %c0_67 = arith.constant 0 : index
      %197 = vector.load %arg10[%196, %c0_66, %c0_67] : memref<32x32x32xf32, #tpu.memory_space<vmem>>, vector<1x32x32xf32>
      %198 = vector.shape_cast %197 : vector<1x32x32xf32> to vector<32x32xf32>
      %199 = vector.shape_cast %195 : vector<32x32xf32> to vector<1x32x32xf32>
      tpu.vector_store %arg10[%196, %c0_66, %c0_67], %199 {strides = array<i32>} : memref<32x32x32xf32, #tpu.memory_space<vmem>>, vector<1x32x32xf32>,
      %200 = vector.extract_strided_slice %34 {offsets = [96, 0], sizes = [32, 512], strides = [1, 1]} : vector<256x512xf32> to vector<32x512xf32>
      %201 = arith.truncf %179 : vector<32x128xf32> to vector<32x128xbf16>
      %cst_68 = arith.constant dense<0.000000e+00> : vector<32x512xf32>
      %202 = tpu.matmul %201, %1, %cst_68 {dimension_numbers = #tpu.dot_dimension_numbers<[1], [0], [0], [1], [0, 0, 1, 1], [], []>} : vector<32x128xbf16>, vector<128x512xbf16>, vector<32x512xf32> -> vector<32x512xf32>
      %203 = arith.addf %200, %202 : vector<32x512xf32>
      %204 = vector.extract_strided_slice %203 {offsets = [0, 0], sizes = [32, 128], strides = [1, 1]} : vector<32x512xf32> to vector<32x128xf32>
      %cst_69 = arith.constant 5.000000e-01 : f32
      %205 = vector.broadcast %cst_69 : f32 to vector<32x128xf32>
      %206 = arith.mulf %205, %204 : vector<32x128xf32>
      %207 = math.tanh %206 : vector<32x128xf32>
      %cst_70 = arith.constant 5.000000e-01 : f32
      %208 = vector.broadcast %cst_70 : f32 to vector<32x128xf32>
      %209 = arith.mulf %208, %207 : vector<32x128xf32>
      %cst_71 = arith.constant 5.000000e-01 : f32
      %210 = vector.broadcast %cst_71 : f32 to vector<32x128xf32>
      %211 = arith.addf %209, %210 : vector<32x128xf32>
      %212 = vector.extract_strided_slice %203 {offsets = [0, 128], sizes = [32, 128], strides = [1, 1]} : vector<32x512xf32> to vector<32x128xf32>
      %cst_72 = arith.constant 5.000000e-01 : f32
      %213 = vector.broadcast %cst_72 : f32 to vector<32x128xf32>
      %214 = arith.mulf %213, %212 : vector<32x128xf32>
      %215 = math.tanh %214 : vector<32x128xf32>
      %cst_73 = arith.constant 5.000000e-01 : f32
      %216 = vector.broadcast %cst_73 : f32 to vector<32x128xf32>
      %217 = arith.mulf %216, %215 : vector<32x128xf32>
      %cst_74 = arith.constant 5.000000e-01 : f32
      %218 = vector.broadcast %cst_74 : f32 to vector<32x128xf32>
      %219 = arith.addf %217, %218 : vector<32x128xf32>
      %220 = vector.extract_strided_slice %203 {offsets = [0, 256], sizes = [32, 128], strides = [1, 1]} : vector<32x512xf32> to vector<32x128xf32>
      %221 = math.tanh %220 : vector<32x128xf32>
      %222 = vector.extract_strided_slice %203 {offsets = [0, 384], sizes = [32, 128], strides = [1, 1]} : vector<32x512xf32> to vector<32x128xf32>
      %cst_75 = arith.constant 5.000000e-01 : f32
      %223 = vector.broadcast %cst_75 : f32 to vector<32x128xf32>
      %224 = arith.mulf %223, %222 : vector<32x128xf32>
      %225 = math.tanh %224 : vector<32x128xf32>
      %cst_76 = arith.constant 5.000000e-01 : f32
      %226 = vector.broadcast %cst_76 : f32 to vector<32x128xf32>
      %227 = arith.mulf %226, %225 : vector<32x128xf32>
      %cst_77 = arith.constant 5.000000e-01 : f32
      %228 = vector.broadcast %cst_77 : f32 to vector<32x128xf32>
      %229 = arith.addf %227, %228 : vector<32x128xf32>
      %230 = arith.mulf %219, %177 : vector<32x128xf32>
      %231 = arith.mulf %211, %221 : vector<32x128xf32>
      %232 = arith.addf %230, %231 : vector<32x128xf32>
      %233 = math.tanh %232 : vector<32x128xf32>
      %234 = arith.mulf %229, %233 : vector<32x128xf32>
      %235 = vector.extract_strided_slice %234 {offsets = [0, 0], sizes = [32, 32], strides = [1, 1]} : vector<32x128xf32> to vector<32x32xf32>
      %236 = vector.extract_strided_slice %234 {offsets = [0, 32], sizes = [32, 32], strides = [1, 1]} : vector<32x128xf32> to vector<32x32xf32>
      %237 = arith.addf %235, %236 : vector<32x32xf32>
      %238 = vector.extract_strided_slice %234 {offsets = [0, 64], sizes = [32, 32], strides = [1, 1]} : vector<32x128xf32> to vector<32x32xf32>
      %239 = arith.addf %237, %238 : vector<32x32xf32>
      %240 = vector.extract_strided_slice %234 {offsets = [0, 96], sizes = [32, 32], strides = [1, 1]} : vector<32x128xf32> to vector<32x32xf32>
      %241 = arith.addf %239, %240 : vector<32x32xf32>
      %c8_i32_78 = arith.constant 8 : i32
      %242 = arith.muli %arg11, %c8_i32_78 : i32
      %c3_i32 = arith.constant 3 : i32
      %243 = arith.addi %242, %c3_i32 : i32
      %244 = arith.sitofp %243 : i32 to f32
      %cst_79 = arith.constant 0.0322580636 : f32
      %245 = arith.mulf %244, %cst_79 : f32
      %246 = vector.broadcast %245 : f32 to vector<1x32xf32>
      %247 = arith.mulf %246, %3 : vector<1x32xf32>
      %248 = vector.broadcast %247 : vector<1x32xf32> to vector<32x32xf32>
      %249 = arith.addf %241, %248 : vector<32x32xf32>
      %250 = arith.addf %249, %14 : vector<32x32xf32>
      %251 = arith.index_cast %243 : i32 to index
      %c0_80 = arith.constant 0 : index
      %c0_81 = arith.constant 0 : index
      %252 = vector.load %arg10[%251, %c0_80, %c0_81] : memref<32x32x32xf32, #tpu.memory_space<vmem>>, vector<1x32x32xf32>
      %253 = vector.shape_cast %252 : vector<1x32x32xf32> to vector<32x32xf32>
      %254 = vector.shape_cast %250 : vector<32x32xf32> to vector<1x32x32xf32>
      tpu.vector_store %arg10[%251, %c0_80, %c0_81], %254 {strides = array<i32>} : memref<32x32x32xf32, #tpu.memory_space<vmem>>, vector<1x32x32xf32>,
      %255 = vector.extract_strided_slice %34 {offsets = [128, 0], sizes = [32, 512], strides = [1, 1]} : vector<256x512xf32> to vector<32x512xf32>
      %256 = arith.truncf %234 : vector<32x128xf32> to vector<32x128xbf16>
      %cst_82 = arith.constant dense<0.000000e+00> : vector<32x512xf32>
      %257 = tpu.matmul %256, %1, %cst_82 {dimension_numbers = #tpu.dot_dimension_numbers<[1], [0], [0], [1], [0, 0, 1, 1], [], []>} : vector<32x128xbf16>, vector<128x512xbf16>, vector<32x512xf32> -> vector<32x512xf32>
      %258 = arith.addf %255, %257 : vector<32x512xf32>
      %259 = vector.extract_strided_slice %258 {offsets = [0, 0], sizes = [32, 128], strides = [1, 1]} : vector<32x512xf32> to vector<32x128xf32>
      %cst_83 = arith.constant 5.000000e-01 : f32
      %260 = vector.broadcast %cst_83 : f32 to vector<32x128xf32>
      %261 = arith.mulf %260, %259 : vector<32x128xf32>
      %262 = math.tanh %261 : vector<32x128xf32>
      %cst_84 = arith.constant 5.000000e-01 : f32
      %263 = vector.broadcast %cst_84 : f32 to vector<32x128xf32>
      %264 = arith.mulf %263, %262 : vector<32x128xf32>
      %cst_85 = arith.constant 5.000000e-01 : f32
      %265 = vector.broadcast %cst_85 : f32 to vector<32x128xf32>
      %266 = arith.addf %264, %265 : vector<32x128xf32>
      %267 = vector.extract_strided_slice %258 {offsets = [0, 128], sizes = [32, 128], strides = [1, 1]} : vector<32x512xf32> to vector<32x128xf32>
      %cst_86 = arith.constant 5.000000e-01 : f32
      %268 = vector.broadcast %cst_86 : f32 to vector<32x128xf32>
      %269 = arith.mulf %268, %267 : vector<32x128xf32>
      %270 = math.tanh %269 : vector<32x128xf32>
      %cst_87 = arith.constant 5.000000e-01 : f32
      %271 = vector.broadcast %cst_87 : f32 to vector<32x128xf32>
      %272 = arith.mulf %271, %270 : vector<32x128xf32>
      %cst_88 = arith.constant 5.000000e-01 : f32
      %273 = vector.broadcast %cst_88 : f32 to vector<32x128xf32>
      %274 = arith.addf %272, %273 : vector<32x128xf32>
      %275 = vector.extract_strided_slice %258 {offsets = [0, 256], sizes = [32, 128], strides = [1, 1]} : vector<32x512xf32> to vector<32x128xf32>
      %276 = math.tanh %275 : vector<32x128xf32>
      %277 = vector.extract_strided_slice %258 {offsets = [0, 384], sizes = [32, 128], strides = [1, 1]} : vector<32x512xf32> to vector<32x128xf32>
      %cst_89 = arith.constant 5.000000e-01 : f32
      %278 = vector.broadcast %cst_89 : f32 to vector<32x128xf32>
      %279 = arith.mulf %278, %277 : vector<32x128xf32>
      %280 = math.tanh %279 : vector<32x128xf32>
      %cst_90 = arith.constant 5.000000e-01 : f32
      %281 = vector.broadcast %cst_90 : f32 to vector<32x128xf32>
      %282 = arith.mulf %281, %280 : vector<32x128xf32>
      %cst_91 = arith.constant 5.000000e-01 : f32
      %283 = vector.broadcast %cst_91 : f32 to vector<32x128xf32>
      %284 = arith.addf %282, %283 : vector<32x128xf32>
      %285 = arith.mulf %274, %232 : vector<32x128xf32>
      %286 = arith.mulf %266, %276 : vector<32x128xf32>
      %287 = arith.addf %285, %286 : vector<32x128xf32>
      %288 = math.tanh %287 : vector<32x128xf32>
      %289 = arith.mulf %284, %288 : vector<32x128xf32>
      %290 = vector.extract_strided_slice %289 {offsets = [0, 0], sizes = [32, 32], strides = [1, 1]} : vector<32x128xf32> to vector<32x32xf32>
      %291 = vector.extract_strided_slice %289 {offsets = [0, 32], sizes = [32, 32], strides = [1, 1]} : vector<32x128xf32> to vector<32x32xf32>
      %292 = arith.addf %290, %291 : vector<32x32xf32>
      %293 = vector.extract_strided_slice %289 {offsets = [0, 64], sizes = [32, 32], strides = [1, 1]} : vector<32x128xf32> to vector<32x32xf32>
      %294 = arith.addf %292, %293 : vector<32x32xf32>
      %295 = vector.extract_strided_slice %289 {offsets = [0, 96], sizes = [32, 32], strides = [1, 1]} : vector<32x128xf32> to vector<32x32xf32>
      %296 = arith.addf %294, %295 : vector<32x32xf32>
      %c8_i32_92 = arith.constant 8 : i32
      %297 = arith.muli %arg11, %c8_i32_92 : i32
      %c4_i32_93 = arith.constant 4 : i32
      %298 = arith.addi %297, %c4_i32_93 : i32
      %299 = arith.sitofp %298 : i32 to f32
      %cst_94 = arith.constant 0.0322580636 : f32
      %300 = arith.mulf %299, %cst_94 : f32
      %301 = vector.broadcast %300 : f32 to vector<1x32xf32>
      %302 = arith.mulf %301, %3 : vector<1x32xf32>
      %303 = vector.broadcast %302 : vector<1x32xf32> to vector<32x32xf32>
      %304 = arith.addf %296, %303 : vector<32x32xf32>
      %305 = arith.addf %304, %14 : vector<32x32xf32>
      %306 = arith.index_cast %298 : i32 to index
      %c0_95 = arith.constant 0 : index
      %c0_96 = arith.constant 0 : index
      %307 = vector.load %arg10[%306, %c0_95, %c0_96] : memref<32x32x32xf32, #tpu.memory_space<vmem>>, vector<1x32x32xf32>
      %308 = vector.shape_cast %307 : vector<1x32x32xf32> to vector<32x32xf32>
      %309 = vector.shape_cast %305 : vector<32x32xf32> to vector<1x32x32xf32>
      tpu.vector_store %arg10[%306, %c0_95, %c0_96], %309 {strides = array<i32>} : memref<32x32x32xf32, #tpu.memory_space<vmem>>, vector<1x32x32xf32>,
      %310 = vector.extract_strided_slice %34 {offsets = [160, 0], sizes = [32, 512], strides = [1, 1]} : vector<256x512xf32> to vector<32x512xf32>
      %311 = arith.truncf %289 : vector<32x128xf32> to vector<32x128xbf16>
      %cst_97 = arith.constant dense<0.000000e+00> : vector<32x512xf32>
      %312 = tpu.matmul %311, %1, %cst_97 {dimension_numbers = #tpu.dot_dimension_numbers<[1], [0], [0], [1], [0, 0, 1, 1], [], []>} : vector<32x128xbf16>, vector<128x512xbf16>, vector<32x512xf32> -> vector<32x512xf32>
      %313 = arith.addf %310, %312 : vector<32x512xf32>
      %314 = vector.extract_strided_slice %313 {offsets = [0, 0], sizes = [32, 128], strides = [1, 1]} : vector<32x512xf32> to vector<32x128xf32>
      %cst_98 = arith.constant 5.000000e-01 : f32
      %315 = vector.broadcast %cst_98 : f32 to vector<32x128xf32>
      %316 = arith.mulf %315, %314 : vector<32x128xf32>
      %317 = math.tanh %316 : vector<32x128xf32>
      %cst_99 = arith.constant 5.000000e-01 : f32
      %318 = vector.broadcast %cst_99 : f32 to vector<32x128xf32>
      %319 = arith.mulf %318, %317 : vector<32x128xf32>
      %cst_100 = arith.constant 5.000000e-01 : f32
      %320 = vector.broadcast %cst_100 : f32 to vector<32x128xf32>
      %321 = arith.addf %319, %320 : vector<32x128xf32>
      %322 = vector.extract_strided_slice %313 {offsets = [0, 128], sizes = [32, 128], strides = [1, 1]} : vector<32x512xf32> to vector<32x128xf32>
      %cst_101 = arith.constant 5.000000e-01 : f32
      %323 = vector.broadcast %cst_101 : f32 to vector<32x128xf32>
      %324 = arith.mulf %323, %322 : vector<32x128xf32>
      %325 = math.tanh %324 : vector<32x128xf32>
      %cst_102 = arith.constant 5.000000e-01 : f32
      %326 = vector.broadcast %cst_102 : f32 to vector<32x128xf32>
      %327 = arith.mulf %326, %325 : vector<32x128xf32>
      %cst_103 = arith.constant 5.000000e-01 : f32
      %328 = vector.broadcast %cst_103 : f32 to vector<32x128xf32>
      %329 = arith.addf %327, %328 : vector<32x128xf32>
      %330 = vector.extract_strided_slice %313 {offsets = [0, 256], sizes = [32, 128], strides = [1, 1]} : vector<32x512xf32> to vector<32x128xf32>
      %331 = math.tanh %330 : vector<32x128xf32>
      %332 = vector.extract_strided_slice %313 {offsets = [0, 384], sizes = [32, 128], strides = [1, 1]} : vector<32x512xf32> to vector<32x128xf32>
      %cst_104 = arith.constant 5.000000e-01 : f32
      %333 = vector.broadcast %cst_104 : f32 to vector<32x128xf32>
      %334 = arith.mulf %333, %332 : vector<32x128xf32>
      %335 = math.tanh %334 : vector<32x128xf32>
      %cst_105 = arith.constant 5.000000e-01 : f32
      %336 = vector.broadcast %cst_105 : f32 to vector<32x128xf32>
      %337 = arith.mulf %336, %335 : vector<32x128xf32>
      %cst_106 = arith.constant 5.000000e-01 : f32
      %338 = vector.broadcast %cst_106 : f32 to vector<32x128xf32>
      %339 = arith.addf %337, %338 : vector<32x128xf32>
      %340 = arith.mulf %329, %287 : vector<32x128xf32>
      %341 = arith.mulf %321, %331 : vector<32x128xf32>
      %342 = arith.addf %340, %341 : vector<32x128xf32>
      %343 = math.tanh %342 : vector<32x128xf32>
      %344 = arith.mulf %339, %343 : vector<32x128xf32>
      %345 = vector.extract_strided_slice %344 {offsets = [0, 0], sizes = [32, 32], strides = [1, 1]} : vector<32x128xf32> to vector<32x32xf32>
      %346 = vector.extract_strided_slice %344 {offsets = [0, 32], sizes = [32, 32], strides = [1, 1]} : vector<32x128xf32> to vector<32x32xf32>
      %347 = arith.addf %345, %346 : vector<32x32xf32>
      %348 = vector.extract_strided_slice %344 {offsets = [0, 64], sizes = [32, 32], strides = [1, 1]} : vector<32x128xf32> to vector<32x32xf32>
      %349 = arith.addf %347, %348 : vector<32x32xf32>
      %350 = vector.extract_strided_slice %344 {offsets = [0, 96], sizes = [32, 32], strides = [1, 1]} : vector<32x128xf32> to vector<32x32xf32>
      %351 = arith.addf %349, %350 : vector<32x32xf32>
      %c8_i32_107 = arith.constant 8 : i32
      %352 = arith.muli %arg11, %c8_i32_107 : i32
      %c5_i32 = arith.constant 5 : i32
      %353 = arith.addi %352, %c5_i32 : i32
      %354 = arith.sitofp %353 : i32 to f32
      %cst_108 = arith.constant 0.0322580636 : f32
      %355 = arith.mulf %354, %cst_108 : f32
      %356 = vector.broadcast %355 : f32 to vector<1x32xf32>
      %357 = arith.mulf %356, %3 : vector<1x32xf32>
      %358 = vector.broadcast %357 : vector<1x32xf32> to vector<32x32xf32>
      %359 = arith.addf %351, %358 : vector<32x32xf32>
      %360 = arith.addf %359, %14 : vector<32x32xf32>
      %361 = arith.index_cast %353 : i32 to index
      %c0_109 = arith.constant 0 : index
      %c0_110 = arith.constant 0 : index
      %362 = vector.load %arg10[%361, %c0_109, %c0_110] : memref<32x32x32xf32, #tpu.memory_space<vmem>>, vector<1x32x32xf32>
      %363 = vector.shape_cast %362 : vector<1x32x32xf32> to vector<32x32xf32>
      %364 = vector.shape_cast %360 : vector<32x32xf32> to vector<1x32x32xf32>
      tpu.vector_store %arg10[%361, %c0_109, %c0_110], %364 {strides = array<i32>} : memref<32x32x32xf32, #tpu.memory_space<vmem>>, vector<1x32x32xf32>,
      %365 = vector.extract_strided_slice %34 {offsets = [192, 0], sizes = [32, 512], strides = [1, 1]} : vector<256x512xf32> to vector<32x512xf32>
      %366 = arith.truncf %344 : vector<32x128xf32> to vector<32x128xbf16>
      %cst_111 = arith.constant dense<0.000000e+00> : vector<32x512xf32>
      %367 = tpu.matmul %366, %1, %cst_111 {dimension_numbers = #tpu.dot_dimension_numbers<[1], [0], [0], [1], [0, 0, 1, 1], [], []>} : vector<32x128xbf16>, vector<128x512xbf16>, vector<32x512xf32> -> vector<32x512xf32>
      %368 = arith.addf %365, %367 : vector<32x512xf32>
      %369 = vector.extract_strided_slice %368 {offsets = [0, 0], sizes = [32, 128], strides = [1, 1]} : vector<32x512xf32> to vector<32x128xf32>
      %cst_112 = arith.constant 5.000000e-01 : f32
      %370 = vector.broadcast %cst_112 : f32 to vector<32x128xf32>
      %371 = arith.mulf %370, %369 : vector<32x128xf32>
      %372 = math.tanh %371 : vector<32x128xf32>
      %cst_113 = arith.constant 5.000000e-01 : f32
      %373 = vector.broadcast %cst_113 : f32 to vector<32x128xf32>
      %374 = arith.mulf %373, %372 : vector<32x128xf32>
      %cst_114 = arith.constant 5.000000e-01 : f32
      %375 = vector.broadcast %cst_114 : f32 to vector<32x128xf32>
      %376 = arith.addf %374, %375 : vector<32x128xf32>
      %377 = vector.extract_strided_slice %368 {offsets = [0, 128], sizes = [32, 128], strides = [1, 1]} : vector<32x512xf32> to vector<32x128xf32>
      %cst_115 = arith.constant 5.000000e-01 : f32
      %378 = vector.broadcast %cst_115 : f32 to vector<32x128xf32>
      %379 = arith.mulf %378, %377 : vector<32x128xf32>
      %380 = math.tanh %379 : vector<32x128xf32>
      %cst_116 = arith.constant 5.000000e-01 : f32
      %381 = vector.broadcast %cst_116 : f32 to vector<32x128xf32>
      %382 = arith.mulf %381, %380 : vector<32x128xf32>
      %cst_117 = arith.constant 5.000000e-01 : f32
      %383 = vector.broadcast %cst_117 : f32 to vector<32x128xf32>
      %384 = arith.addf %382, %383 : vector<32x128xf32>
      %385 = vector.extract_strided_slice %368 {offsets = [0, 256], sizes = [32, 128], strides = [1, 1]} : vector<32x512xf32> to vector<32x128xf32>
      %386 = math.tanh %385 : vector<32x128xf32>
      %387 = vector.extract_strided_slice %368 {offsets = [0, 384], sizes = [32, 128], strides = [1, 1]} : vector<32x512xf32> to vector<32x128xf32>
      %cst_118 = arith.constant 5.000000e-01 : f32
      %388 = vector.broadcast %cst_118 : f32 to vector<32x128xf32>
      %389 = arith.mulf %388, %387 : vector<32x128xf32>
      %390 = math.tanh %389 : vector<32x128xf32>
      %cst_119 = arith.constant 5.000000e-01 : f32
      %391 = vector.broadcast %cst_119 : f32 to vector<32x128xf32>
      %392 = arith.mulf %391, %390 : vector<32x128xf32>
      %cst_120 = arith.constant 5.000000e-01 : f32
      %393 = vector.broadcast %cst_120 : f32 to vector<32x128xf32>
      %394 = arith.addf %392, %393 : vector<32x128xf32>
      %395 = arith.mulf %384, %342 : vector<32x128xf32>
      %396 = arith.mulf %376, %386 : vector<32x128xf32>
      %397 = arith.addf %395, %396 : vector<32x128xf32>
      %398 = math.tanh %397 : vector<32x128xf32>
      %399 = arith.mulf %394, %398 : vector<32x128xf32>
      %400 = vector.extract_strided_slice %399 {offsets = [0, 0], sizes = [32, 32], strides = [1, 1]} : vector<32x128xf32> to vector<32x32xf32>
      %401 = vector.extract_strided_slice %399 {offsets = [0, 32], sizes = [32, 32], strides = [1, 1]} : vector<32x128xf32> to vector<32x32xf32>
      %402 = arith.addf %400, %401 : vector<32x32xf32>
      %403 = vector.extract_strided_slice %399 {offsets = [0, 64], sizes = [32, 32], strides = [1, 1]} : vector<32x128xf32> to vector<32x32xf32>
      %404 = arith.addf %402, %403 : vector<32x32xf32>
      %405 = vector.extract_strided_slice %399 {offsets = [0, 96], sizes = [32, 32], strides = [1, 1]} : vector<32x128xf32> to vector<32x32xf32>
      %406 = arith.addf %404, %405 : vector<32x32xf32>
      %c8_i32_121 = arith.constant 8 : i32
      %407 = arith.muli %arg11, %c8_i32_121 : i32
      %c6_i32 = arith.constant 6 : i32
      %408 = arith.addi %407, %c6_i32 : i32
      %409 = arith.sitofp %408 : i32 to f32
      %cst_122 = arith.constant 0.0322580636 : f32
      %410 = arith.mulf %409, %cst_122 : f32
      %411 = vector.broadcast %410 : f32 to vector<1x32xf32>
      %412 = arith.mulf %411, %3 : vector<1x32xf32>
      %413 = vector.broadcast %412 : vector<1x32xf32> to vector<32x32xf32>
      %414 = arith.addf %406, %413 : vector<32x32xf32>
      %415 = arith.addf %414, %14 : vector<32x32xf32>
      %416 = arith.index_cast %408 : i32 to index
      %c0_123 = arith.constant 0 : index
      %c0_124 = arith.constant 0 : index
      %417 = vector.load %arg10[%416, %c0_123, %c0_124] : memref<32x32x32xf32, #tpu.memory_space<vmem>>, vector<1x32x32xf32>
      %418 = vector.shape_cast %417 : vector<1x32x32xf32> to vector<32x32xf32>
      %419 = vector.shape_cast %415 : vector<32x32xf32> to vector<1x32x32xf32>
      tpu.vector_store %arg10[%416, %c0_123, %c0_124], %419 {strides = array<i32>} : memref<32x32x32xf32, #tpu.memory_space<vmem>>, vector<1x32x32xf32>,
      %420 = vector.extract_strided_slice %34 {offsets = [224, 0], sizes = [32, 512], strides = [1, 1]} : vector<256x512xf32> to vector<32x512xf32>
      %421 = arith.truncf %399 : vector<32x128xf32> to vector<32x128xbf16>
      %cst_125 = arith.constant dense<0.000000e+00> : vector<32x512xf32>
      %422 = tpu.matmul %421, %1, %cst_125 {dimension_numbers = #tpu.dot_dimension_numbers<[1], [0], [0], [1], [0, 0, 1, 1], [], []>} : vector<32x128xbf16>, vector<128x512xbf16>, vector<32x512xf32> -> vector<32x512xf32>
      %423 = arith.addf %420, %422 : vector<32x512xf32>
      %424 = vector.extract_strided_slice %423 {offsets = [0, 0], sizes = [32, 128], strides = [1, 1]} : vector<32x512xf32> to vector<32x128xf32>
      %cst_126 = arith.constant 5.000000e-01 : f32
      %425 = vector.broadcast %cst_126 : f32 to vector<32x128xf32>
      %426 = arith.mulf %425, %424 : vector<32x128xf32>
      %427 = math.tanh %426 : vector<32x128xf32>
      %cst_127 = arith.constant 5.000000e-01 : f32
      %428 = vector.broadcast %cst_127 : f32 to vector<32x128xf32>
      %429 = arith.mulf %428, %427 : vector<32x128xf32>
      %cst_128 = arith.constant 5.000000e-01 : f32
      %430 = vector.broadcast %cst_128 : f32 to vector<32x128xf32>
      %431 = arith.addf %429, %430 : vector<32x128xf32>
      %432 = vector.extract_strided_slice %423 {offsets = [0, 128], sizes = [32, 128], strides = [1, 1]} : vector<32x512xf32> to vector<32x128xf32>
      %cst_129 = arith.constant 5.000000e-01 : f32
      %433 = vector.broadcast %cst_129 : f32 to vector<32x128xf32>
      %434 = arith.mulf %433, %432 : vector<32x128xf32>
      %435 = math.tanh %434 : vector<32x128xf32>
      %cst_130 = arith.constant 5.000000e-01 : f32
      %436 = vector.broadcast %cst_130 : f32 to vector<32x128xf32>
      %437 = arith.mulf %436, %435 : vector<32x128xf32>
      %cst_131 = arith.constant 5.000000e-01 : f32
      %438 = vector.broadcast %cst_131 : f32 to vector<32x128xf32>
      %439 = arith.addf %437, %438 : vector<32x128xf32>
      %440 = vector.extract_strided_slice %423 {offsets = [0, 256], sizes = [32, 128], strides = [1, 1]} : vector<32x512xf32> to vector<32x128xf32>
      %441 = math.tanh %440 : vector<32x128xf32>
      %442 = vector.extract_strided_slice %423 {offsets = [0, 384], sizes = [32, 128], strides = [1, 1]} : vector<32x512xf32> to vector<32x128xf32>
      %cst_132 = arith.constant 5.000000e-01 : f32
      %443 = vector.broadcast %cst_132 : f32 to vector<32x128xf32>
      %444 = arith.mulf %443, %442 : vector<32x128xf32>
      %445 = math.tanh %444 : vector<32x128xf32>
      %cst_133 = arith.constant 5.000000e-01 : f32
      %446 = vector.broadcast %cst_133 : f32 to vector<32x128xf32>
      %447 = arith.mulf %446, %445 : vector<32x128xf32>
      %cst_134 = arith.constant 5.000000e-01 : f32
      %448 = vector.broadcast %cst_134 : f32 to vector<32x128xf32>
      %449 = arith.addf %447, %448 : vector<32x128xf32>
      %450 = arith.mulf %439, %397 : vector<32x128xf32>
      %451 = arith.mulf %431, %441 : vector<32x128xf32>
      %452 = arith.addf %450, %451 : vector<32x128xf32>
      %453 = math.tanh %452 : vector<32x128xf32>
      %454 = arith.mulf %449, %453 : vector<32x128xf32>
      %455 = vector.extract_strided_slice %454 {offsets = [0, 0], sizes = [32, 32], strides = [1, 1]} : vector<32x128xf32> to vector<32x32xf32>
      %456 = vector.extract_strided_slice %454 {offsets = [0, 32], sizes = [32, 32], strides = [1, 1]} : vector<32x128xf32> to vector<32x32xf32>
      %457 = arith.addf %455, %456 : vector<32x32xf32>
      %458 = vector.extract_strided_slice %454 {offsets = [0, 64], sizes = [32, 32], strides = [1, 1]} : vector<32x128xf32> to vector<32x32xf32>
      %459 = arith.addf %457, %458 : vector<32x32xf32>
      %460 = vector.extract_strided_slice %454 {offsets = [0, 96], sizes = [32, 32], strides = [1, 1]} : vector<32x128xf32> to vector<32x32xf32>
      %461 = arith.addf %459, %460 : vector<32x32xf32>
      %c8_i32_135 = arith.constant 8 : i32
      %462 = arith.muli %arg11, %c8_i32_135 : i32
      %c7_i32 = arith.constant 7 : i32
      %463 = arith.addi %462, %c7_i32 : i32
      %464 = arith.sitofp %463 : i32 to f32
      %cst_136 = arith.constant 0.0322580636 : f32
      %465 = arith.mulf %464, %cst_136 : f32
      %466 = vector.broadcast %465 : f32 to vector<1x32xf32>
      %467 = arith.mulf %466, %3 : vector<1x32xf32>
      %468 = vector.broadcast %467 : vector<1x32xf32> to vector<32x32xf32>
      %469 = arith.addf %461, %468 : vector<32x32xf32>
      %470 = arith.addf %469, %14 : vector<32x32xf32>
      %471 = arith.index_cast %463 : i32 to index
      %c0_137 = arith.constant 0 : index
      %c0_138 = arith.constant 0 : index
      %472 = vector.load %arg10[%471, %c0_137, %c0_138] : memref<32x32x32xf32, #tpu.memory_space<vmem>>, vector<1x32x32xf32>
      %473 = vector.shape_cast %472 : vector<1x32x32xf32> to vector<32x32xf32>
      %474 = vector.shape_cast %470 : vector<32x32xf32> to vector<1x32x32xf32>
      tpu.vector_store %arg10[%471, %c0_137, %c0_138], %474 {strides = array<i32>} : memref<32x32x32xf32, #tpu.memory_space<vmem>>, vector<1x32x32xf32>,
      scf.yield %454, %452 : vector<32x128xf32>, vector<32x128xf32>
    }
    %c4_i32_10 = arith.constant 4 : i32
    %c0_11 = arith.constant 0 : index
    %c0_12 = arith.constant 0 : index
    %c0_13 = arith.constant 0 : index
    %18 = vector.load %arg10[%c0_11, %c0_12, %c0_13] : memref<32x32x32xf32, #tpu.memory_space<vmem>>, vector<32x32x32xf32>
    %19 = vector.shape_cast %18 : vector<32x32x32xf32> to vector<32x1024xf32>
    %20 = arith.truncf %19 : vector<32x1024xf32> to vector<32x1024xbf16>
    %c0_14 = arith.constant 0 : index
    %c0_15 = arith.constant 0 : index
    %21 = vector.load %arg7[%c0_14, %c0_15] : memref<32x32xbf16, #tpu.memory_space<vmem>>, vector<32x32xbf16>
    %cst_16 = arith.constant dense<0.000000e+00> : vector<32x1024xf32>
    %22 = tpu.matmul %21, %20, %cst_16 {dimension_numbers = #tpu.dot_dimension_numbers<[1], [0], [0], [1], [0, 0, 1, 1], [], []>} : vector<32x32xbf16>, vector<32x1024xbf16>, vector<32x1024xf32> -> vector<32x1024xf32>
    %c0_17 = arith.constant 0 : index
    %c0_18 = arith.constant 0 : index
    %23 = vector.load %arg8[%c0_17, %c0_18] : memref<32x1xf32, #tpu.memory_space<vmem>>, vector<32x1xf32>
    %24 = vector.broadcast %23 : vector<32x1xf32> to vector<32x1024xf32>
    %25 = arith.addf %22, %24 : vector<32x1024xf32>
    %c0_19 = arith.constant 0 : index
    %c0_20 = arith.constant 0 : index
    %26 = vector.load %arg9[%c0_19, %c0_20] : memref<32x1024xf32, #tpu.memory_space<vmem>>, vector<32x1024xf32>
    tpu.vector_store %arg9[%c0_19, %c0_20], %25 {strides = array<i32>} : memref<32x1024xf32, #tpu.memory_space<vmem>>, vector<32x1024xf32>,
    return
  }
  func.func @transform_0(%arg0: i32) -> (i32, i32, i32) {
    %c0_i32 = arith.constant 0 : i32
    %c0_i32_0 = arith.constant 0 : i32
    %c0_i32_1 = arith.constant 0 : i32
    return %c0_i32, %arg0, %c0_i32_0 : i32, i32, i32
  }
  func.func @transform_1(%arg0: i32) -> (i32, i32) {
    %c0_i32 = arith.constant 0 : i32
    %c0_i32_0 = arith.constant 0 : i32
    %c0_i32_1 = arith.constant 0 : i32
    return %c0_i32, %c0_i32_0 : i32, i32
  }
  func.func @transform_2(%arg0: i32) -> (i32, i32) {
    %c0_i32 = arith.constant 0 : i32
    %c0_i32_0 = arith.constant 0 : i32
    %c0_i32_1 = arith.constant 0 : i32
    return %c0_i32, %c0_i32_0 : i32, i32
  }
  func.func @transform_3(%arg0: i32) -> (i32, i32) {
    %c0_i32 = arith.constant 0 : i32
    %c0_i32_0 = arith.constant 0 : i32
    %c0_i32_1 = arith.constant 0 : i32
    return %c0_i32, %c0_i32_0 : i32, i32
  }
  func.func @transform_4(%arg0: i32) -> (i32, i32) {
    %c0_i32 = arith.constant 0 : i32
    %c0_i32_0 = arith.constant 0 : i32
    %c0_i32_1 = arith.constant 0 : i32
    return %c0_i32, %c0_i32_0 : i32, i32
  }
  func.func @transform_5(%arg0: i32) -> (i32, i32) {
    %c0_i32 = arith.constant 0 : i32
    %c0_i32_0 = arith.constant 0 : i32
    %c0_i32_1 = arith.constant 0 : i32
    return %c0_i32, %c0_i32_0 : i32, i32
  }
  func.func @transform_6(%arg0: i32) -> (i32, i32) {
    %c0_i32 = arith.constant 0 : i32
    %c0_i32_0 = arith.constant 0 : i32
    %c0_i32_1 = arith.constant 0 : i32
    return %c0_i32, %c0_i32_0 : i32, i32
  }
  func.func @transform_7(%arg0: i32) -> (i32, i32) {
    %c0_i32 = arith.constant 0 : i32
    %c0_i32_0 = arith.constant 0 : i32
    %c0_i32_1 = arith.constant 0 : i32
    return %c0_i32, %c0_i32_0 : i32, i32
  }
  func.func @transform_8(%arg0: i32) -> (i32, i32) {
    %c0_i32 = arith.constant 0 : i32
    %c0_i32_0 = arith.constant 0 : i32
    return %c0_i32, %arg0 : i32, i32
  }
}

</mosaic_0001>

<llo_original>
// kernel: dense_md_forward.1
$region0: #{dense_md_forward.1}
  #allocation0 [shape = 'u32[]', space=smem, size = 0x4, offset = 0x4, fixed_abs, tag = 'smem constant byte address 0x4 - core index']
  #allocation1 [shape = 'u32[144,128]{1,0:T(1,128)}', space=vmem, size = 0x12000, scoped, tag = 'internal scratch']
  #allocation2 [shape = 'f32[32,32,32]{2,1,0:T(8,128)}', space=vmem, size = 0x80000, scoped, tag = 'scratch operand']
  %s0 = inlined_call_operand.vmem [shape: bf16[32,32,128], index: 0, kind: input, shape index: {}]
  %s1 = inlined_call_operand.vmem [shape: bf16[128,512], index: 1, kind: input, shape index: {}]
  %s2 = inlined_call_operand.vmem [shape: f32[1,512], index: 2, kind: input, shape index: {}]
  %s3 = inlined_call_operand.vmem [shape: bf16[128,512], index: 3, kind: input, shape index: {}]
  %s4 = inlined_call_operand.vmem [shape: f32[1,32], index: 4, kind: input, shape index: {}]
  %s5 = inlined_call_operand.vmem [shape: f32[1,32], index: 5, kind: input, shape index: {}]
  %s6 = inlined_call_operand.vmem [shape: bf16[32,32], index: 6, kind: input, shape index: {}]
  %s7 = inlined_call_operand.vmem [shape: f32[32,1], index: 7, kind: input, shape index: {}]
  %s8 = inlined_call_operand.vmem [shape: f32[32,1024], index: 8, kind: output, shape index: {}]
  %s9 = sld [smem:[#allocation0]]
  $region49: #{dense_md_forward.1} parent=0
    _
  %s11 = ssub.s32 1, %s9
  %s12 = scalar_select 0, %s11, %s9
  // Predicated region
  $region2: #{dense_md_forward.1} parent=0 // pred_check
    _
  $region3: #{dense_md_forward.1} parent=0 // pred_check_branch
    %14 = sbr.rel (0) target = $region5
  $region4: #{dense_md_forward.1} parent=0 // pred_region
    _
  $region5: #{dense_md_forward.1} parent=0 // pred_fallthru
    _
  // Predicated region
  $region6: #{dense_md_forward.1} parent=0 // pred_check
    _
  $region7: #{dense_md_forward.1} parent=0 // pred_check_branch
    %16 = sbr.rel (0) target = $region9
  $region8: #{dense_md_forward.1} parent=0 // pred_region
    _
  $region9: #{dense_md_forward.1} parent=0 // pred_fallthru
    _
  // Predicated region
  $region10: #{dense_md_forward.1} parent=0 // pred_check
    _
  $region11: #{dense_md_forward.1} parent=0 // pred_check_branch
    %18 = sbr.rel (0) target = $region13
  $region12: #{dense_md_forward.1} parent=0 // pred_region
    _
  $region13: #{dense_md_forward.1} parent=0 // pred_fallthru
    _
  // Predicated region
  $region14: #{dense_md_forward.1} parent=0 // pred_check
    _
  $region15: #{dense_md_forward.1} parent=0 // pred_check_branch
    %20 = sbr.rel (0) target = $region17
  $region16: #{dense_md_forward.1} parent=0 // pred_region
    _
  $region17: #{dense_md_forward.1} parent=0 // pred_fallthru
    _
  // Predicated region
  $region18: #{dense_md_forward.1} parent=0 // pred_check
    _
  $region19: #{dense_md_forward.1} parent=0 // pred_check_branch
    %22 = sbr.rel (0) target = $region21
  $region20: #{dense_md_forward.1} parent=0 // pred_region
    _
  $region21: #{dense_md_forward.1} parent=0 // pred_fallthru
    _
  // Predicated region
  $region22: #{dense_md_forward.1} parent=0 // pred_check
    _
  $region23: #{dense_md_forward.1} parent=0 // pred_check_branch
    %24 = sbr.rel (0) target = $region25
  $region24: #{dense_md_forward.1} parent=0 // pred_region
    _
  $region25: #{dense_md_forward.1} parent=0 // pred_fallthru
    _
  // Predicated region
  $region26: #{dense_md_forward.1} parent=0 // pred_check
    _
  $region27: #{dense_md_forward.1} parent=0 // pred_check_branch
    %26 = sbr.rel (0) target = $region29
  $region28: #{dense_md_forward.1} parent=0 // pred_region
    _
  $region29: #{dense_md_forward.1} parent=0 // pred_fallthru
    _
  // Predicated region
  $region30: #{dense_md_forward.1} parent=0 // pred_check
    _
  $region31: #{dense_md_forward.1} parent=0 // pred_check_branch
    %28 = sbr.rel (0) target = $region33
  $region32: #{dense_md_forward.1} parent=0 // pred_region
    _
  $region33: #{dense_md_forward.1} parent=0 // pred_fallthru
    _
  %v30 = vld [vmem:[%s1] sm:$0xff]
  %v31 = vld [vmem:[%s1 + $0x8] sm:$0xff]
  %v32 = vld [vmem:[%s1 + $0x10] sm:$0xff]
  %v33 = vld [vmem:[%s1 + $0x18] sm:$0xff]
  %v34 = vld [vmem:[%s1 + $0x20] sm:$0xff]
  %v35 = vld [vmem:[%s1 + $0x28] sm:$0xff]
  %v36 = vld [vmem:[%s1 + $0x30] sm:$0xff]
  %v37 = vld [vmem:[%s1 + $0x38] sm:$0xff]
  %v38 = vld [vmem:[%s1 + $0x40] sm:$0xff]
  %v39 = vld [vmem:[%s1 + $0x48] sm:$0xff]
  %v40 = vld [vmem:[%s1 + $0x50] sm:$0xff]
  %v41 = vld [vmem:[%s1 + $0x58] sm:$0xff]
  %v42 = vld [vmem:[%s1 + $0x60] sm:$0xff]
  %v43 = vld [vmem:[%s1 + $0x68] sm:$0xff]
  %v44 = vld [vmem:[%s1 + $0x70] sm:$0xff]
  %v45 = vld [vmem:[%s1 + $0x78] sm:$0xff]
  %v46 = vld [vmem:[%s1 + $0x80] sm:$0xff]
  %v47 = vld [vmem:[%s1 + $0x88] sm:$0xff]
  %v48 = vld [vmem:[%s1 + $0x90] sm:$0xff]
  %v49 = vld [vmem:[%s1 + $0x98] sm:$0xff]
  %v50 = vld [vmem:[%s1 + $0xa0] sm:$0xff]
  %v51 = vld [vmem:[%s1 + $0xa8] sm:$0xff]
  %v52 = vld [vmem:[%s1 + $0xb0] sm:$0xff]
  %v53 = vld [vmem:[%s1 + $0xb8] sm:$0xff]
  %v54 = vld [vmem:[%s1 + $0xc0] sm:$0xff]
  %v55 = vld [vmem:[%s1 + $0xc8] sm:$0xff]
  %v56 = vld [vmem:[%s1 + $0xd0] sm:$0xff]
  %v57 = vld [vmem:[%s1 + $0xd8] sm:$0xff]
  %v58 = vld [vmem:[%s1 + $0xe0] sm:$0xff]
  %v59 = vld [vmem:[%s1 + $0xe8] sm:$0xff]
  %v60 = vld [vmem:[%s1 + $0xf0] sm:$0xff]
  %v61 = vld [vmem:[%s1 + $0xf8] sm:$0xff]
  %v62 = vld [vmem:[%s3] sm:$0xff]
  %v63 = vld [vmem:[%s3 + $0x8] sm:$0xff]
  %v64 = vld [vmem:[%s3 + $0x10] sm:$0xff]
  %v65 = vld [vmem:[%s3 + $0x18] sm:$0xff]
  %v66 = vld [vmem:[%s3 + $0x20] sm:$0xff]
  %v67 = vld [vmem:[%s3 + $0x28] sm:$0xff]
  %v68 = vld [vmem:[%s3 + $0x30] sm:$0xff]
  %v69 = vld [vmem:[%s3 + $0x38] sm:$0xff]
  %v70 = vld [vmem:[%s3 + $0x40] sm:$0xff]
  %v71 = vld [vmem:[%s3 + $0x48] sm:$0xff]
  %v72 = vld [vmem:[%s3 + $0x50] sm:$0xff]
  %v73 = vld [vmem:[%s3 + $0x58] sm:$0xff]
  %v74 = vld [vmem:[%s3 + $0x60] sm:$0xff]
  %v75 = vld [vmem:[%s3 + $0x68] sm:$0xff]
  %v76 = vld [vmem:[%s3 + $0x70] sm:$0xff]
  %v77 = vld [vmem:[%s3 + $0x78] sm:$0xff]
  %v78 = vld [vmem:[%s3 + $0x80] sm:$0xff]
  %v79 = vld [vmem:[%s3 + $0x88] sm:$0xff]
  %v80 = vld [vmem:[%s3 + $0x90] sm:$0xff]
  %v81 = vld [vmem:[%s3 + $0x98] sm:$0xff]
  %v82 = vld [vmem:[%s3 + $0xa0] sm:$0xff]
  %v83 = vld [vmem:[%s3 + $0xa8] sm:$0xff]
  %v84 = vld [vmem:[%s3 + $0xb0] sm:$0xff]
  %v85 = vld [vmem:[%s3 + $0xb8] sm:$0xff]
  %v86 = vld [vmem:[%s3 + $0xc0] sm:$0xff]
  %v87 = vld [vmem:[%s3 + $0xc8] sm:$0xff]
  %v88 = vld [vmem:[%s3 + $0xd0] sm:$0xff]
  %v89 = vld [vmem:[%s3 + $0xd8] sm:$0xff]
  %v90 = vld [vmem:[%s3 + $0xe0] sm:$0xff]
  %v91 = vld [vmem:[%s3 + $0xe8] sm:$0xff]
  %v92 = vld [vmem:[%s3 + $0xf0] sm:$0xff]
  %v93 = vld [vmem:[%s3 + $0xf8] sm:$0xff]
  %v94 = vld [vmem:[%s2] sm:$0xf]
  %v95 = vld [vmem:[%s4] sm:$0x1]
  %v96 = vld [vmem:[%s5] sm:$0x1]
  %s97 = smul.u32 0, 32
  %v98 = vlaneseq
  %v99 = vshrl.u32 %v98, 7
  %v100 = vadd.s32 %v99, 8
  %v101 = vadd.s32 %v99, 16
  %v102 = vadd.s32 %v99, 24
  %v103 = vstv %s97
  %v104 = vadd.s32 %v103, %v99
  %v105 = vadd.s32 %v103, %v100
  %v106 = vadd.s32 %v103, %v101
  %v107 = vadd.s32 %v103, %v102
  %v108 = vcvt.s32.f32 %v104
  %v109 = vcvt.s32.f32 %v105
  %v110 = vcvt.s32.f32 %v106
  %v111 = vcvt.s32.f32 %v107
  %v112 = vmul.f32 %v108, 0.032258064
  %v113 = vmul.f32 %v109, 0.032258064
  %v114 = vmul.f32 %v110, 0.032258064
  %v115 = vmul.f32 %v111, 0.032258064
  %v117 = vlaneseq
  %v118 = vshrl.u32 %v117, 7
  %v119 = vsub.s32 0, %v118
  %v120 = vrot.slane %v96, %v119
  %v122 = vmul.f32 %v112, %v120
  %v123 = vmul.f32 %v113, %v120
  %v124 = vmul.f32 %v114, %v120
  %v125 = vmul.f32 %v115, %v120
  loop: start=0, step=1, limit=4
  $region34: #{dense_md_forward.1} parent=0 // loop_pre_header
    _
  $region35: #{dense_md_forward.1} parent=0 // loop_header
    %s127 = sphi 0, %s131
    %p128 = scmp.ge.s32.totalorder %s127, 4
    %v132 = vphi 0.0, %v3102
    %v133 = vphi 0.0, %v3103
    %v134 = vphi 0.0, %v3104
    %v135 = vphi 0.0, %v3105
    %v136 = vphi 0.0, %v3094
    %v137 = vphi 0.0, %v3095
    %v138 = vphi 0.0, %v3096
    %v139 = vphi 0.0, %v3097
  $region36: #{dense_md_forward.1} parent=0 // loop_header_branch
    %130 = sbr.rel (%p128) target = $region40
  $region37: #{dense_md_forward.1} parent=0 // loop_body
    %s140 = smul.u32 %s127, 8
    %s141 = smul.u32 %s140, 4
    %s142 = smul.addr %s141, 4
    %s143 = scalar_lea.vmem %s0, %s142
    %v144 = vld [vmem:[%s143] sm:$0xf]
    %v145 = vld [vmem:[%s143 + $0x4] sm:$0xf]
    %v146 = vld [vmem:[%s143 + $0x8] sm:$0xf]
    %v147 = vld [vmem:[%s143 + $0xc] sm:$0xf]
    %v148 = vld [vmem:[%s143 + $0x10] sm:$0xf]
    %v149 = vld [vmem:[%s143 + $0x14] sm:$0xf]
    %v150 = vld [vmem:[%s143 + $0x18] sm:$0xf]
    %v151 = vld [vmem:[%s143 + $0x1c] sm:$0xf]
    %v152 = vld [vmem:[%s143 + $0x20] sm:$0xf]
    %v153 = vld [vmem:[%s143 + $0x24] sm:$0xf]
    %v154 = vld [vmem:[%s143 + $0x28] sm:$0xf]
    %v155 = vld [vmem:[%s143 + $0x2c] sm:$0xf]
    %v156 = vld [vmem:[%s143 + $0x30] sm:$0xf]
    %v157 = vld [vmem:[%s143 + $0x34] sm:$0xf]
    %v158 = vld [vmem:[%s143 + $0x38] sm:$0xf]
    %v159 = vld [vmem:[%s143 + $0x3c] sm:$0xf]
    %v160 = vld [vmem:[%s143 + $0x40] sm:$0xf]
    %v161 = vld [vmem:[%s143 + $0x44] sm:$0xf]
    %v162 = vld [vmem:[%s143 + $0x48] sm:$0xf]
    %v163 = vld [vmem:[%s143 + $0x4c] sm:$0xf]
    %v164 = vld [vmem:[%s143 + $0x50] sm:$0xf]
    %v165 = vld [vmem:[%s143 + $0x54] sm:$0xf]
    %v166 = vld [vmem:[%s143 + $0x58] sm:$0xf]
    %v167 = vld [vmem:[%s143 + $0x5c] sm:$0xf]
    %v168 = vld [vmem:[%s143 + $0x60] sm:$0xf]
    %v169 = vld [vmem:[%s143 + $0x64] sm:$0xf]
    %v170 = vld [vmem:[%s143 + $0x68] sm:$0xf]
    %v171 = vld [vmem:[%s143 + $0x6c] sm:$0xf]
    %v172 = vld [vmem:[%s143 + $0x70] sm:$0xf]
    %v173 = vld [vmem:[%s143 + $0x74] sm:$0xf]
    %v174 = vld [vmem:[%s143 + $0x78] sm:$0xf]
    %v175 = vld [vmem:[%s143 + $0x7c] sm:$0xf]
    %v177 = vlaneseq
    %v178 = vshrl.u32 %v177, 7
    %v179 = vsub.s32 0, %v178
    %v180 = vrot.slane %v94, %v179
    %v181 = vlaneseq
    %v182 = vshrl.u32 %v181, 7
    %v183 = vsub.s32 1, %v182
    %v184 = vrot.slane %v94, %v183
    %v185 = vlaneseq
    %v186 = vshrl.u32 %v185, 7
    %v187 = vsub.s32 2, %v186
    %v188 = vrot.slane %v94, %v187
    %v189 = vlaneseq
    %v190 = vshrl.u32 %v189, 7
    %v191 = vsub.s32 3, %v190
    %v192 = vrot.slane %v94, %v191
    %v229 = vunpack.c.l.b16 %v144
    %v230 = vunpack.c.l.b16 %v145
    %v231 = vunpack.c.l.b16 %v146
    %v232 = vunpack.c.l.b16 %v147
    %v233 = vunpack.c.l.b16 %v148
    %v234 = vunpack.c.l.b16 %v149
    %v235 = vunpack.c.l.b16 %v150
    %v236 = vunpack.c.l.b16 %v151
    %v237 = vunpack.c.l.b16 %v152
    %v238 = vunpack.c.l.b16 %v153
    %v239 = vunpack.c.l.b16 %v154
    %v240 = vunpack.c.l.b16 %v155
    %v241 = vunpack.c.l.b16 %v156
    %v242 = vunpack.c.l.b16 %v157
    %v243 = vunpack.c.l.b16 %v158
    %v244 = vunpack.c.l.b16 %v159
    %v245 = vunpack.c.l.b16 %v160
    %v246 = vunpack.c.l.b16 %v161
    %v247 = vunpack.c.l.b16 %v162
    %v248 = vunpack.c.l.b16 %v163
    %v249 = vunpack.c.l.b16 %v164
    %v250 = vunpack.c.l.b16 %v165
    %v251 = vunpack.c.l.b16 %v166
    %v252 = vunpack.c.l.b16 %v167
    %v253 = vunpack.c.l.b16 %v168
    %v254 = vunpack.c.l.b16 %v169
    %v255 = vunpack.c.l.b16 %v170
    %v256 = vunpack.c.l.b16 %v171
    %v257 = vunpack.c.l.b16 %v172
    %v258 = vunpack.c.l.b16 %v173
    %v259 = vunpack.c.l.b16 %v174
    %v260 = vunpack.c.l.b16 %v175
    %v261 = vpack.c.b16 %v230, %v229
    %v262 = vpack.c.b16 %v232, %v231
    %v263 = vpack.c.b16 %v234, %v233
    %v264 = vpack.c.b16 %v236, %v235
    %v265 = vpack.c.b16 %v238, %v237
    %v266 = vpack.c.b16 %v240, %v239
    %v267 = vpack.c.b16 %v242, %v241
    %v268 = vpack.c.b16 %v244, %v243
    %v269 = vpack.c.b16 %v246, %v245
    %v270 = vpack.c.b16 %v248, %v247
    %v271 = vpack.c.b16 %v250, %v249
    %v272 = vpack.c.b16 %v252, %v251
    %v273 = vpack.c.b16 %v254, %v253
    %v274 = vpack.c.b16 %v256, %v255
    %v275 = vpack.c.b16 %v258, %v257
    %v276 = vpack.c.b16 %v260, %v259
    %v325 = vunpack.c.l.b16 %v30
    %v326 = vunpack.c.h.b16 %v30
    %v327 = vunpack.c.l.b16 %v31
    %v328 = vunpack.c.h.b16 %v31
    %v329 = vunpack.c.l.b16 %v32
    %v330 = vunpack.c.h.b16 %v32
    %v331 = vunpack.c.l.b16 %v33
    %v332 = vunpack.c.h.b16 %v33
    %v333 = vunpack.c.l.b16 %v34
    %v334 = vunpack.c.h.b16 %v34
    %v335 = vunpack.c.l.b16 %v35
    %v336 = vunpack.c.h.b16 %v35
    %v337 = vunpack.c.l.b16 %v36
    %v338 = vunpack.c.h.b16 %v36
    %v339 = vunpack.c.l.b16 %v37
    %v340 = vunpack.c.h.b16 %v37
    %v341 = vunpack.c.l.b16 %v38
    %v342 = vunpack.c.h.b16 %v38
    %v343 = vunpack.c.l.b16 %v39
    %v344 = vunpack.c.h.b16 %v39
    %v345 = vunpack.c.l.b16 %v40
    %v346 = vunpack.c.h.b16 %v40
    %v347 = vunpack.c.l.b16 %v41
    %v348 = vunpack.c.h.b16 %v41
    %v349 = vunpack.c.l.b16 %v42
    %v350 = vunpack.c.h.b16 %v42
    %v351 = vunpack.c.l.b16 %v43
    %v352 = vunpack.c.h.b16 %v43
    %v353 = vunpack.c.l.b16 %v44
    %v354 = vunpack.c.h.b16 %v44
    %v355 = vunpack.c.l.b16 %v45
    %v356 = vunpack.c.h.b16 %v45
    %v357 = vunpack.c.l.b16 %v46
    %v358 = vunpack.c.h.b16 %v46
    %v359 = vunpack.c.l.b16 %v47
    %v360 = vunpack.c.h.b16 %v47
    %v361 = vunpack.c.l.b16 %v48
    %v362 = vunpack.c.h.b16 %v48
    %v363 = vunpack.c.l.b16 %v49
    %v364 = vunpack.c.h.b16 %v49
    %v365 = vunpack.c.l.b16 %v50
    %v366 = vunpack.c.h.b16 %v50
    %v367 = vunpack.c.l.b16 %v51
    %v368 = vunpack.c.h.b16 %v51
    %v369 = vunpack.c.l.b16 %v52
    %v370 = vunpack.c.h.b16 %v52
    %v371 = vunpack.c.l.b16 %v53
    %v372 = vunpack.c.h.b16 %v53
    %v373 = vunpack.c.l.b16 %v54
    %v374 = vunpack.c.h.b16 %v54
    %v375 = vunpack.c.l.b16 %v55
    %v376 = vunpack.c.h.b16 %v55
    %v377 = vunpack.c.l.b16 %v56
    %v378 = vunpack.c.h.b16 %v56
    %v379 = vunpack.c.l.b16 %v57
    %v380 = vunpack.c.h.b16 %v57
    %v381 = vunpack.c.l.b16 %v58
    %v382 = vunpack.c.h.b16 %v58
    %v383 = vunpack.c.l.b16 %v59
    %v384 = vunpack.c.h.b16 %v59
    %v385 = vunpack.c.l.b16 %v60
    %v386 = vunpack.c.h.b16 %v60
    %v387 = vunpack.c.l.b16 %v61
    %v388 = vunpack.c.h.b16 %v61
    %v389 = vpack.c.b16 %v329, %v325
    %v390 = vpack.c.b16 %v330, %v326
    %v391 = vpack.c.b16 %v331, %v327
    %v392 = vpack.c.b16 %v332, %v328
    %v393 = vpack.c.b16 %v337, %v333
    %v394 = vpack.c.b16 %v338, %v334
    %v395 = vpack.c.b16 %v339, %v335
    %v396 = vpack.c.b16 %v340, %v336
    %v397 = vpack.c.b16 %v345, %v341
    %v398 = vpack.c.b16 %v346, %v342
    %v399 = vpack.c.b16 %v347, %v343
    %v400 = vpack.c.b16 %v348, %v344
    %v401 = vpack.c.b16 %v353, %v349
    %v402 = vpack.c.b16 %v354, %v350
    %v403 = vpack.c.b16 %v355, %v351
    %v404 = vpack.c.b16 %v356, %v352
    %v405 = vpack.c.b16 %v361, %v357
    %v406 = vpack.c.b16 %v362, %v358
    %v407 = vpack.c.b16 %v363, %v359
    %v408 = vpack.c.b16 %v364, %v360
    %v409 = vpack.c.b16 %v369, %v365
    %v410 = vpack.c.b16 %v370, %v366
    %v411 = vpack.c.b16 %v371, %v367
    %v412 = vpack.c.b16 %v372, %v368
    %v413 = vpack.c.b16 %v377, %v373
    %v414 = vpack.c.b16 %v378, %v374
    %v415 = vpack.c.b16 %v379, %v375
    %v416 = vpack.c.b16 %v380, %v376
    %v417 = vpack.c.b16 %v385, %v381
    %v418 = vpack.c.b16 %v386, %v382
    %v419 = vpack.c.b16 %v387, %v383
    %v420 = vpack.c.b16 %v388, %v384
    %453 = vmatprep.subr.bf16.mxu0 %v390
    %454 = vmatpush1.bf16.msra.mxu0 %v389
    %455 = vmatprep.subr.bf16.mxu0 %v394
    %456 = vmatpush1.bf16.msra.mxu0 %v393
    %457 = vmatprep.subr.bf16.mxu0 %v398
    %458 = vmatpush1.bf16.msra.mxu0 %v397
    %459 = vmatprep.subr.bf16.mxu0 %v402
    %460 = vmatpush1.bf16.msra.mxu0 %v401
    %461 = vmatprep.subr.bf16.mxu0 %v406
    %462 = vmatpush1.bf16.msra.mxu0 %v405
    %463 = vmatprep.subr.bf16.mxu0 %v410
    %464 = vmatpush1.bf16.msra.mxu0 %v409
    %465 = vmatprep.subr.bf16.mxu0 %v414
    %466 = vmatpush1.bf16.msra.mxu0 %v413
    %467 = vmatprep.subr.bf16.mxu0 %v418
    %468 = vmatpush1.bf16.msra.mxu0 %v417
    %469 = vmatprep.subr.bf16.mxu0 0
    %470 = vmatpush1.bf16.msra.mxu0 0
    %471 = vmatprep.subr.bf16.mxu0 0
    %472 = vmatpush1.bf16.msra.mxu0 0
    %473 = vmatprep.subr.bf16.mxu0 0
    %474 = vmatpush1.bf16.msra.mxu0 0
    %475 = vmatprep.subr.bf16.mxu0 0
    %476 = vmatpush1.bf16.msra.mxu0 0
    %477 = vmatprep.subr.bf16.mxu0 0
    %478 = vmatpush1.bf16.msra.mxu0 0
    %479 = vmatprep.subr.bf16.mxu0 0
    %480 = vmatpush1.bf16.msra.mxu0 0
    %481 = vmatprep.subr.bf16.mxu0 0
    %482 = vmatpush1.bf16.msra.mxu0 0
    %483 = vmatprep.subr.bf16.mxu0 0
    %484 = vmatpush1.bf16.msra.mxu0 0
    %485 = vmatprep.mubr.bf16.mxu0 0
    %486 = vmatmul.mubr.bf16.gmra.mrb[0].mxu0 %v261
    %v487 = vpop.f32.mrb[0].mxu0
    %v488 = vadd.f32 %v180, %v487
    %v489 = vpop.f32.mrb[0].mxu0
    %v490 = vadd.f32 %v184, %v489
    %v491 = vpop.f32.mrb[0].mxu0
    %v492 = vadd.f32 %v180, %v491
    %v493 = vpop.f32.mrb[0].mxu0
    %v494 = vadd.f32 %v184, %v493
    %495 = vmatprep.mubr.bf16.mxu0 0
    %496 = vmatmul.mubr.bf16.gmra.mrb[0].mxu0 %v262
    %v497 = vpop.f32.mrb[0].mxu0
    %v498 = vadd.f32 %v180, %v497
    %v499 = vpop.f32.mrb[0].mxu0
    %v500 = vadd.f32 %v184, %v499
    %v501 = vpop.f32.mrb[0].mxu0
    %v502 = vadd.f32 %v180, %v501
    %v503 = vpop.f32.mrb[0].mxu0
    %v504 = vadd.f32 %v184, %v503
    %505 = vmatprep.mubr.bf16.mxu0 0
    %506 = vmatmul.mubr.bf16.gmra.mrb[0].mxu0 %v263
    %v507 = vpop.f32.mrb[0].mxu0
    %v508 = vadd.f32 %v180, %v507
    %v509 = vpop.f32.mrb[0].mxu0
    %v510 = vadd.f32 %v184, %v509
    %v511 = vpop.f32.mrb[0].mxu0
    %v512 = vadd.f32 %v180, %v511
    %v513 = vpop.f32.mrb[0].mxu0
    %v514 = vadd.f32 %v184, %v513
    %515 = vmatprep.mubr.bf16.mxu0 0
    %516 = vmatmul.mubr.bf16.gmra.mrb[0].mxu0 %v264
    %v517 = vpop.f32.mrb[0].mxu0
    %v518 = vadd.f32 %v180, %v517
    %v519 = vpop.f32.mrb[0].mxu0
    %v520 = vadd.f32 %v184, %v519
    %v521 = vpop.f32.mrb[0].mxu0
    %v522 = vadd.f32 %v180, %v521
    %v523 = vpop.f32.mrb[0].mxu0
    %v524 = vadd.f32 %v184, %v523
    %525 = vmatprep.mubr.bf16.mxu0 0
    %526 = vmatmul.mubr.bf16.gmra.mrb[0].mxu0 %v265
    %v527 = vpop.f32.mrb[0].mxu0
    %v528 = vadd.f32 %v180, %v527
    %v529 = vpop.f32.mrb[0].mxu0
    %v530 = vadd.f32 %v184, %v529
    %v531 = vpop.f32.mrb[0].mxu0
    %v532 = vadd.f32 %v180, %v531
    %v533 = vpop.f32.mrb[0].mxu0
    %v534 = vadd.f32 %v184, %v533
    %535 = vmatprep.mubr.bf16.mxu0 0
    %536 = vmatmul.mubr.bf16.gmra.mrb[0].mxu0 %v266
    %v537 = vpop.f32.mrb[0].mxu0
    %v538 = vadd.f32 %v180, %v537
    %v539 = vpop.f32.mrb[0].mxu0
    %v540 = vadd.f32 %v184, %v539
    %v541 = vpop.f32.mrb[0].mxu0
    %v542 = vadd.f32 %v180, %v541
    %v543 = vpop.f32.mrb[0].mxu0
    %v544 = vadd.f32 %v184, %v543
    %545 = vmatprep.mubr.bf16.mxu0 0
    %546 = vmatmul.mubr.bf16.gmra.mrb[0].mxu0 %v267
    %v547 = vpop.f32.mrb[0].mxu0
    %v548 = vadd.f32 %v180, %v547
    %v549 = vpop.f32.mrb[0].mxu0
    %v550 = vadd.f32 %v184, %v549
    %v551 = vpop.f32.mrb[0].mxu0
    %v552 = vadd.f32 %v180, %v551
    %v553 = vpop.f32.mrb[0].mxu0
    %v554 = vadd.f32 %v184, %v553
    %555 = vmatprep.mubr.bf16.mxu0 0
    %556 = vmatmul.mubr.bf16.gmra.mrb[0].mxu0 %v268
    %v557 = vpop.f32.mrb[0].mxu0
    %v558 = vadd.f32 %v180, %v557
    %v559 = vpop.f32.mrb[0].mxu0
    %v560 = vadd.f32 %v184, %v559
    %v561 = vpop.f32.mrb[0].mxu0
    %v562 = vadd.f32 %v180, %v561
    %v563 = vpop.f32.mrb[0].mxu0
    %v564 = vadd.f32 %v184, %v563
    %565 = vmatprep.mubr.bf16.mxu0 0
    %566 = vmatmul.mubr.bf16.gmra.mrb[0].mxu0 %v269
    %v567 = vpop.f32.mrb[0].mxu0
    %v568 = vadd.f32 %v180, %v567
    %v569 = vpop.f32.mrb[0].mxu0
    %v570 = vadd.f32 %v184, %v569
    %v571 = vpop.f32.mrb[0].mxu0
    %v572 = vadd.f32 %v180, %v571
    %v573 = vpop.f32.mrb[0].mxu0
    %v574 = vadd.f32 %v184, %v573
    %575 = vmatprep.mubr.bf16.mxu0 0
    %576 = vmatmul.mubr.bf16.gmra.mrb[0].mxu0 %v270
    %v577 = vpop.f32.mrb[0].mxu0
    %v578 = vadd.f32 %v180, %v577
    %v579 = vpop.f32.mrb[0].mxu0
    %v580 = vadd.f32 %v184, %v579
    %v581 = vpop.f32.mrb[0].mxu0
    %v582 = vadd.f32 %v180, %v581
    %v583 = vpop.f32.mrb[0].mxu0
    %v584 = vadd.f32 %v184, %v583
    %585 = vmatprep.mubr.bf16.mxu0 0
    %586 = vmatmul.mubr.bf16.gmra.mrb[0].mxu0 %v271
    %v587 = vpop.f32.mrb[0].mxu0
    %v588 = vadd.f32 %v180, %v587
    %v589 = vpop.f32.mrb[0].mxu0
    %v590 = vadd.f32 %v184, %v589
    %v591 = vpop.f32.mrb[0].mxu0
    %v592 = vadd.f32 %v180, %v591
    %v593 = vpop.f32.mrb[0].mxu0
    %v594 = vadd.f32 %v184, %v593
    %595 = vmatprep.mubr.bf16.mxu0 0
    %596 = vmatmul.mubr.bf16.gmra.mrb[0].mxu0 %v272
    %v597 = vpop.f32.mrb[0].mxu0
    %v598 = vadd.f32 %v180, %v597
    %v599 = vpop.f32.mrb[0].mxu0
    %v600 = vadd.f32 %v184, %v599
    %v601 = vpop.f32.mrb[0].mxu0
    %v602 = vadd.f32 %v180, %v601
    %v603 = vpop.f32.mrb[0].mxu0
    %v604 = vadd.f32 %v184, %v603
    %605 = vmatprep.mubr.bf16.mxu0 0
    %606 = vmatmul.mubr.bf16.gmra.mrb[0].mxu0 %v273
    %v607 = vpop.f32.mrb[0].mxu0
    %v608 = vadd.f32 %v180, %v607
    %v609 = vpop.f32.mrb[0].mxu0
    %v610 = vadd.f32 %v184, %v609
    %v611 = vpop.f32.mrb[0].mxu0
    %v612 = vadd.f32 %v180, %v611
    %v613 = vpop.f32.mrb[0].mxu0
    %v614 = vadd.f32 %v184, %v613
    %615 = vmatprep.mubr.bf16.mxu0 0
    %616 = vmatmul.mubr.bf16.gmra.mrb[0].mxu0 %v274
    %v617 = vpop.f32.mrb[0].mxu0
    %v618 = vadd.f32 %v180, %v617
    %v619 = vpop.f32.mrb[0].mxu0
    %v620 = vadd.f32 %v184, %v619
    %v621 = vpop.f32.mrb[0].mxu0
    %v622 = vadd.f32 %v180, %v621
    %v623 = vpop.f32.mrb[0].mxu0
    %v624 = vadd.f32 %v184, %v623
    %625 = vmatprep.mubr.bf16.mxu0 0
    %626 = vmatmul.mubr.bf16.gmra.mrb[0].mxu0 %v275
    %v627 = vpop.f32.mrb[0].mxu0
    %v628 = vadd.f32 %v180, %v627
    %v629 = vpop.f32.mrb[0].mxu0
    %v630 = vadd.f32 %v184, %v629
    %v631 = vpop.f32.mrb[0].mxu0
    %v632 = vadd.f32 %v180, %v631
    %v633 = vpop.f32.mrb[0].mxu0
    %v634 = vadd.f32 %v184, %v633
    %635 = vmatprep.mubr.bf16.mxu0 0
    %636 = vmatmul.mubr.bf16.gmra.mrb[0].mxu0 %v276
    %v637 = vpop.f32.mrb[0].mxu0
    %v638 = vadd.f32 %v180, %v637
    %v639 = vpop.f32.mrb[0].mxu0
    %v640 = vadd.f32 %v184, %v639
    %v641 = vpop.f32.mrb[0].mxu0
    %v642 = vadd.f32 %v180, %v641
    %v643 = vpop.f32.mrb[0].mxu0
    %v644 = vadd.f32 %v184, %v643
    %645 = vdwg.mxu0
    %646 = vmatprep.subr.bf16.mxu0 %v392
    %647 = vmatpush1.bf16.msra.mxu0 %v391
    %648 = vmatprep.subr.bf16.mxu0 %v396
    %649 = vmatpush1.bf16.msra.mxu0 %v395
    %650 = vmatprep.subr.bf16.mxu0 %v400
    %651 = vmatpush1.bf16.msra.mxu0 %v399
    %652 = vmatprep.subr.bf16.mxu0 %v404
    %653 = vmatpush1.bf16.msra.mxu0 %v403
    %654 = vmatprep.subr.bf16.mxu0 %v408
    %655 = vmatpush1.bf16.msra.mxu0 %v407
    %656 = vmatprep.subr.bf16.mxu0 %v412
    %657 = vmatpush1.bf16.msra.mxu0 %v411
    %658 = vmatprep.subr.bf16.mxu0 %v416
    %659 = vmatpush1.bf16.msra.mxu0 %v415
    %660 = vmatprep.subr.bf16.mxu0 %v420
    %661 = vmatpush1.bf16.msra.mxu0 %v419
    %662 = vmatprep.subr.bf16.mxu0 0
    %663 = vmatpush1.bf16.msra.mxu0 0
    %664 = vmatprep.subr.bf16.mxu0 0
    %665 = vmatpush1.bf16.msra.mxu0 0
    %666 = vmatprep.subr.bf16.mxu0 0
    %667 = vmatpush1.bf16.msra.mxu0 0
    %668 = vmatprep.subr.bf16.mxu0 0
    %669 = vmatpush1.bf16.msra.mxu0 0
    %670 = vmatprep.subr.bf16.mxu0 0
    %671 = vmatpush1.bf16.msra.mxu0 0
    %672 = vmatprep.subr.bf16.mxu0 0
    %673 = vmatpush1.bf16.msra.mxu0 0
    %674 = vmatprep.subr.bf16.mxu0 0
    %675 = vmatpush1.bf16.msra.mxu0 0
    %676 = vmatprep.subr.bf16.mxu0 0
    %677 = vmatpush1.bf16.msra.mxu0 0
    %678 = vmatprep.mubr.bf16.mxu0 0
    %679 = vmatmul.mubr.bf16.gmra.mrb[0].mxu0 %v261
    %v680 = vpop.f32.mrb[0].mxu0
    %v681 = vadd.f32 %v188, %v680
    %v682 = vpop.f32.mrb[0].mxu0
    %v683 = vadd.f32 %v192, %v682
    %v684 = vpop.f32.mrb[0].mxu0
    %v685 = vadd.f32 %v188, %v684
    %v686 = vpop.f32.mrb[0].mxu0
    %v687 = vadd.f32 %v192, %v686
    %688 = vmatprep.mubr.bf16.mxu0 0
    %689 = vmatmul.mubr.bf16.gmra.mrb[0].mxu0 %v262
    %v690 = vpop.f32.mrb[0].mxu0
    %v691 = vadd.f32 %v188, %v690
    %v692 = vpop.f32.mrb[0].mxu0
    %v693 = vadd.f32 %v192, %v692
    %v694 = vpop.f32.mrb[0].mxu0
    %v695 = vadd.f32 %v188, %v694
    %v696 = vpop.f32.mrb[0].mxu0
    %v697 = vadd.f32 %v192, %v696
    %698 = vmatprep.mubr.bf16.mxu0 0
    %699 = vmatmul.mubr.bf16.gmra.mrb[0].mxu0 %v263
    %v700 = vpop.f32.mrb[0].mxu0
    %v701 = vadd.f32 %v188, %v700
    %v702 = vpop.f32.mrb[0].mxu0
    %v703 = vadd.f32 %v192, %v702
    %v704 = vpop.f32.mrb[0].mxu0
    %v705 = vadd.f32 %v188, %v704
    %v706 = vpop.f32.mrb[0].mxu0
    %v707 = vadd.f32 %v192, %v706
    %708 = vmatprep.mubr.bf16.mxu0 0
    %709 = vmatmul.mubr.bf16.gmra.mrb[0].mxu0 %v264
    %v710 = vpop.f32.mrb[0].mxu0
    %v711 = vadd.f32 %v188, %v710
    %v712 = vpop.f32.mrb[0].mxu0
    %v713 = vadd.f32 %v192, %v712
    %v714 = vpop.f32.mrb[0].mxu0
    %v715 = vadd.f32 %v188, %v714
    %v716 = vpop.f32.mrb[0].mxu0
    %v717 = vadd.f32 %v192, %v716
    %718 = vmatprep.mubr.bf16.mxu0 0
    %719 = vmatmul.mubr.bf16.gmra.mrb[0].mxu0 %v265
    %v720 = vpop.f32.mrb[0].mxu0
    %v721 = vadd.f32 %v188, %v720
    %v722 = vpop.f32.mrb[0].mxu0
    %v723 = vadd.f32 %v192, %v722
    %v724 = vpop.f32.mrb[0].mxu0
    %v725 = vadd.f32 %v188, %v724
    %v726 = vpop.f32.mrb[0].mxu0
    %v727 = vadd.f32 %v192, %v726
    %728 = vmatprep.mubr.bf16.mxu0 0
    %729 = vmatmul.mubr.bf16.gmra.mrb[0].mxu0 %v266
    %v730 = vpop.f32.mrb[0].mxu0
    %v731 = vadd.f32 %v188, %v730
    %v732 = vpop.f32.mrb[0].mxu0
    %v733 = vadd.f32 %v192, %v732
    %v734 = vpop.f32.mrb[0].mxu0
    %v735 = vadd.f32 %v188, %v734
    %v736 = vpop.f32.mrb[0].mxu0
    %v737 = vadd.f32 %v192, %v736
    %738 = vmatprep.mubr.bf16.mxu0 0
    %739 = vmatmul.mubr.bf16.gmra.mrb[0].mxu0 %v267
    %v740 = vpop.f32.mrb[0].mxu0
    %v741 = vadd.f32 %v188, %v740
    %v742 = vpop.f32.mrb[0].mxu0
    %v743 = vadd.f32 %v192, %v742
    %v744 = vpop.f32.mrb[0].mxu0
    %v745 = vadd.f32 %v188, %v744
    %v746 = vpop.f32.mrb[0].mxu0
    %v747 = vadd.f32 %v192, %v746
    %748 = vmatprep.mubr.bf16.mxu0 0
    %749 = vmatmul.mubr.bf16.gmra.mrb[0].mxu0 %v268
    %v750 = vpop.f32.mrb[0].mxu0
    %v751 = vadd.f32 %v188, %v750
    %v752 = vpop.f32.mrb[0].mxu0
    %v753 = vadd.f32 %v192, %v752
    %v754 = vpop.f32.mrb[0].mxu0
    %v755 = vadd.f32 %v188, %v754
    %v756 = vpop.f32.mrb[0].mxu0
    %v757 = vadd.f32 %v192, %v756
    %758 = vmatprep.mubr.bf16.mxu0 0
    %759 = vmatmul.mubr.bf16.gmra.mrb[0].mxu0 %v269
    %v760 = vpop.f32.mrb[0].mxu0
    %v761 = vadd.f32 %v188, %v760
    %v762 = vpop.f32.mrb[0].mxu0
    %v763 = vadd.f32 %v192, %v762
    %v764 = vpop.f32.mrb[0].mxu0
    %v765 = vadd.f32 %v188, %v764
    %v766 = vpop.f32.mrb[0].mxu0
    %v767 = vadd.f32 %v192, %v766
    %768 = vmatprep.mubr.bf16.mxu0 0
    %769 = vmatmul.mubr.bf16.gmra.mrb[0].mxu0 %v270
    %v770 = vpop.f32.mrb[0].mxu0
    %v771 = vadd.f32 %v188, %v770
    %v772 = vpop.f32.mrb[0].mxu0
    %v773 = vadd.f32 %v192, %v772
    %v774 = vpop.f32.mrb[0].mxu0
    %v775 = vadd.f32 %v188, %v774
    %v776 = vpop.f32.mrb[0].mxu0
    %v777 = vadd.f32 %v192, %v776
    %778 = vmatprep.mubr.bf16.mxu0 0
    %779 = vmatmul.mubr.bf16.gmra.mrb[0].mxu0 %v271
    %v780 = vpop.f32.mrb[0].mxu0
    %v781 = vadd.f32 %v188, %v780
    %v782 = vpop.f32.mrb[0].mxu0
    %v783 = vadd.f32 %v192, %v782
    %v784 = vpop.f32.mrb[0].mxu0
    %v785 = vadd.f32 %v188, %v784
    %v786 = vpop.f32.mrb[0].mxu0
    %v787 = vadd.f32 %v192, %v786
    %788 = vmatprep.mubr.bf16.mxu0 0
    %789 = vmatmul.mubr.bf16.gmra.mrb[0].mxu0 %v272
    %v790 = vpop.f32.mrb[0].mxu0
    %v791 = vadd.f32 %v188, %v790
    %v792 = vpop.f32.mrb[0].mxu0
    %v793 = vadd.f32 %v192, %v792
    %v794 = vpop.f32.mrb[0].mxu0
    %v795 = vadd.f32 %v188, %v794
    %v796 = vpop.f32.mrb[0].mxu0
    %v797 = vadd.f32 %v192, %v796
    %798 = vmatprep.mubr.bf16.mxu0 0
    %799 = vmatmul.mubr.bf16.gmra.mrb[0].mxu0 %v273
    %v800 = vpop.f32.mrb[0].mxu0
    %v801 = vadd.f32 %v188, %v800
    %v802 = vpop.f32.mrb[0].mxu0
    %v803 = vadd.f32 %v192, %v802
    %v804 = vpop.f32.mrb[0].mxu0
    %v805 = vadd.f32 %v188, %v804
    %v806 = vpop.f32.mrb[0].mxu0
    %v807 = vadd.f32 %v192, %v806
    %808 = vmatprep.mubr.bf16.mxu0 0
    %809 = vmatmul.mubr.bf16.gmra.mrb[0].mxu0 %v274
    %v810 = vpop.f32.mrb[0].mxu0
    %v811 = vadd.f32 %v188, %v810
    %v812 = vpop.f32.mrb[0].mxu0
    %v813 = vadd.f32 %v192, %v812
    %v814 = vpop.f32.mrb[0].mxu0
    %v815 = vadd.f32 %v188, %v814
    %v816 = vpop.f32.mrb[0].mxu0
    %v817 = vadd.f32 %v192, %v816
    %818 = vmatprep.mubr.bf16.mxu0 0
    %819 = vmatmul.mubr.bf16.gmra.mrb[0].mxu0 %v275
    %v820 = vpop.f32.mrb[0].mxu0
    %v821 = vadd.f32 %v188, %v820
    %v822 = vpop.f32.mrb[0].mxu0
    %v823 = vadd.f32 %v192, %v822
    %v824 = vpop.f32.mrb[0].mxu0
    %v825 = vadd.f32 %v188, %v824
    %v826 = vpop.f32.mrb[0].mxu0
    %v827 = vadd.f32 %v192, %v826
    %828 = vmatprep.mubr.bf16.mxu0 0
    %829 = vmatmul.mubr.bf16.gmra.mrb[0].mxu0 %v276
    %v830 = vpop.f32.mrb[0].mxu0
    %v831 = vadd.f32 %v188, %v830
    %v832 = vpop.f32.mrb[0].mxu0
    %v833 = vadd.f32 %v192, %v832
    %v834 = vpop.f32.mrb[0].mxu0
    %v835 = vadd.f32 %v188, %v834
    %v836 = vpop.f32.mrb[0].mxu0
    %v837 = vadd.f32 %v192, %v836
    %838 = vdwg.mxu0
    %v839 = vpack.c.bf16 %v133, %v132
    %v840 = vpack.c.bf16 %v135, %v134
    %v873 = vunpack.c.l.b16 %v62
    %v874 = vunpack.c.h.b16 %v62
    %v875 = vunpack.c.l.b16 %v63
    %v876 = vunpack.c.h.b16 %v63
    %v877 = vunpack.c.l.b16 %v64
    %v878 = vunpack.c.h.b16 %v64
    %v879 = vunpack.c.l.b16 %v65
    %v880 = vunpack.c.h.b16 %v65
    %v881 = vunpack.c.l.b16 %v66
    %v882 = vunpack.c.h.b16 %v66
    %v883 = vunpack.c.l.b16 %v67
    %v884 = vunpack.c.h.b16 %v67
    %v885 = vunpack.c.l.b16 %v68
    %v886 = vunpack.c.h.b16 %v68
    %v887 = vunpack.c.l.b16 %v69
    %v888 = vunpack.c.h.b16 %v69
    %v889 = vunpack.c.l.b16 %v70
    %v890 = vunpack.c.h.b16 %v70
    %v891 = vunpack.c.l.b16 %v71
    %v892 = vunpack.c.h.b16 %v71
    %v893 = vunpack.c.l.b16 %v72
    %v894 = vunpack.c.h.b16 %v72
    %v895 = vunpack.c.l.b16 %v73
    %v896 = vunpack.c.h.b16 %v73
    %v897 = vunpack.c.l.b16 %v74
    %v898 = vunpack.c.h.b16 %v74
    %v899 = vunpack.c.l.b16 %v75
    %v900 = vunpack.c.h.b16 %v75
    %v901 = vunpack.c.l.b16 %v76
    %v902 = vunpack.c.h.b16 %v76
    %v903 = vunpack.c.l.b16 %v77
    %v904 = vunpack.c.h.b16 %v77
    %v905 = vunpack.c.l.b16 %v78
    %v906 = vunpack.c.h.b16 %v78
    %v907 = vunpack.c.l.b16 %v79
    %v908 = vunpack.c.h.b16 %v79
    %v909 = vunpack.c.l.b16 %v80
    %v910 = vunpack.c.h.b16 %v80
    %v911 = vunpack.c.l.b16 %v81
    %v912 = vunpack.c.h.b16 %v81
    %v913 = vunpack.c.l.b16 %v82
    %v914 = vunpack.c.h.b16 %v82
    %v915 = vunpack.c.l.b16 %v83
    %v916 = vunpack.c.h.b16 %v83
    %v917 = vunpack.c.l.b16 %v84
    %v918 = vunpack.c.h.b16 %v84
    %v919 = vunpack.c.l.b16 %v85
    %v920 = vunpack.c.h.b16 %v85
    %v921 = vunpack.c.l.b16 %v86
    %v922 = vunpack.c.h.b16 %v86
    %v923 = vunpack.c.l.b16 %v87
    %v924 = vunpack.c.h.b16 %v87
    %v925 = vunpack.c.l.b16 %v88
    %v926 = vunpack.c.h.b16 %v88
    %v927 = vunpack.c.l.b16 %v89
    %v928 = vunpack.c.h.b16 %v89
    %v929 = vunpack.c.l.b16 %v90
    %v930 = vunpack.c.h.b16 %v90
    %v931 = vunpack.c.l.b16 %v91
    %v932 = vunpack.c.h.b16 %v91
    %v933 = vunpack.c.l.b16 %v92
    %v934 = vunpack.c.h.b16 %v92
    %v935 = vunpack.c.l.b16 %v93
    %v936 = vunpack.c.h.b16 %v93
    %v937 = vpack.c.b16 %v877, %v873
    %v938 = vpack.c.b16 %v878, %v874
    %v939 = vpack.c.b16 %v879, %v875
    %v940 = vpack.c.b16 %v880, %v876
    %v941 = vpack.c.b16 %v885, %v881
    %v942 = vpack.c.b16 %v886, %v882
    %v943 = vpack.c.b16 %v887, %v883
    %v944 = vpack.c.b16 %v888, %v884
    %v945 = vpack.c.b16 %v893, %v889
    %v946 = vpack.c.b16 %v894, %v890
    %v947 = vpack.c.b16 %v895, %v891
    %v948 = vpack.c.b16 %v896, %v892
    %v949 = vpack.c.b16 %v901, %v897
    %v950 = vpack.c.b16 %v902, %v898
    %v951 = vpack.c.b16 %v903, %v899
    %v952 = vpack.c.b16 %v904, %v900
    %v953 = vpack.c.b16 %v909, %v905
    %v954 = vpack.c.b16 %v910, %v906
    %v955 = vpack.c.b16 %v911, %v907
    %v956 = vpack.c.b16 %v912, %v908
    %v957 = vpack.c.b16 %v917, %v913
    %v958 = vpack.c.b16 %v918, %v914
    %v959 = vpack.c.b16 %v919, %v915
    %v960 = vpack.c.b16 %v920, %v916
    %v961 = vpack.c.b16 %v925, %v921
    %v962 = vpack.c.b16 %v926, %v922
    %v963 = vpack.c.b16 %v927, %v923
    %v964 = vpack.c.b16 %v928, %v924
    %v965 = vpack.c.b16 %v933, %v929
    %v966 = vpack.c.b16 %v934, %v930
    %v967 = vpack.c.b16 %v935, %v931
    %v968 = vpack.c.b16 %v936, %v932
    %1001 = vmatprep.subr.bf16.mxu0 %v938
    %1002 = vmatpush1.bf16.msra.mxu0 %v937
    %1003 = vmatprep.subr.bf16.mxu0 %v942
    %1004 = vmatpush1.bf16.msra.mxu0 %v941
    %1005 = vmatprep.subr.bf16.mxu0 %v946
    %1006 = vmatpush1.bf16.msra.mxu0 %v945
    %1007 = vmatprep.subr.bf16.mxu0 %v950
    %1008 = vmatpush1.bf16.msra.mxu0 %v949
    %1009 = vmatprep.subr.bf16.mxu0 %v954
    %1010 = vmatpush1.bf16.msra.mxu0 %v953
    %1011 = vmatprep.subr.bf16.mxu0 %v958
    %1012 = vmatpush1.bf16.msra.mxu0 %v957
    %1013 = vmatprep.subr.bf16.mxu0 %v962
    %1014 = vmatpush1.bf16.msra.mxu0 %v961
    %1015 = vmatprep.subr.bf16.mxu0 %v966
    %1016 = vmatpush1.bf16.msra.mxu0 %v965
    %1017 = vmatprep.subr.bf16.mxu0 0
    %1018 = vmatpush1.bf16.msra.mxu0 0
    %1019 = vmatprep.subr.bf16.mxu0 0
    %1020 = vmatpush1.bf16.msra.mxu0 0
    %1021 = vmatprep.subr.bf16.mxu0 0
    %1022 = vmatpush1.bf16.msra.mxu0 0
    %1023 = vmatprep.subr.bf16.mxu0 0
    %1024 = vmatpush1.bf16.msra.mxu0 0
    %1025 = vmatprep.subr.bf16.mxu0 0
    %1026 = vmatpush1.bf16.msra.mxu0 0
    %1027 = vmatprep.subr.bf16.mxu0 0
    %1028 = vmatpush1.bf16.msra.mxu0 0
    %1029 = vmatprep.subr.bf16.mxu0 0
    %1030 = vmatpush1.bf16.msra.mxu0 0
    %1031 = vmatprep.subr.bf16.mxu0 0
    %1032 = vmatpush1.bf16.msra.mxu0 0
    %1033 = vmatprep.mubr.bf16.mxu0 0
    %1034 = vmatmul.mubr.bf16.gmra.mrb[0].mxu0 %v839
    %v1035 = vpop.f32.mrb[0].mxu0
    %v1036 = vadd.f32 0.0, %v1035
    %v1037 = vpop.f32.mrb[0].mxu0
    %v1038 = vadd.f32 0.0, %v1037
    %v1039 = vpop.f32.mrb[0].mxu0
    %v1040 = vadd.f32 0.0, %v1039
    %v1041 = vpop.f32.mrb[0].mxu0
    %v1042 = vadd.f32 0.0, %v1041
    %1043 = vmatprep.mubr.bf16.mxu0 0
    %1044 = vmatmul.mubr.bf16.gmra.mrb[0].mxu0 %v840
    %v1045 = vpop.f32.mrb[0].mxu0
    %v1046 = vadd.f32 0.0, %v1045
    %v1047 = vpop.f32.mrb[0].mxu0
    %v1048 = vadd.f32 0.0, %v1047
    %v1049 = vpop.f32.mrb[0].mxu0
    %v1050 = vadd.f32 0.0, %v1049
    %v1051 = vpop.f32.mrb[0].mxu0
    %v1052 = vadd.f32 0.0, %v1051
    %1053 = vdwg.mxu0
    %1054 = vmatprep.subr.bf16.mxu0 %v940
    %1055 = vmatpush1.bf16.msra.mxu0 %v939
    %1056 = vmatprep.subr.bf16.mxu0 %v944
    %1057 = vmatpush1.bf16.msra.mxu0 %v943
    %1058 = vmatprep.subr.bf16.mxu0 %v948
    %1059 = vmatpush1.bf16.msra.mxu0 %v947
    %1060 = vmatprep.subr.bf16.mxu0 %v952
    %1061 = vmatpush1.bf16.msra.mxu0 %v951
    %1062 = vmatprep.subr.bf16.mxu0 %v956
    %1063 = vmatpush1.bf16.msra.mxu0 %v955
    %1064 = vmatprep.subr.bf16.mxu0 %v960
    %1065 = vmatpush1.bf16.msra.mxu0 %v959
    %1066 = vmatprep.subr.bf16.mxu0 %v964
    %1067 = vmatpush1.bf16.msra.mxu0 %v963
    %1068 = vmatprep.subr.bf16.mxu0 %v968
    %1069 = vmatpush1.bf16.msra.mxu0 %v967
    %1070 = vmatprep.subr.bf16.mxu0 0
    %1071 = vmatpush1.bf16.msra.mxu0 0
    %1072 = vmatprep.subr.bf16.mxu0 0
    %1073 = vmatpush1.bf16.msra.mxu0 0
    %1074 = vmatprep.subr.bf16.mxu0 0
    %1075 = vmatpush1.bf16.msra.mxu0 0
    %1076 = vmatprep.subr.bf16.mxu0 0
    %1077 = vmatpush1.bf16.msra.mxu0 0
    %1078 = vmatprep.subr.bf16.mxu0 0
    %1079 = vmatpush1.bf16.msra.mxu0 0
    %1080 = vmatprep.subr.bf16.mxu0 0
    %1081 = vmatpush1.bf16.msra.mxu0 0
    %1082 = vmatprep.subr.bf16.mxu0 0
    %1083 = vmatpush1.bf16.msra.mxu0 0
    %1084 = vmatprep.subr.bf16.mxu0 0
    %1085 = vmatpush1.bf16.msra.mxu0 0
    %1086 = vmatprep.mubr.bf16.mxu0 0
    %1087 = vmatmul.mubr.bf16.gmra.mrb[0].mxu0 %v839
    %v1088 = vpop.f32.mrb[0].mxu0
    %v1089 = vadd.f32 0.0, %v1088
    %v1090 = vpop.f32.mrb[0].mxu0
    %v1091 = vadd.f32 0.0, %v1090
    %v1092 = vpop.f32.mrb[0].mxu0
    %v1093 = vadd.f32 0.0, %v1092
    %v1094 = vpop.f32.mrb[0].mxu0
    %v1095 = vadd.f32 0.0, %v1094
    %1096 = vmatprep.mubr.bf16.mxu0 0
    %1097 = vmatmul.mubr.bf16.gmra.mrb[0].mxu0 %v840
    %v1098 = vpop.f32.mrb[0].mxu0
    %v1099 = vadd.f32 0.0, %v1098
    %v1100 = vpop.f32.mrb[0].mxu0
    %v1101 = vadd.f32 0.0, %v1100
    %v1102 = vpop.f32.mrb[0].mxu0
    %v1103 = vadd.f32 0.0, %v1102
    %v1104 = vpop.f32.mrb[0].mxu0
    %v1105 = vadd.f32 0.0, %v1104
    %1106 = vdwg.mxu0
    %v1107 = vadd.f32 %v488, %v1036
    %v1108 = vadd.f32 %v490, %v1038
    %v1109 = vadd.f32 %v681, %v1089
    %v1110 = vadd.f32 %v683, %v1091
    %v1111 = vadd.f32 %v492, %v1040
    %v1112 = vadd.f32 %v494, %v1042
    %v1113 = vadd.f32 %v685, %v1093
    %v1114 = vadd.f32 %v687, %v1095
    %v1115 = vadd.f32 %v498, %v1046
    %v1116 = vadd.f32 %v500, %v1048
    %v1117 = vadd.f32 %v691, %v1099
    %v1118 = vadd.f32 %v693, %v1101
    %v1119 = vadd.f32 %v502, %v1050
    %v1120 = vadd.f32 %v504, %v1052
    %v1121 = vadd.f32 %v695, %v1103
    %v1122 = vadd.f32 %v697, %v1105
    %v1123 = vmul.f32 %v1107, 0.5
    %v1124 = vmul.f32 %v1111, 0.5
    %v1125 = vmul.f32 %v1115, 0.5
    %v1126 = vmul.f32 %v1119, 0.5
    %v1127 = vtanh.pop %v1123
    %v1128 = vtanh.pop %v1124
    %v1129 = vtanh.pop %v1125
    %v1130 = vtanh.pop %v1126
    %v1131 = vmul.f32 %v1127, 0.5
    %v1132 = vmul.f32 %v1128, 0.5
    %v1133 = vmul.f32 %v1129, 0.5
    %v1134 = vmul.f32 %v1130, 0.5
    %v1135 = vadd.f32 %v1131, 0.5
    %v1136 = vadd.f32 %v1132, 0.5
    %v1137 = vadd.f32 %v1133, 0.5
    %v1138 = vadd.f32 %v1134, 0.5
    %v1139 = vmul.f32 %v1108, 0.5
    %v1140 = vmul.f32 %v1112, 0.5
    %v1141 = vmul.f32 %v1116, 0.5
    %v1142 = vmul.f32 %v1120, 0.5
    %v1143 = vtanh.pop %v1139
    %v1144 = vtanh.pop %v1140
    %v1145 = vtanh.pop %v1141
    %v1146 = vtanh.pop %v1142
    %v1147 = vmul.f32 %v1143, 0.5
    %v1148 = vmul.f32 %v1144, 0.5
    %v1149 = vmul.f32 %v1145, 0.5
    %v1150 = vmul.f32 %v1146, 0.5
    %v1151 = vadd.f32 %v1147, 0.5
    %v1152 = vadd.f32 %v1148, 0.5
    %v1153 = vadd.f32 %v1149, 0.5
    %v1154 = vadd.f32 %v1150, 0.5
    %v1155 = vtanh.pop %v1109
    %v1156 = vtanh.pop %v1113
    %v1157 = vtanh.pop %v1117
    %v1158 = vtanh.pop %v1121
    %v1159 = vmul.f32 %v1110, 0.5
    %v1160 = vmul.f32 %v1114, 0.5
    %v1161 = vmul.f32 %v1118, 0.5
    %v1162 = vmul.f32 %v1122, 0.5
    %v1163 = vtanh.pop %v1159
    %v1164 = vtanh.pop %v1160
    %v1165 = vtanh.pop %v1161
    %v1166 = vtanh.pop %v1162
    %v1167 = vmul.f32 %v1163, 0.5
    %v1168 = vmul.f32 %v1164, 0.5
    %v1169 = vmul.f32 %v1165, 0.5
    %v1170 = vmul.f32 %v1166, 0.5
    %v1171 = vadd.f32 %v1167, 0.5
    %v1172 = vadd.f32 %v1168, 0.5
    %v1173 = vadd.f32 %v1169, 0.5
    %v1174 = vadd.f32 %v1170, 0.5
    %v1175 = vmul.f32 %v1151, %v136
    %v1176 = vmul.f32 %v1152, %v137
    %v1177 = vmul.f32 %v1153, %v138
    %v1178 = vmul.f32 %v1154, %v139
    %v1179 = vmul.f32 %v1135, %v1155
    %v1180 = vmul.f32 %v1136, %v1156
    %v1181 = vmul.f32 %v1137, %v1157
    %v1182 = vmul.f32 %v1138, %v1158
    %v1183 = vadd.f32 %v1175, %v1179
    %v1184 = vadd.f32 %v1176, %v1180
    %v1185 = vadd.f32 %v1177, %v1181
    %v1186 = vadd.f32 %v1178, %v1182
    %v1187 = vtanh.pop %v1183
    %v1188 = vtanh.pop %v1184
    %v1189 = vtanh.pop %v1185
    %v1190 = vtanh.pop %v1186
    %v1191 = vmul.f32 %v1171, %v1187
    %v1192 = vmul.f32 %v1172, %v1188
    %v1193 = vmul.f32 %v1173, %v1189
    %v1194 = vmul.f32 %v1174, %v1190
    %1199 = vrot.lane.b32.xlu0 %v1191, 96
    %v1200 = vpop.permute.xlu0 %1199
    %1201 = vrot.lane.b32.xlu0 %v1192, 96
    %v1202 = vpop.permute.xlu0 %1201
    %1203 = vrot.lane.b32.xlu0 %v1193, 96
    %v1204 = vpop.permute.xlu0 %1203
    %1205 = vrot.lane.b32.xlu0 %v1194, 96
    %v1206 = vpop.permute.xlu0 %1205
    %v1211 = vadd.f32 %v1191, %v1200
    %v1212 = vadd.f32 %v1192, %v1202
    %v1213 = vadd.f32 %v1193, %v1204
    %v1214 = vadd.f32 %v1194, %v1206
    %1215 = vrot.lane.b32.xlu0 %v1191, 64
    %v1216 = vpop.permute.xlu0 %1215
    %1217 = vrot.lane.b32.xlu0 %v1192, 64
    %v1218 = vpop.permute.xlu0 %1217
    %1219 = vrot.lane.b32.xlu0 %v1193, 64
    %v1220 = vpop.permute.xlu0 %1219
    %1221 = vrot.lane.b32.xlu0 %v1194, 64
    %v1222 = vpop.permute.xlu0 %1221
    %v1227 = vadd.f32 %v1211, %v1216
    %v1228 = vadd.f32 %v1212, %v1218
    %v1229 = vadd.f32 %v1213, %v1220
    %v1230 = vadd.f32 %v1214, %v1222
    %1231 = vrot.lane.b32.xlu0 %v1191, 32
    %v1232 = vpop.permute.xlu0 %1231
    %1233 = vrot.lane.b32.xlu0 %v1192, 32
    %v1234 = vpop.permute.xlu0 %1233
    %1235 = vrot.lane.b32.xlu0 %v1193, 32
    %v1236 = vpop.permute.xlu0 %1235
    %1237 = vrot.lane.b32.xlu0 %v1194, 32
    %v1238 = vpop.permute.xlu0 %1237
    %v1243 = vadd.f32 %v1227, %v1232
    %v1244 = vadd.f32 %v1228, %v1234
    %v1245 = vadd.f32 %v1229, %v1236
    %v1246 = vadd.f32 %v1230, %v1238
    %s1247 = scvt.s32.f32 %s140
    %s1248 = smul.f32 %s1247, 0.032258064
    %v1249 = vstv %s1248
    %v1250 = vmul.f32 %v1249, %v95
    %v1252 = vlaneseq
    %v1253 = vshrl.u32 %v1252, 7
    %v1254 = vsub.s32 0, %v1253
    %v1255 = vrot.slane %v1250, %v1254
    %v1257 = vadd.f32 %v1243, %v1255
    %v1258 = vadd.f32 %v1244, %v1255
    %v1259 = vadd.f32 %v1245, %v1255
    %v1260 = vadd.f32 %v1246, %v1255
    %v1261 = vadd.f32 %v1257, %v122
    %v1262 = vadd.f32 %v1258, %v123
    %v1263 = vadd.f32 %v1259, %v124
    %v1264 = vadd.f32 %v1260, %v125
    %s1265 = smul.u32 %s140, 32
    %s1266 = scalar_lea.vmem [#allocation2], %s1265
    %vm1267 = vcmask 261120
    %1268 = vst.msk [vmem:[%s1266] sm:$0xff] %vm1267, %v1261
    %1269 = vst.msk [vmem:[%s1266 + $0x8] sm:$0xff] %vm1267, %v1262
    %1270 = vst.msk [vmem:[%s1266 + $0x10] sm:$0xff] %vm1267, %v1263
    %1271 = vst.msk [vmem:[%s1266 + $0x18] sm:$0xff] %vm1267, %v1264
    %v1272 = vpack.c.bf16 %v1192, %v1191
    %v1273 = vpack.c.bf16 %v1194, %v1193
    %1274 = vmatprep.subr.bf16.mxu0 %v938
    %1275 = vmatpush1.bf16.msra.mxu0 %v937
    %1276 = vmatprep.subr.bf16.mxu0 %v942
    %1277 = vmatpush1.bf16.msra.mxu0 %v941
    %1278 = vmatprep.subr.bf16.mxu0 %v946
    %1279 = vmatpush1.bf16.msra.mxu0 %v945
    %1280 = vmatprep.subr.bf16.mxu0 %v950
    %1281 = vmatpush1.bf16.msra.mxu0 %v949
    %1282 = vmatprep.subr.bf16.mxu0 %v954
    %1283 = vmatpush1.bf16.msra.mxu0 %v953
    %1284 = vmatprep.subr.bf16.mxu0 %v958
    %1285 = vmatpush1.bf16.msra.mxu0 %v957
    %1286 = vmatprep.subr.bf16.mxu0 %v962
    %1287 = vmatpush1.bf16.msra.mxu0 %v961
    %1288 = vmatprep.subr.bf16.mxu0 %v966
    %1289 = vmatpush1.bf16.msra.mxu0 %v965
    %1290 = vmatprep.subr.bf16.mxu0 0
    %1291 = vmatpush1.bf16.msra.mxu0 0
    %1292 = vmatprep.subr.bf16.mxu0 0
    %1293 = vmatpush1.bf16.msra.mxu0 0
    %1294 = vmatprep.subr.bf16.mxu0 0
    %1295 = vmatpush1.bf16.msra.mxu0 0
    %1296 = vmatprep.subr.bf16.mxu0 0
    %1297 = vmatpush1.bf16.msra.mxu0 0
    %1298 = vmatprep.subr.bf16.mxu0 0
    %1299 = vmatpush1.bf16.msra.mxu0 0
    %1300 = vmatprep.subr.bf16.mxu0 0
    %1301 = vmatpush1.bf16.msra.mxu0 0
    %1302 = vmatprep.subr.bf16.mxu0 0
    %1303 = vmatpush1.bf16.msra.mxu0 0
    %1304 = vmatprep.subr.bf16.mxu0 0
    %1305 = vmatpush1.bf16.msra.mxu0 0
    %1306 = vmatprep.mubr.bf16.mxu0 0
    %1307 = vmatmul.mubr.bf16.gmra.mrb[0].mxu0 %v1272
    %v1308 = vpop.f32.mrb[0].mxu0
    %v1309 = vadd.f32 0.0, %v1308
    %v1310 = vpop.f32.mrb[0].mxu0
    %v1311 = vadd.f32 0.0, %v1310
    %v1312 = vpop.f32.mrb[0].mxu0
    %v1313 = vadd.f32 0.0, %v1312
    %v1314 = vpop.f32.mrb[0].mxu0
    %v1315 = vadd.f32 0.0, %v1314
    %1316 = vmatprep.mubr.bf16.mxu0 0
    %1317 = vmatmul.mubr.bf16.gmra.mrb[0].mxu0 %v1273
    %v1318 = vpop.f32.mrb[0].mxu0
    %v1319 = vadd.f32 0.0, %v1318
    %v1320 = vpop.f32.mrb[0].mxu0
    %v1321 = vadd.f32 0.0, %v1320
    %v1322 = vpop.f32.mrb[0].mxu0
    %v1323 = vadd.f32 0.0, %v1322
    %v1324 = vpop.f32.mrb[0].mxu0
    %v1325 = vadd.f32 0.0, %v1324
    %1326 = vdwg.mxu0
    %1327 = vmatprep.subr.bf16.mxu0 %v940
    %1328 = vmatpush1.bf16.msra.mxu0 %v939
    %1329 = vmatprep.subr.bf16.mxu0 %v944
    %1330 = vmatpush1.bf16.msra.mxu0 %v943
    %1331 = vmatprep.subr.bf16.mxu0 %v948
    %1332 = vmatpush1.bf16.msra.mxu0 %v947
    %1333 = vmatprep.subr.bf16.mxu0 %v952
    %1334 = vmatpush1.bf16.msra.mxu0 %v951
    %1335 = vmatprep.subr.bf16.mxu0 %v956
    %1336 = vmatpush1.bf16.msra.mxu0 %v955
    %1337 = vmatprep.subr.bf16.mxu0 %v960
    %1338 = vmatpush1.bf16.msra.mxu0 %v959
    %1339 = vmatprep.subr.bf16.mxu0 %v964
    %1340 = vmatpush1.bf16.msra.mxu0 %v963
    %1341 = vmatprep.subr.bf16.mxu0 %v968
    %1342 = vmatpush1.bf16.msra.mxu0 %v967
    %1343 = vmatprep.subr.bf16.mxu0 0
    %1344 = vmatpush1.bf16.msra.mxu0 0
    %1345 = vmatprep.subr.bf16.mxu0 0
    %1346 = vmatpush1.bf16.msra.mxu0 0
    %1347 = vmatprep.subr.bf16.mxu0 0
    %1348 = vmatpush1.bf16.msra.mxu0 0
    %1349 = vmatprep.subr.bf16.mxu0 0
    %1350 = vmatpush1.bf16.msra.mxu0 0
    %1351 = vmatprep.subr.bf16.mxu0 0
    %1352 = vmatpush1.bf16.msra.mxu0 0
    %1353 = vmatprep.subr.bf16.mxu0 0
    %1354 = vmatpush1.bf16.msra.mxu0 0
    %1355 = vmatprep.subr.bf16.mxu0 0
    %1356 = vmatpush1.bf16.msra.mxu0 0
    %1357 = vmatprep.subr.bf16.mxu0 0
    %1358 = vmatpush1.bf16.msra.mxu0 0
    %1359 = vmatprep.mubr.bf16.mxu0 0
    %1360 = vmatmul.mubr.bf16.gmra.mrb[0].mxu0 %v1272
    %v1361 = vpop.f32.mrb[0].mxu0
    %v1362 = vadd.f32 0.0, %v1361
    %v1363 = vpop.f32.mrb[0].mxu0
    %v1364 = vadd.f32 0.0, %v1363
    %v1365 = vpop.f32.mrb[0].mxu0
    %v1366 = vadd.f32 0.0, %v1365
    %v1367 = vpop.f32.mrb[0].mxu0
    %v1368 = vadd.f32 0.0, %v1367
    %1369 = vmatprep.mubr.bf16.mxu0 0
    %1370 = vmatmul.mubr.bf16.gmra.mrb[0].mxu0 %v1273
    %v1371 = vpop.f32.mrb[0].mxu0
    %v1372 = vadd.f32 0.0, %v1371
    %v1373 = vpop.f32.mrb[0].mxu0
    %v1374 = vadd.f32 0.0, %v1373
    %v1375 = vpop.f32.mrb[0].mxu0
    %v1376 = vadd.f32 0.0, %v1375
    %v1377 = vpop.f32.mrb[0].mxu0
    %v1378 = vadd.f32 0.0, %v1377
    %1379 = vdwg.mxu0
    %v1380 = vadd.f32 %v508, %v1309
    %v1381 = vadd.f32 %v510, %v1311
    %v1382 = vadd.f32 %v701, %v1362
    %v1383 = vadd.f32 %v703, %v1364
    %v1384 = vadd.f32 %v512, %v1313
    %v1385 = vadd.f32 %v514, %v1315
    %v1386 = vadd.f32 %v705, %v1366
    %v1387 = vadd.f32 %v707, %v1368
    %v1388 = vadd.f32 %v518, %v1319
    %v1389 = vadd.f32 %v520, %v1321
    %v1390 = vadd.f32 %v711, %v1372
    %v1391 = vadd.f32 %v713, %v1374
    %v1392 = vadd.f32 %v522, %v1323
    %v1393 = vadd.f32 %v524, %v1325
    %v1394 = vadd.f32 %v715, %v1376
    %v1395 = vadd.f32 %v717, %v1378
    %v1396 = vmul.f32 %v1380, 0.5
    %v1397 = vmul.f32 %v1384, 0.5
    %v1398 = vmul.f32 %v1388, 0.5
    %v1399 = vmul.f32 %v1392, 0.5
    %v1400 = vtanh.pop %v1396
    %v1401 = vtanh.pop %v1397
    %v1402 = vtanh.pop %v1398
    %v1403 = vtanh.pop %v1399
    %v1404 = vmul.f32 %v1400, 0.5
    %v1405 = vmul.f32 %v1401, 0.5
    %v1406 = vmul.f32 %v1402, 0.5
    %v1407 = vmul.f32 %v1403, 0.5
    %v1408 = vadd.f32 %v1404, 0.5
    %v1409 = vadd.f32 %v1405, 0.5
    %v1410 = vadd.f32 %v1406, 0.5
    %v1411 = vadd.f32 %v1407, 0.5
    %v1412 = vmul.f32 %v1381, 0.5
    %v1413 = vmul.f32 %v1385, 0.5
    %v1414 = vmul.f32 %v1389, 0.5
    %v1415 = vmul.f32 %v1393, 0.5
    %v1416 = vtanh.pop %v1412
    %v1417 = vtanh.pop %v1413
    %v1418 = vtanh.pop %v1414
    %v1419 = vtanh.pop %v1415
    %v1420 = vmul.f32 %v1416, 0.5
    %v1421 = vmul.f32 %v1417, 0.5
    %v1422 = vmul.f32 %v1418, 0.5
    %v1423 = vmul.f32 %v1419, 0.5
    %v1424 = vadd.f32 %v1420, 0.5
    %v1425 = vadd.f32 %v1421, 0.5
    %v1426 = vadd.f32 %v1422, 0.5
    %v1427 = vadd.f32 %v1423, 0.5
    %v1428 = vtanh.pop %v1382
    %v1429 = vtanh.pop %v1386
    %v1430 = vtanh.pop %v1390
    %v1431 = vtanh.pop %v1394
    %v1432 = vmul.f32 %v1383, 0.5
    %v1433 = vmul.f32 %v1387, 0.5
    %v1434 = vmul.f32 %v1391, 0.5
    %v1435 = vmul.f32 %v1395, 0.5
    %v1436 = vtanh.pop %v1432
    %v1437 = vtanh.pop %v1433
    %v1438 = vtanh.pop %v1434
    %v1439 = vtanh.pop %v1435
    %v1440 = vmul.f32 %v1436, 0.5
    %v1441 = vmul.f32 %v1437, 0.5
    %v1442 = vmul.f32 %v1438, 0.5
    %v1443 = vmul.f32 %v1439, 0.5
    %v1444 = vadd.f32 %v1440, 0.5
    %v1445 = vadd.f32 %v1441, 0.5
    %v1446 = vadd.f32 %v1442, 0.5
    %v1447 = vadd.f32 %v1443, 0.5
    %v1448 = vmul.f32 %v1424, %v1183
    %v1449 = vmul.f32 %v1425, %v1184
    %v1450 = vmul.f32 %v1426, %v1185
    %v1451 = vmul.f32 %v1427, %v1186
    %v1452 = vmul.f32 %v1408, %v1428
    %v1453 = vmul.f32 %v1409, %v1429
    %v1454 = vmul.f32 %v1410, %v1430
    %v1455 = vmul.f32 %v1411, %v1431
    %v1456 = vadd.f32 %v1448, %v1452
    %v1457 = vadd.f32 %v1449, %v1453
    %v1458 = vadd.f32 %v1450, %v1454
    %v1459 = vadd.f32 %v1451, %v1455
    %v1460 = vtanh.pop %v1456
    %v1461 = vtanh.pop %v1457
    %v1462 = vtanh.pop %v1458
    %v1463 = vtanh.pop %v1459
    %v1464 = vmul.f32 %v1444, %v1460
    %v1465 = vmul.f32 %v1445, %v1461
    %v1466 = vmul.f32 %v1446, %v1462
    %v1467 = vmul.f32 %v1447, %v1463
    %1472 = vrot.lane.b32.xlu0 %v1464, 96
    %v1473 = vpop.permute.xlu0 %1472
    %1474 = vrot.lane.b32.xlu0 %v1465, 96
    %v1475 = vpop.permute.xlu0 %1474
    %1476 = vrot.lane.b32.xlu0 %v1466, 96
    %v1477 = vpop.permute.xlu0 %1476
    %1478 = vrot.lane.b32.xlu0 %v1467, 96
    %v1479 = vpop.permute.xlu0 %1478
    %v1484 = vadd.f32 %v1464, %v1473
    %v1485 = vadd.f32 %v1465, %v1475
    %v1486 = vadd.f32 %v1466, %v1477
    %v1487 = vadd.f32 %v1467, %v1479
    %1488 = vrot.lane.b32.xlu0 %v1464, 64
    %v1489 = vpop.permute.xlu0 %1488
    %1490 = vrot.lane.b32.xlu0 %v1465, 64
    %v1491 = vpop.permute.xlu0 %1490
    %1492 = vrot.lane.b32.xlu0 %v1466, 64
    %v1493 = vpop.permute.xlu0 %1492
    %1494 = vrot.lane.b32.xlu0 %v1467, 64
    %v1495 = vpop.permute.xlu0 %1494
    %v1500 = vadd.f32 %v1484, %v1489
    %v1501 = vadd.f32 %v1485, %v1491
    %v1502 = vadd.f32 %v1486, %v1493
    %v1503 = vadd.f32 %v1487, %v1495
    %1504 = vrot.lane.b32.xlu0 %v1464, 32
    %v1505 = vpop.permute.xlu0 %1504
    %1506 = vrot.lane.b32.xlu0 %v1465, 32
    %v1507 = vpop.permute.xlu0 %1506
    %1508 = vrot.lane.b32.xlu0 %v1466, 32
    %v1509 = vpop.permute.xlu0 %1508
    %1510 = vrot.lane.b32.xlu0 %v1467, 32
    %v1511 = vpop.permute.xlu0 %1510
    %v1516 = vadd.f32 %v1500, %v1505
    %v1517 = vadd.f32 %v1501, %v1507
    %v1518 = vadd.f32 %v1502, %v1509
    %v1519 = vadd.f32 %v1503, %v1511
    %s1520 = sadd.s32 %s140, 1
    %s1521 = scvt.s32.f32 %s1520
    %s1522 = smul.f32 %s1521, 0.032258064
    %v1523 = vstv %s1522
    %v1524 = vmul.f32 %v1523, %v95
    %v1526 = vlaneseq
    %v1527 = vshrl.u32 %v1526, 7
    %v1528 = vsub.s32 0, %v1527
    %v1529 = vrot.slane %v1524, %v1528
    %v1531 = vadd.f32 %v1516, %v1529
    %v1532 = vadd.f32 %v1517, %v1529
    %v1533 = vadd.f32 %v1518, %v1529
    %v1534 = vadd.f32 %v1519, %v1529
    %v1535 = vadd.f32 %v1531, %v122
    %v1536 = vadd.f32 %v1532, %v123
    %v1537 = vadd.f32 %v1533, %v124
    %v1538 = vadd.f32 %v1534, %v125
    %s1539 = smul.u32 %s1520, 32
    %s1540 = scalar_lea.vmem [#allocation2], %s1539
    %1541 = vst.msk [vmem:[%s1540] sm:$0xff] %vm1267, %v1535
    %1542 = vst.msk [vmem:[%s1540 + $0x8] sm:$0xff] %vm1267, %v1536
    %1543 = vst.msk [vmem:[%s1540 + $0x10] sm:$0xff] %vm1267, %v1537
    %1544 = vst.msk [vmem:[%s1540 + $0x18] sm:$0xff] %vm1267, %v1538
    %v1545 = vpack.c.bf16 %v1465, %v1464
    %v1546 = vpack.c.bf16 %v1467, %v1466
    %1547 = vmatprep.subr.bf16.mxu0 %v938
    %1548 = vmatpush1.bf16.msra.mxu0 %v937
    %1549 = vmatprep.subr.bf16.mxu0 %v942
    %1550 = vmatpush1.bf16.msra.mxu0 %v941
    %1551 = vmatprep.subr.bf16.mxu0 %v946
    %1552 = vmatpush1.bf16.msra.mxu0 %v945
    %1553 = vmatprep.subr.bf16.mxu0 %v950
    %1554 = vmatpush1.bf16.msra.mxu0 %v949
    %1555 = vmatprep.subr.bf16.mxu0 %v954
    %1556 = vmatpush1.bf16.msra.mxu0 %v953
    %1557 = vmatprep.subr.bf16.mxu0 %v958
    %1558 = vmatpush1.bf16.msra.mxu0 %v957
    %1559 = vmatprep.subr.bf16.mxu0 %v962
    %1560 = vmatpush1.bf16.msra.mxu0 %v961
    %1561 = vmatprep.subr.bf16.mxu0 %v966
    %1562 = vmatpush1.bf16.msra.mxu0 %v965
    %1563 = vmatprep.subr.bf16.mxu0 0
    %1564 = vmatpush1.bf16.msra.mxu0 0
    %1565 = vmatprep.subr.bf16.mxu0 0
    %1566 = vmatpush1.bf16.msra.mxu0 0
    %1567 = vmatprep.subr.bf16.mxu0 0
    %1568 = vmatpush1.bf16.msra.mxu0 0
    %1569 = vmatprep.subr.bf16.mxu0 0
    %1570 = vmatpush1.bf16.msra.mxu0 0
    %1571 = vmatprep.subr.bf16.mxu0 0
    %1572 = vmatpush1.bf16.msra.mxu0 0
    %1573 = vmatprep.subr.bf16.mxu0 0
    %1574 = vmatpush1.bf16.msra.mxu0 0
    %1575 = vmatprep.subr.bf16.mxu0 0
    %1576 = vmatpush1.bf16.msra.mxu0 0
    %1577 = vmatprep.subr.bf16.mxu0 0
    %1578 = vmatpush1.bf16.msra.mxu0 0
    %1579 = vmatprep.mubr.bf16.mxu0 0
    %1580 = vmatmul.mubr.bf16.gmra.mrb[0].mxu0 %v1545
    %v1581 = vpop.f32.mrb[0].mxu0
    %v1582 = vadd.f32 0.0, %v1581
    %v1583 = vpop.f32.mrb[0].mxu0
    %v1584 = vadd.f32 0.0, %v1583
    %v1585 = vpop.f32.mrb[0].mxu0
    %v1586 = vadd.f32 0.0, %v1585
    %v1587 = vpop.f32.mrb[0].mxu0
    %v1588 = vadd.f32 0.0, %v1587
    %1589 = vmatprep.mubr.bf16.mxu0 0
    %1590 = vmatmul.mubr.bf16.gmra.mrb[0].mxu0 %v1546
    %v1591 = vpop.f32.mrb[0].mxu0
    %v1592 = vadd.f32 0.0, %v1591
    %v1593 = vpop.f32.mrb[0].mxu0
    %v1594 = vadd.f32 0.0, %v1593
    %v1595 = vpop.f32.mrb[0].mxu0
    %v1596 = vadd.f32 0.0, %v1595
    %v1597 = vpop.f32.mrb[0].mxu0
    %v1598 = vadd.f32 0.0, %v1597
    %1599 = vdwg.mxu0
    %1600 = vmatprep.subr.bf16.mxu0 %v940
    %1601 = vmatpush1.bf16.msra.mxu0 %v939
    %1602 = vmatprep.subr.bf16.mxu0 %v944
    %1603 = vmatpush1.bf16.msra.mxu0 %v943
    %1604 = vmatprep.subr.bf16.mxu0 %v948
    %1605 = vmatpush1.bf16.msra.mxu0 %v947
    %1606 = vmatprep.subr.bf16.mxu0 %v952
    %1607 = vmatpush1.bf16.msra.mxu0 %v951
    %1608 = vmatprep.subr.bf16.mxu0 %v956
    %1609 = vmatpush1.bf16.msra.mxu0 %v955
    %1610 = vmatprep.subr.bf16.mxu0 %v960
    %1611 = vmatpush1.bf16.msra.mxu0 %v959
    %1612 = vmatprep.subr.bf16.mxu0 %v964
    %1613 = vmatpush1.bf16.msra.mxu0 %v963
    %1614 = vmatprep.subr.bf16.mxu0 %v968
    %1615 = vmatpush1.bf16.msra.mxu0 %v967
    %1616 = vmatprep.subr.bf16.mxu0 0
    %1617 = vmatpush1.bf16.msra.mxu0 0
    %1618 = vmatprep.subr.bf16.mxu0 0
    %1619 = vmatpush1.bf16.msra.mxu0 0
    %1620 = vmatprep.subr.bf16.mxu0 0
    %1621 = vmatpush1.bf16.msra.mxu0 0
    %1622 = vmatprep.subr.bf16.mxu0 0
    %1623 = vmatpush1.bf16.msra.mxu0 0
    %1624 = vmatprep.subr.bf16.mxu0 0
    %1625 = vmatpush1.bf16.msra.mxu0 0
    %1626 = vmatprep.subr.bf16.mxu0 0
    %1627 = vmatpush1.bf16.msra.mxu0 0
    %1628 = vmatprep.subr.bf16.mxu0 0
    %1629 = vmatpush1.bf16.msra.mxu0 0
    %1630 = vmatprep.subr.bf16.mxu0 0
    %1631 = vmatpush1.bf16.msra.mxu0 0
    %1632 = vmatprep.mubr.bf16.mxu0 0
    %1633 = vmatmul.mubr.bf16.gmra.mrb[0].mxu0 %v1545
    %v1634 = vpop.f32.mrb[0].mxu0
    %v1635 = vadd.f32 0.0, %v1634
    %v1636 = vpop.f32.mrb[0].mxu0
    %v1637 = vadd.f32 0.0, %v1636
    %v1638 = vpop.f32.mrb[0].mxu0
    %v1639 = vadd.f32 0.0, %v1638
    %v1640 = vpop.f32.mrb[0].mxu0
    %v1641 = vadd.f32 0.0, %v1640
    %1642 = vmatprep.mubr.bf16.mxu0 0
    %1643 = vmatmul.mubr.bf16.gmra.mrb[0].mxu0 %v1546
    %v1644 = vpop.f32.mrb[0].mxu0
    %v1645 = vadd.f32 0.0, %v1644
    %v1646 = vpop.f32.mrb[0].mxu0
    %v1647 = vadd.f32 0.0, %v1646
    %v1648 = vpop.f32.mrb[0].mxu0
    %v1649 = vadd.f32 0.0, %v1648
    %v1650 = vpop.f32.mrb[0].mxu0
    %v1651 = vadd.f32 0.0, %v1650
    %1652 = vdwg.mxu0
    %v1653 = vadd.f32 %v528, %v1582
    %v1654 = vadd.f32 %v530, %v1584
    %v1655 = vadd.f32 %v721, %v1635
    %v1656 = vadd.f32 %v723, %v1637
    %v1657 = vadd.f32 %v532, %v1586
    %v1658 = vadd.f32 %v534, %v1588
    %v1659 = vadd.f32 %v725, %v1639
    %v1660 = vadd.f32 %v727, %v1641
    %v1661 = vadd.f32 %v538, %v1592
    %v1662 = vadd.f32 %v540, %v1594
    %v1663 = vadd.f32 %v731, %v1645
    %v1664 = vadd.f32 %v733, %v1647
    %v1665 = vadd.f32 %v542, %v1596
    %v1666 = vadd.f32 %v544, %v1598
    %v1667 = vadd.f32 %v735, %v1649
    %v1668 = vadd.f32 %v737, %v1651
    %v1669 = vmul.f32 %v1653, 0.5
    %v1670 = vmul.f32 %v1657, 0.5
    %v1671 = vmul.f32 %v1661, 0.5
    %v1672 = vmul.f32 %v1665, 0.5
    %v1673 = vtanh.pop %v1669
    %v1674 = vtanh.pop %v1670
    %v1675 = vtanh.pop %v1671
    %v1676 = vtanh.pop %v1672
    %v1677 = vmul.f32 %v1673, 0.5
    %v1678 = vmul.f32 %v1674, 0.5
    %v1679 = vmul.f32 %v1675, 0.5
    %v1680 = vmul.f32 %v1676, 0.5
    %v1681 = vadd.f32 %v1677, 0.5
    %v1682 = vadd.f32 %v1678, 0.5
    %v1683 = vadd.f32 %v1679, 0.5
    %v1684 = vadd.f32 %v1680, 0.5
    %v1685 = vmul.f32 %v1654, 0.5
    %v1686 = vmul.f32 %v1658, 0.5
    %v1687 = vmul.f32 %v1662, 0.5
    %v1688 = vmul.f32 %v1666, 0.5
    %v1689 = vtanh.pop %v1685
    %v1690 = vtanh.pop %v1686
    %v1691 = vtanh.pop %v1687
    %v1692 = vtanh.pop %v1688
    %v1693 = vmul.f32 %v1689, 0.5
    %v1694 = vmul.f32 %v1690, 0.5
    %v1695 = vmul.f32 %v1691, 0.5
    %v1696 = vmul.f32 %v1692, 0.5
    %v1697 = vadd.f32 %v1693, 0.5
    %v1698 = vadd.f32 %v1694, 0.5
    %v1699 = vadd.f32 %v1695, 0.5
    %v1700 = vadd.f32 %v1696, 0.5
    %v1701 = vtanh.pop %v1655
    %v1702 = vtanh.pop %v1659
    %v1703 = vtanh.pop %v1663
    %v1704 = vtanh.pop %v1667
    %v1705 = vmul.f32 %v1656, 0.5
    %v1706 = vmul.f32 %v1660, 0.5
    %v1707 = vmul.f32 %v1664, 0.5
    %v1708 = vmul.f32 %v1668, 0.5
    %v1709 = vtanh.pop %v1705
    %v1710 = vtanh.pop %v1706
    %v1711 = vtanh.pop %v1707
    %v1712 = vtanh.pop %v1708
    %v1713 = vmul.f32 %v1709, 0.5
    %v1714 = vmul.f32 %v1710, 0.5
    %v1715 = vmul.f32 %v1711, 0.5
    %v1716 = vmul.f32 %v1712, 0.5
    %v1717 = vadd.f32 %v1713, 0.5
    %v1718 = vadd.f32 %v1714, 0.5
    %v1719 = vadd.f32 %v1715, 0.5
    %v1720 = vadd.f32 %v1716, 0.5
    %v1721 = vmul.f32 %v1697, %v1456
    %v1722 = vmul.f32 %v1698, %v1457
    %v1723 = vmul.f32 %v1699, %v1458
    %v1724 = vmul.f32 %v1700, %v1459
    %v1725 = vmul.f32 %v1681, %v1701
    %v1726 = vmul.f32 %v1682, %v1702
    %v1727 = vmul.f32 %v1683, %v1703
    %v1728 = vmul.f32 %v1684, %v1704
    %v1729 = vadd.f32 %v1721, %v1725
    %v1730 = vadd.f32 %v1722, %v1726
    %v1731 = vadd.f32 %v1723, %v1727
    %v1732 = vadd.f32 %v1724, %v1728
    %v1733 = vtanh.pop %v1729
    %v1734 = vtanh.pop %v1730
    %v1735 = vtanh.pop %v1731
    %v1736 = vtanh.pop %v1732
    %v1737 = vmul.f32 %v1717, %v1733
    %v1738 = vmul.f32 %v1718, %v1734
    %v1739 = vmul.f32 %v1719, %v1735
    %v1740 = vmul.f32 %v1720, %v1736
    %1745 = vrot.lane.b32.xlu0 %v1737, 96
    %v1746 = vpop.permute.xlu0 %1745
    %1747 = vrot.lane.b32.xlu0 %v1738, 96
    %v1748 = vpop.permute.xlu0 %1747
    %1749 = vrot.lane.b32.xlu0 %v1739, 96
    %v1750 = vpop.permute.xlu0 %1749
    %1751 = vrot.lane.b32.xlu0 %v1740, 96
    %v1752 = vpop.permute.xlu0 %1751
    %v1757 = vadd.f32 %v1737, %v1746
    %v1758 = vadd.f32 %v1738, %v1748
    %v1759 = vadd.f32 %v1739, %v1750
    %v1760 = vadd.f32 %v1740, %v1752
    %1761 = vrot.lane.b32.xlu0 %v1737, 64
    %v1762 = vpop.permute.xlu0 %1761
    %1763 = vrot.lane.b32.xlu0 %v1738, 64
    %v1764 = vpop.permute.xlu0 %1763
    %1765 = vrot.lane.b32.xlu0 %v1739, 64
    %v1766 = vpop.permute.xlu0 %1765
    %1767 = vrot.lane.b32.xlu0 %v1740, 64
    %v1768 = vpop.permute.xlu0 %1767
    %v1773 = vadd.f32 %v1757, %v1762
    %v1774 = vadd.f32 %v1758, %v1764
    %v1775 = vadd.f32 %v1759, %v1766
    %v1776 = vadd.f32 %v1760, %v1768
    %1777 = vrot.lane.b32.xlu0 %v1737, 32
    %v1778 = vpop.permute.xlu0 %1777
    %1779 = vrot.lane.b32.xlu0 %v1738, 32
    %v1780 = vpop.permute.xlu0 %1779
    %1781 = vrot.lane.b32.xlu0 %v1739, 32
    %v1782 = vpop.permute.xlu0 %1781
    %1783 = vrot.lane.b32.xlu0 %v1740, 32
    %v1784 = vpop.permute.xlu0 %1783
    %v1789 = vadd.f32 %v1773, %v1778
    %v1790 = vadd.f32 %v1774, %v1780
    %v1791 = vadd.f32 %v1775, %v1782
    %v1792 = vadd.f32 %v1776, %v1784
    %s1793 = sadd.s32 %s140, 2
    %s1794 = scvt.s32.f32 %s1793
    %s1795 = smul.f32 %s1794, 0.032258064
    %v1796 = vstv %s1795
    %v1797 = vmul.f32 %v1796, %v95
    %v1799 = vlaneseq
    %v1800 = vshrl.u32 %v1799, 7
    %v1801 = vsub.s32 0, %v1800
    %v1802 = vrot.slane %v1797, %v1801
    %v1804 = vadd.f32 %v1789, %v1802
    %v1805 = vadd.f32 %v1790, %v1802
    %v1806 = vadd.f32 %v1791, %v1802
    %v1807 = vadd.f32 %v1792, %v1802
    %v1808 = vadd.f32 %v1804, %v122
    %v1809 = vadd.f32 %v1805, %v123
    %v1810 = vadd.f32 %v1806, %v124
    %v1811 = vadd.f32 %v1807, %v125
    %s1812 = smul.u32 %s1793, 32
    %s1813 = scalar_lea.vmem [#allocation2], %s1812
    %1814 = vst.msk [vmem:[%s1813] sm:$0xff] %vm1267, %v1808
    %1815 = vst.msk [vmem:[%s1813 + $0x8] sm:$0xff] %vm1267, %v1809
    %1816 = vst.msk [vmem:[%s1813 + $0x10] sm:$0xff] %vm1267, %v1810
    %1817 = vst.msk [vmem:[%s1813 + $0x18] sm:$0xff] %vm1267, %v1811
    %v1818 = vpack.c.bf16 %v1738, %v1737
    %v1819 = vpack.c.bf16 %v1740, %v1739
    %1820 = vmatprep.subr.bf16.mxu0 %v938
    %1821 = vmatpush1.bf16.msra.mxu0 %v937
    %1822 = vmatprep.subr.bf16.mxu0 %v942
    %1823 = vmatpush1.bf16.msra.mxu0 %v941
    %1824 = vmatprep.subr.bf16.mxu0 %v946
    %1825 = vmatpush1.bf16.msra.mxu0 %v945
    %1826 = vmatprep.subr.bf16.mxu0 %v950
    %1827 = vmatpush1.bf16.msra.mxu0 %v949
    %1828 = vmatprep.subr.bf16.mxu0 %v954
    %1829 = vmatpush1.bf16.msra.mxu0 %v953
    %1830 = vmatprep.subr.bf16.mxu0 %v958
    %1831 = vmatpush1.bf16.msra.mxu0 %v957
    %1832 = vmatprep.subr.bf16.mxu0 %v962
    %1833 = vmatpush1.bf16.msra.mxu0 %v961
    %1834 = vmatprep.subr.bf16.mxu0 %v966
    %1835 = vmatpush1.bf16.msra.mxu0 %v965
    %1836 = vmatprep.subr.bf16.mxu0 0
    %1837 = vmatpush1.bf16.msra.mxu0 0
    %1838 = vmatprep.subr.bf16.mxu0 0
    %1839 = vmatpush1.bf16.msra.mxu0 0
    %1840 = vmatprep.subr.bf16.mxu0 0
    %1841 = vmatpush1.bf16.msra.mxu0 0
    %1842 = vmatprep.subr.bf16.mxu0 0
    %1843 = vmatpush1.bf16.msra.mxu0 0
    %1844 = vmatprep.subr.bf16.mxu0 0
    %1845 = vmatpush1.bf16.msra.mxu0 0
    %1846 = vmatprep.subr.bf16.mxu0 0
    %1847 = vmatpush1.bf16.msra.mxu0 0
    %1848 = vmatprep.subr.bf16.mxu0 0
    %1849 = vmatpush1.bf16.msra.mxu0 0
    %1850 = vmatprep.subr.bf16.mxu0 0
    %1851 = vmatpush1.bf16.msra.mxu0 0
    %1852 = vmatprep.mubr.bf16.mxu0 0
    %1853 = vmatmul.mubr.bf16.gmra.mrb[0].mxu0 %v1818
    %v1854 = vpop.f32.mrb[0].mxu0
    %v1855 = vadd.f32 0.0, %v1854
    %v1856 = vpop.f32.mrb[0].mxu0
    %v1857 = vadd.f32 0.0, %v1856
    %v1858 = vpop.f32.mrb[0].mxu0
    %v1859 = vadd.f32 0.0, %v1858
    %v1860 = vpop.f32.mrb[0].mxu0
    %v1861 = vadd.f32 0.0, %v1860
    %1862 = vmatprep.mubr.bf16.mxu0 0
    %1863 = vmatmul.mubr.bf16.gmra.mrb[0].mxu0 %v1819
    %v1864 = vpop.f32.mrb[0].mxu0
    %v1865 = vadd.f32 0.0, %v1864
    %v1866 = vpop.f32.mrb[0].mxu0
    %v1867 = vadd.f32 0.0, %v1866
    %v1868 = vpop.f32.mrb[0].mxu0
    %v1869 = vadd.f32 0.0, %v1868
    %v1870 = vpop.f32.mrb[0].mxu0
    %v1871 = vadd.f32 0.0, %v1870
    %1872 = vdwg.mxu0
    %1873 = vmatprep.subr.bf16.mxu0 %v940
    %1874 = vmatpush1.bf16.msra.mxu0 %v939
    %1875 = vmatprep.subr.bf16.mxu0 %v944
    %1876 = vmatpush1.bf16.msra.mxu0 %v943
    %1877 = vmatprep.subr.bf16.mxu0 %v948
    %1878 = vmatpush1.bf16.msra.mxu0 %v947
    %1879 = vmatprep.subr.bf16.mxu0 %v952
    %1880 = vmatpush1.bf16.msra.mxu0 %v951
    %1881 = vmatprep.subr.bf16.mxu0 %v956
    %1882 = vmatpush1.bf16.msra.mxu0 %v955
    %1883 = vmatprep.subr.bf16.mxu0 %v960
    %1884 = vmatpush1.bf16.msra.mxu0 %v959
    %1885 = vmatprep.subr.bf16.mxu0 %v964
    %1886 = vmatpush1.bf16.msra.mxu0 %v963
    %1887 = vmatprep.subr.bf16.mxu0 %v968
    %1888 = vmatpush1.bf16.msra.mxu0 %v967
    %1889 = vmatprep.subr.bf16.mxu0 0
    %1890 = vmatpush1.bf16.msra.mxu0 0
    %1891 = vmatprep.subr.bf16.mxu0 0
    %1892 = vmatpush1.bf16.msra.mxu0 0
    %1893 = vmatprep.subr.bf16.mxu0 0
    %1894 = vmatpush1.bf16.msra.mxu0 0
    %1895 = vmatprep.subr.bf16.mxu0 0
    %1896 = vmatpush1.bf16.msra.mxu0 0
    %1897 = vmatprep.subr.bf16.mxu0 0
    %1898 = vmatpush1.bf16.msra.mxu0 0
    %1899 = vmatprep.subr.bf16.mxu0 0
    %1900 = vmatpush1.bf16.msra.mxu0 0
    %1901 = vmatprep.subr.bf16.mxu0 0
    %1902 = vmatpush1.bf16.msra.mxu0 0
    %1903 = vmatprep.subr.bf16.mxu0 0
    %1904 = vmatpush1.bf16.msra.mxu0 0
    %1905 = vmatprep.mubr.bf16.mxu0 0
    %1906 = vmatmul.mubr.bf16.gmra.mrb[0].mxu0 %v1818
    %v1907 = vpop.f32.mrb[0].mxu0
    %v1908 = vadd.f32 0.0, %v1907
    %v1909 = vpop.f32.mrb[0].mxu0
    %v1910 = vadd.f32 0.0, %v1909
    %v1911 = vpop.f32.mrb[0].mxu0
    %v1912 = vadd.f32 0.0, %v1911
    %v1913 = vpop.f32.mrb[0].mxu0
    %v1914 = vadd.f32 0.0, %v1913
    %1915 = vmatprep.mubr.bf16.mxu0 0
    %1916 = vmatmul.mubr.bf16.gmra.mrb[0].mxu0 %v1819
    %v1917 = vpop.f32.mrb[0].mxu0
    %v1918 = vadd.f32 0.0, %v1917
    %v1919 = vpop.f32.mrb[0].mxu0
    %v1920 = vadd.f32 0.0, %v1919
    %v1921 = vpop.f32.mrb[0].mxu0
    %v1922 = vadd.f32 0.0, %v1921
    %v1923 = vpop.f32.mrb[0].mxu0
    %v1924 = vadd.f32 0.0, %v1923
    %1925 = vdwg.mxu0
    %v1926 = vadd.f32 %v548, %v1855
    %v1927 = vadd.f32 %v550, %v1857
    %v1928 = vadd.f32 %v741, %v1908
    %v1929 = vadd.f32 %v743, %v1910
    %v1930 = vadd.f32 %v552, %v1859
    %v1931 = vadd.f32 %v554, %v1861
    %v1932 = vadd.f32 %v745, %v1912
    %v1933 = vadd.f32 %v747, %v1914
    %v1934 = vadd.f32 %v558, %v1865
    %v1935 = vadd.f32 %v560, %v1867
    %v1936 = vadd.f32 %v751, %v1918
    %v1937 = vadd.f32 %v753, %v1920
    %v1938 = vadd.f32 %v562, %v1869
    %v1939 = vadd.f32 %v564, %v1871
    %v1940 = vadd.f32 %v755, %v1922
    %v1941 = vadd.f32 %v757, %v1924
    %v1942 = vmul.f32 %v1926, 0.5
    %v1943 = vmul.f32 %v1930, 0.5
    %v1944 = vmul.f32 %v1934, 0.5
    %v1945 = vmul.f32 %v1938, 0.5
    %v1946 = vtanh.pop %v1942
    %v1947 = vtanh.pop %v1943
    %v1948 = vtanh.pop %v1944
    %v1949 = vtanh.pop %v1945
    %v1950 = vmul.f32 %v1946, 0.5
    %v1951 = vmul.f32 %v1947, 0.5
    %v1952 = vmul.f32 %v1948, 0.5
    %v1953 = vmul.f32 %v1949, 0.5
    %v1954 = vadd.f32 %v1950, 0.5
    %v1955 = vadd.f32 %v1951, 0.5
    %v1956 = vadd.f32 %v1952, 0.5
    %v1957 = vadd.f32 %v1953, 0.5
    %v1958 = vmul.f32 %v1927, 0.5
    %v1959 = vmul.f32 %v1931, 0.5
    %v1960 = vmul.f32 %v1935, 0.5
    %v1961 = vmul.f32 %v1939, 0.5
    %v1962 = vtanh.pop %v1958
    %v1963 = vtanh.pop %v1959
    %v1964 = vtanh.pop %v1960
    %v1965 = vtanh.pop %v1961
    %v1966 = vmul.f32 %v1962, 0.5
    %v1967 = vmul.f32 %v1963, 0.5
    %v1968 = vmul.f32 %v1964, 0.5
    %v1969 = vmul.f32 %v1965, 0.5
    %v1970 = vadd.f32 %v1966, 0.5
    %v1971 = vadd.f32 %v1967, 0.5
    %v1972 = vadd.f32 %v1968, 0.5
    %v1973 = vadd.f32 %v1969, 0.5
    %v1974 = vtanh.pop %v1928
    %v1975 = vtanh.pop %v1932
    %v1976 = vtanh.pop %v1936
    %v1977 = vtanh.pop %v1940
    %v1978 = vmul.f32 %v1929, 0.5
    %v1979 = vmul.f32 %v1933, 0.5
    %v1980 = vmul.f32 %v1937, 0.5
    %v1981 = vmul.f32 %v1941, 0.5
    %v1982 = vtanh.pop %v1978
    %v1983 = vtanh.pop %v1979
    %v1984 = vtanh.pop %v1980
    %v1985 = vtanh.pop %v1981
    %v1986 = vmul.f32 %v1982, 0.5
    %v1987 = vmul.f32 %v1983, 0.5
    %v1988 = vmul.f32 %v1984, 0.5
    %v1989 = vmul.f32 %v1985, 0.5
    %v1990 = vadd.f32 %v1986, 0.5
    %v1991 = vadd.f32 %v1987, 0.5
    %v1992 = vadd.f32 %v1988, 0.5
    %v1993 = vadd.f32 %v1989, 0.5
    %v1994 = vmul.f32 %v1970, %v1729
    %v1995 = vmul.f32 %v1971, %v1730
    %v1996 = vmul.f32 %v1972, %v1731
    %v1997 = vmul.f32 %v1973, %v1732
    %v1998 = vmul.f32 %v1954, %v1974
    %v1999 = vmul.f32 %v1955, %v1975
    %v2000 = vmul.f32 %v1956, %v1976
    %v2001 = vmul.f32 %v1957, %v1977
    %v2002 = vadd.f32 %v1994, %v1998
    %v2003 = vadd.f32 %v1995, %v1999
    %v2004 = vadd.f32 %v1996, %v2000
    %v2005 = vadd.f32 %v1997, %v2001
    %v2006 = vtanh.pop %v2002
    %v2007 = vtanh.pop %v2003
    %v2008 = vtanh.pop %v2004
    %v2009 = vtanh.pop %v2005
    %v2010 = vmul.f32 %v1990, %v2006
    %v2011 = vmul.f32 %v1991, %v2007
    %v2012 = vmul.f32 %v1992, %v2008
    %v2013 = vmul.f32 %v1993, %v2009
    %2018 = vrot.lane.b32.xlu0 %v2010, 96
    %v2019 = vpop.permute.xlu0 %2018
    %2020 = vrot.lane.b32.xlu0 %v2011, 96
    %v2021 = vpop.permute.xlu0 %2020
    %2022 = vrot.lane.b32.xlu0 %v2012, 96
    %v2023 = vpop.permute.xlu0 %2022
    %2024 = vrot.lane.b32.xlu0 %v2013, 96
    %v2025 = vpop.permute.xlu0 %2024
    %v2030 = vadd.f32 %v2010, %v2019
    %v2031 = vadd.f32 %v2011, %v2021
    %v2032 = vadd.f32 %v2012, %v2023
    %v2033 = vadd.f32 %v2013, %v2025
    %2034 = vrot.lane.b32.xlu0 %v2010, 64
    %v2035 = vpop.permute.xlu0 %2034
    %2036 = vrot.lane.b32.xlu0 %v2011, 64
    %v2037 = vpop.permute.xlu0 %2036
    %2038 = vrot.lane.b32.xlu0 %v2012, 64
    %v2039 = vpop.permute.xlu0 %2038
    %2040 = vrot.lane.b32.xlu0 %v2013, 64
    %v2041 = vpop.permute.xlu0 %2040
    %v2046 = vadd.f32 %v2030, %v2035
    %v2047 = vadd.f32 %v2031, %v2037
    %v2048 = vadd.f32 %v2032, %v2039
    %v2049 = vadd.f32 %v2033, %v2041
    %2050 = vrot.lane.b32.xlu0 %v2010, 32
    %v2051 = vpop.permute.xlu0 %2050
    %2052 = vrot.lane.b32.xlu0 %v2011, 32
    %v2053 = vpop.permute.xlu0 %2052
    %2054 = vrot.lane.b32.xlu0 %v2012, 32
    %v2055 = vpop.permute.xlu0 %2054
    %2056 = vrot.lane.b32.xlu0 %v2013, 32
    %v2057 = vpop.permute.xlu0 %2056
    %v2062 = vadd.f32 %v2046, %v2051
    %v2063 = vadd.f32 %v2047, %v2053
    %v2064 = vadd.f32 %v2048, %v2055
    %v2065 = vadd.f32 %v2049, %v2057
    %s2066 = sadd.s32 %s140, 3
    %s2067 = scvt.s32.f32 %s2066
    %s2068 = smul.f32 %s2067, 0.032258064
    %v2069 = vstv %s2068
    %v2070 = vmul.f32 %v2069, %v95
    %v2072 = vlaneseq
    %v2073 = vshrl.u32 %v2072, 7
    %v2074 = vsub.s32 0, %v2073
    %v2075 = vrot.slane %v2070, %v2074
    %v2077 = vadd.f32 %v2062, %v2075
    %v2078 = vadd.f32 %v2063, %v2075
    %v2079 = vadd.f32 %v2064, %v2075
    %v2080 = vadd.f32 %v2065, %v2075
    %v2081 = vadd.f32 %v2077, %v122
    %v2082 = vadd.f32 %v2078, %v123
    %v2083 = vadd.f32 %v2079, %v124
    %v2084 = vadd.f32 %v2080, %v125
    %s2085 = smul.u32 %s2066, 32
    %s2086 = scalar_lea.vmem [#allocation2], %s2085
    %2087 = vst.msk [vmem:[%s2086] sm:$0xff] %vm1267, %v2081
    %2088 = vst.msk [vmem:[%s2086 + $0x8] sm:$0xff] %vm1267, %v2082
    %2089 = vst.msk [vmem:[%s2086 + $0x10] sm:$0xff] %vm1267, %v2083
    %2090 = vst.msk [vmem:[%s2086 + $0x18] sm:$0xff] %vm1267, %v2084
    %v2091 = vpack.c.bf16 %v2011, %v2010
    %v2092 = vpack.c.bf16 %v2013, %v2012
    %2093 = vmatprep.subr.bf16.mxu0 %v938
    %2094 = vmatpush1.bf16.msra.mxu0 %v937
    %2095 = vmatprep.subr.bf16.mxu0 %v942
    %2096 = vmatpush1.bf16.msra.mxu0 %v941
    %2097 = vmatprep.subr.bf16.mxu0 %v946
    %2098 = vmatpush1.bf16.msra.mxu0 %v945
    %2099 = vmatprep.subr.bf16.mxu0 %v950
    %2100 = vmatpush1.bf16.msra.mxu0 %v949
    %2101 = vmatprep.subr.bf16.mxu0 %v954
    %2102 = vmatpush1.bf16.msra.mxu0 %v953
    %2103 = vmatprep.subr.bf16.mxu0 %v958
    %2104 = vmatpush1.bf16.msra.mxu0 %v957
    %2105 = vmatprep.subr.bf16.mxu0 %v962
    %2106 = vmatpush1.bf16.msra.mxu0 %v961
    %2107 = vmatprep.subr.bf16.mxu0 %v966
    %2108 = vmatpush1.bf16.msra.mxu0 %v965
    %2109 = vmatprep.subr.bf16.mxu0 0
    %2110 = vmatpush1.bf16.msra.mxu0 0
    %2111 = vmatprep.subr.bf16.mxu0 0
    %2112 = vmatpush1.bf16.msra.mxu0 0
    %2113 = vmatprep.subr.bf16.mxu0 0
    %2114 = vmatpush1.bf16.msra.mxu0 0
    %2115 = vmatprep.subr.bf16.mxu0 0
    %2116 = vmatpush1.bf16.msra.mxu0 0
    %2117 = vmatprep.subr.bf16.mxu0 0
    %2118 = vmatpush1.bf16.msra.mxu0 0
    %2119 = vmatprep.subr.bf16.mxu0 0
    %2120 = vmatpush1.bf16.msra.mxu0 0
    %2121 = vmatprep.subr.bf16.mxu0 0
    %2122 = vmatpush1.bf16.msra.mxu0 0
    %2123 = vmatprep.subr.bf16.mxu0 0
    %2124 = vmatpush1.bf16.msra.mxu0 0
    %2125 = vmatprep.mubr.bf16.mxu0 0
    %2126 = vmatmul.mubr.bf16.gmra.mrb[0].mxu0 %v2091
    %v2127 = vpop.f32.mrb[0].mxu0
    %v2128 = vadd.f32 0.0, %v2127
    %v2129 = vpop.f32.mrb[0].mxu0
    %v2130 = vadd.f32 0.0, %v2129
    %v2131 = vpop.f32.mrb[0].mxu0
    %v2132 = vadd.f32 0.0, %v2131
    %v2133 = vpop.f32.mrb[0].mxu0
    %v2134 = vadd.f32 0.0, %v2133
    %2135 = vmatprep.mubr.bf16.mxu0 0
    %2136 = vmatmul.mubr.bf16.gmra.mrb[0].mxu0 %v2092
    %v2137 = vpop.f32.mrb[0].mxu0
    %v2138 = vadd.f32 0.0, %v2137
    %v2139 = vpop.f32.mrb[0].mxu0
    %v2140 = vadd.f32 0.0, %v2139
    %v2141 = vpop.f32.mrb[0].mxu0
    %v2142 = vadd.f32 0.0, %v2141
    %v2143 = vpop.f32.mrb[0].mxu0
    %v2144 = vadd.f32 0.0, %v2143
    %2145 = vdwg.mxu0
    %2146 = vmatprep.subr.bf16.mxu0 %v940
    %2147 = vmatpush1.bf16.msra.mxu0 %v939
    %2148 = vmatprep.subr.bf16.mxu0 %v944
    %2149 = vmatpush1.bf16.msra.mxu0 %v943
    %2150 = vmatprep.subr.bf16.mxu0 %v948
    %2151 = vmatpush1.bf16.msra.mxu0 %v947
    %2152 = vmatprep.subr.bf16.mxu0 %v952
    %2153 = vmatpush1.bf16.msra.mxu0 %v951
    %2154 = vmatprep.subr.bf16.mxu0 %v956
    %2155 = vmatpush1.bf16.msra.mxu0 %v955
    %2156 = vmatprep.subr.bf16.mxu0 %v960
    %2157 = vmatpush1.bf16.msra.mxu0 %v959
    %2158 = vmatprep.subr.bf16.mxu0 %v964
    %2159 = vmatpush1.bf16.msra.mxu0 %v963
    %2160 = vmatprep.subr.bf16.mxu0 %v968
    %2161 = vmatpush1.bf16.msra.mxu0 %v967
    %2162 = vmatprep.subr.bf16.mxu0 0
    %2163 = vmatpush1.bf16.msra.mxu0 0
    %2164 = vmatprep.subr.bf16.mxu0 0
    %2165 = vmatpush1.bf16.msra.mxu0 0
    %2166 = vmatprep.subr.bf16.mxu0 0
    %2167 = vmatpush1.bf16.msra.mxu0 0
    %2168 = vmatprep.subr.bf16.mxu0 0
    %2169 = vmatpush1.bf16.msra.mxu0 0
    %2170 = vmatprep.subr.bf16.mxu0 0
    %2171 = vmatpush1.bf16.msra.mxu0 0
    %2172 = vmatprep.subr.bf16.mxu0 0
    %2173 = vmatpush1.bf16.msra.mxu0 0
    %2174 = vmatprep.subr.bf16.mxu0 0
    %2175 = vmatpush1.bf16.msra.mxu0 0
    %2176 = vmatprep.subr.bf16.mxu0 0
    %2177 = vmatpush1.bf16.msra.mxu0 0
    %2178 = vmatprep.mubr.bf16.mxu0 0
    %2179 = vmatmul.mubr.bf16.gmra.mrb[0].mxu0 %v2091
    %v2180 = vpop.f32.mrb[0].mxu0
    %v2181 = vadd.f32 0.0, %v2180
    %v2182 = vpop.f32.mrb[0].mxu0
    %v2183 = vadd.f32 0.0, %v2182
    %v2184 = vpop.f32.mrb[0].mxu0
    %v2185 = vadd.f32 0.0, %v2184
    %v2186 = vpop.f32.mrb[0].mxu0
    %v2187 = vadd.f32 0.0, %v2186
    %2188 = vmatprep.mubr.bf16.mxu0 0
    %2189 = vmatmul.mubr.bf16.gmra.mrb[0].mxu0 %v2092
    %v2190 = vpop.f32.mrb[0].mxu0
    %v2191 = vadd.f32 0.0, %v2190
    %v2192 = vpop.f32.mrb[0].mxu0
    %v2193 = vadd.f32 0.0, %v2192
    %v2194 = vpop.f32.mrb[0].mxu0
    %v2195 = vadd.f32 0.0, %v2194
    %v2196 = vpop.f32.mrb[0].mxu0
    %v2197 = vadd.f32 0.0, %v2196
    %2198 = vdwg.mxu0
    %v2199 = vadd.f32 %v568, %v2128
    %v2200 = vadd.f32 %v570, %v2130
    %v2201 = vadd.f32 %v761, %v2181
    %v2202 = vadd.f32 %v763, %v2183
    %v2203 = vadd.f32 %v572, %v2132
    %v2204 = vadd.f32 %v574, %v2134
    %v2205 = vadd.f32 %v765, %v2185
    %v2206 = vadd.f32 %v767, %v2187
    %v2207 = vadd.f32 %v578, %v2138
    %v2208 = vadd.f32 %v580, %v2140
    %v2209 = vadd.f32 %v771, %v2191
    %v2210 = vadd.f32 %v773, %v2193
    %v2211 = vadd.f32 %v582, %v2142
    %v2212 = vadd.f32 %v584, %v2144
    %v2213 = vadd.f32 %v775, %v2195
    %v2214 = vadd.f32 %v777, %v2197
    %v2215 = vmul.f32 %v2199, 0.5
    %v2216 = vmul.f32 %v2203, 0.5
    %v2217 = vmul.f32 %v2207, 0.5
    %v2218 = vmul.f32 %v2211, 0.5
    %v2219 = vtanh.pop %v2215
    %v2220 = vtanh.pop %v2216
    %v2221 = vtanh.pop %v2217
    %v2222 = vtanh.pop %v2218
    %v2223 = vmul.f32 %v2219, 0.5
    %v2224 = vmul.f32 %v2220, 0.5
    %v2225 = vmul.f32 %v2221, 0.5
    %v2226 = vmul.f32 %v2222, 0.5
    %v2227 = vadd.f32 %v2223, 0.5
    %v2228 = vadd.f32 %v2224, 0.5
    %v2229 = vadd.f32 %v2225, 0.5
    %v2230 = vadd.f32 %v2226, 0.5
    %v2231 = vmul.f32 %v2200, 0.5
    %v2232 = vmul.f32 %v2204, 0.5
    %v2233 = vmul.f32 %v2208, 0.5
    %v2234 = vmul.f32 %v2212, 0.5
    %v2235 = vtanh.pop %v2231
    %v2236 = vtanh.pop %v2232
    %v2237 = vtanh.pop %v2233
    %v2238 = vtanh.pop %v2234
    %v2239 = vmul.f32 %v2235, 0.5
    %v2240 = vmul.f32 %v2236, 0.5
    %v2241 = vmul.f32 %v2237, 0.5
    %v2242 = vmul.f32 %v2238, 0.5
    %v2243 = vadd.f32 %v2239, 0.5
    %v2244 = vadd.f32 %v2240, 0.5
    %v2245 = vadd.f32 %v2241, 0.5
    %v2246 = vadd.f32 %v2242, 0.5
    %v2247 = vtanh.pop %v2201
    %v2248 = vtanh.pop %v2205
    %v2249 = vtanh.pop %v2209
    %v2250 = vtanh.pop %v2213
    %v2251 = vmul.f32 %v2202, 0.5
    %v2252 = vmul.f32 %v2206, 0.5
    %v2253 = vmul.f32 %v2210, 0.5
    %v2254 = vmul.f32 %v2214, 0.5
    %v2255 = vtanh.pop %v2251
    %v2256 = vtanh.pop %v2252
    %v2257 = vtanh.pop %v2253
    %v2258 = vtanh.pop %v2254
    %v2259 = vmul.f32 %v2255, 0.5
    %v2260 = vmul.f32 %v2256, 0.5
    %v2261 = vmul.f32 %v2257, 0.5
    %v2262 = vmul.f32 %v2258, 0.5
    %v2263 = vadd.f32 %v2259, 0.5
    %v2264 = vadd.f32 %v2260, 0.5
    %v2265 = vadd.f32 %v2261, 0.5
    %v2266 = vadd.f32 %v2262, 0.5
    %v2267 = vmul.f32 %v2243, %v2002
    %v2268 = vmul.f32 %v2244, %v2003
    %v2269 = vmul.f32 %v2245, %v2004
    %v2270 = vmul.f32 %v2246, %v2005
    %v2271 = vmul.f32 %v2227, %v2247
    %v2272 = vmul.f32 %v2228, %v2248
    %v2273 = vmul.f32 %v2229, %v2249
    %v2274 = vmul.f32 %v2230, %v2250
    %v2275 = vadd.f32 %v2267, %v2271
    %v2276 = vadd.f32 %v2268, %v2272
    %v2277 = vadd.f32 %v2269, %v2273
    %v2278 = vadd.f32 %v2270, %v2274
    %v2279 = vtanh.pop %v2275
    %v2280 = vtanh.pop %v2276
    %v2281 = vtanh.pop %v2277
    %v2282 = vtanh.pop %v2278
    %v2283 = vmul.f32 %v2263, %v2279
    %v2284 = vmul.f32 %v2264, %v2280
    %v2285 = vmul.f32 %v2265, %v2281
    %v2286 = vmul.f32 %v2266, %v2282
    %2291 = vrot.lane.b32.xlu0 %v2283, 96
    %v2292 = vpop.permute.xlu0 %2291
    %2293 = vrot.lane.b32.xlu0 %v2284, 96
    %v2294 = vpop.permute.xlu0 %2293
    %2295 = vrot.lane.b32.xlu0 %v2285, 96
    %v2296 = vpop.permute.xlu0 %2295
    %2297 = vrot.lane.b32.xlu0 %v2286, 96
    %v2298 = vpop.permute.xlu0 %2297
    %v2303 = vadd.f32 %v2283, %v2292
    %v2304 = vadd.f32 %v2284, %v2294
    %v2305 = vadd.f32 %v2285, %v2296
    %v2306 = vadd.f32 %v2286, %v2298
    %2307 = vrot.lane.b32.xlu0 %v2283, 64
    %v2308 = vpop.permute.xlu0 %2307
    %2309 = vrot.lane.b32.xlu0 %v2284, 64
    %v2310 = vpop.permute.xlu0 %2309
    %2311 = vrot.lane.b32.xlu0 %v2285, 64
    %v2312 = vpop.permute.xlu0 %2311
    %2313 = vrot.lane.b32.xlu0 %v2286, 64
    %v2314 = vpop.permute.xlu0 %2313
    %v2319 = vadd.f32 %v2303, %v2308
    %v2320 = vadd.f32 %v2304, %v2310
    %v2321 = vadd.f32 %v2305, %v2312
    %v2322 = vadd.f32 %v2306, %v2314
    %2323 = vrot.lane.b32.xlu0 %v2283, 32
    %v2324 = vpop.permute.xlu0 %2323
    %2325 = vrot.lane.b32.xlu0 %v2284, 32
    %v2326 = vpop.permute.xlu0 %2325
    %2327 = vrot.lane.b32.xlu0 %v2285, 32
    %v2328 = vpop.permute.xlu0 %2327
    %2329 = vrot.lane.b32.xlu0 %v2286, 32
    %v2330 = vpop.permute.xlu0 %2329
    %v2335 = vadd.f32 %v2319, %v2324
    %v2336 = vadd.f32 %v2320, %v2326
    %v2337 = vadd.f32 %v2321, %v2328
    %v2338 = vadd.f32 %v2322, %v2330
    %s2339 = sadd.s32 %s140, 4
    %s2340 = scvt.s32.f32 %s2339
    %s2341 = smul.f32 %s2340, 0.032258064
    %v2342 = vstv %s2341
    %v2343 = vmul.f32 %v2342, %v95
    %v2345 = vlaneseq
    %v2346 = vshrl.u32 %v2345, 7
    %v2347 = vsub.s32 0, %v2346
    %v2348 = vrot.slane %v2343, %v2347
    %v2350 = vadd.f32 %v2335, %v2348
    %v2351 = vadd.f32 %v2336, %v2348
    %v2352 = vadd.f32 %v2337, %v2348
    %v2353 = vadd.f32 %v2338, %v2348
    %v2354 = vadd.f32 %v2350, %v122
    %v2355 = vadd.f32 %v2351, %v123
    %v2356 = vadd.f32 %v2352, %v124
    %v2357 = vadd.f32 %v2353, %v125
    %s2358 = smul.u32 %s2339, 32
    %s2359 = scalar_lea.vmem [#allocation2], %s2358
    %2360 = vst.msk [vmem:[%s2359] sm:$0xff] %vm1267, %v2354
    %2361 = vst.msk [vmem:[%s2359 + $0x8] sm:$0xff] %vm1267, %v2355
    %2362 = vst.msk [vmem:[%s2359 + $0x10] sm:$0xff] %vm1267, %v2356
    %2363 = vst.msk [vmem:[%s2359 + $0x18] sm:$0xff] %vm1267, %v2357
    %v2364 = vpack.c.bf16 %v2284, %v2283
    %v2365 = vpack.c.bf16 %v2286, %v2285
    %2366 = vmatprep.subr.bf16.mxu0 %v938
    %2367 = vmatpush1.bf16.msra.mxu0 %v937
    %2368 = vmatprep.subr.bf16.mxu0 %v942
    %2369 = vmatpush1.bf16.msra.mxu0 %v941
    %2370 = vmatprep.subr.bf16.mxu0 %v946
    %2371 = vmatpush1.bf16.msra.mxu0 %v945
    %2372 = vmatprep.subr.bf16.mxu0 %v950
    %2373 = vmatpush1.bf16.msra.mxu0 %v949
    %2374 = vmatprep.subr.bf16.mxu0 %v954
    %2375 = vmatpush1.bf16.msra.mxu0 %v953
    %2376 = vmatprep.subr.bf16.mxu0 %v958
    %2377 = vmatpush1.bf16.msra.mxu0 %v957
    %2378 = vmatprep.subr.bf16.mxu0 %v962
    %2379 = vmatpush1.bf16.msra.mxu0 %v961
    %2380 = vmatprep.subr.bf16.mxu0 %v966
    %2381 = vmatpush1.bf16.msra.mxu0 %v965
    %2382 = vmatprep.subr.bf16.mxu0 0
    %2383 = vmatpush1.bf16.msra.mxu0 0
    %2384 = vmatprep.subr.bf16.mxu0 0
    %2385 = vmatpush1.bf16.msra.mxu0 0
    %2386 = vmatprep.subr.bf16.mxu0 0
    %2387 = vmatpush1.bf16.msra.mxu0 0
    %2388 = vmatprep.subr.bf16.mxu0 0
    %2389 = vmatpush1.bf16.msra.mxu0 0
    %2390 = vmatprep.subr.bf16.mxu0 0
    %2391 = vmatpush1.bf16.msra.mxu0 0
    %2392 = vmatprep.subr.bf16.mxu0 0
    %2393 = vmatpush1.bf16.msra.mxu0 0
    %2394 = vmatprep.subr.bf16.mxu0 0
    %2395 = vmatpush1.bf16.msra.mxu0 0
    %2396 = vmatprep.subr.bf16.mxu0 0
    %2397 = vmatpush1.bf16.msra.mxu0 0
    %2398 = vmatprep.mubr.bf16.mxu0 0
    %2399 = vmatmul.mubr.bf16.gmra.mrb[0].mxu0 %v2364
    %v2400 = vpop.f32.mrb[0].mxu0
    %v2401 = vadd.f32 0.0, %v2400
    %v2402 = vpop.f32.mrb[0].mxu0
    %v2403 = vadd.f32 0.0, %v2402
    %v2404 = vpop.f32.mrb[0].mxu0
    %v2405 = vadd.f32 0.0, %v2404
    %v2406 = vpop.f32.mrb[0].mxu0
    %v2407 = vadd.f32 0.0, %v2406
    %2408 = vmatprep.mubr.bf16.mxu0 0
    %2409 = vmatmul.mubr.bf16.gmra.mrb[0].mxu0 %v2365
    %v2410 = vpop.f32.mrb[0].mxu0
    %v2411 = vadd.f32 0.0, %v2410
    %v2412 = vpop.f32.mrb[0].mxu0
    %v2413 = vadd.f32 0.0, %v2412
    %v2414 = vpop.f32.mrb[0].mxu0
    %v2415 = vadd.f32 0.0, %v2414
    %v2416 = vpop.f32.mrb[0].mxu0
    %v2417 = vadd.f32 0.0, %v2416
    %2418 = vdwg.mxu0
    %2419 = vmatprep.subr.bf16.mxu0 %v940
    %2420 = vmatpush1.bf16.msra.mxu0 %v939
    %2421 = vmatprep.subr.bf16.mxu0 %v944
    %2422 = vmatpush1.bf16.msra.mxu0 %v943
    %2423 = vmatprep.subr.bf16.mxu0 %v948
    %2424 = vmatpush1.bf16.msra.mxu0 %v947
    %2425 = vmatprep.subr.bf16.mxu0 %v952
    %2426 = vmatpush1.bf16.msra.mxu0 %v951
    %2427 = vmatprep.subr.bf16.mxu0 %v956
    %2428 = vmatpush1.bf16.msra.mxu0 %v955
    %2429 = vmatprep.subr.bf16.mxu0 %v960
    %2430 = vmatpush1.bf16.msra.mxu0 %v959
    %2431 = vmatprep.subr.bf16.mxu0 %v964
    %2432 = vmatpush1.bf16.msra.mxu0 %v963
    %2433 = vmatprep.subr.bf16.mxu0 %v968
    %2434 = vmatpush1.bf16.msra.mxu0 %v967
    %2435 = vmatprep.subr.bf16.mxu0 0
    %2436 = vmatpush1.bf16.msra.mxu0 0
    %2437 = vmatprep.subr.bf16.mxu0 0
    %2438 = vmatpush1.bf16.msra.mxu0 0
    %2439 = vmatprep.subr.bf16.mxu0 0
    %2440 = vmatpush1.bf16.msra.mxu0 0
    %2441 = vmatprep.subr.bf16.mxu0 0
    %2442 = vmatpush1.bf16.msra.mxu0 0
    %2443 = vmatprep.subr.bf16.mxu0 0
    %2444 = vmatpush1.bf16.msra.mxu0 0
    %2445 = vmatprep.subr.bf16.mxu0 0
    %2446 = vmatpush1.bf16.msra.mxu0 0
    %2447 = vmatprep.subr.bf16.mxu0 0
    %2448 = vmatpush1.bf16.msra.mxu0 0
    %2449 = vmatprep.subr.bf16.mxu0 0
    %2450 = vmatpush1.bf16.msra.mxu0 0
    %2451 = vmatprep.mubr.bf16.mxu0 0
    %2452 = vmatmul.mubr.bf16.gmra.mrb[0].mxu0 %v2364
    %v2453 = vpop.f32.mrb[0].mxu0
    %v2454 = vadd.f32 0.0, %v2453
    %v2455 = vpop.f32.mrb[0].mxu0
    %v2456 = vadd.f32 0.0, %v2455
    %v2457 = vpop.f32.mrb[0].mxu0
    %v2458 = vadd.f32 0.0, %v2457
    %v2459 = vpop.f32.mrb[0].mxu0
    %v2460 = vadd.f32 0.0, %v2459
    %2461 = vmatprep.mubr.bf16.mxu0 0
    %2462 = vmatmul.mubr.bf16.gmra.mrb[0].mxu0 %v2365
    %v2463 = vpop.f32.mrb[0].mxu0
    %v2464 = vadd.f32 0.0, %v2463
    %v2465 = vpop.f32.mrb[0].mxu0
    %v2466 = vadd.f32 0.0, %v2465
    %v2467 = vpop.f32.mrb[0].mxu0
    %v2468 = vadd.f32 0.0, %v2467
    %v2469 = vpop.f32.mrb[0].mxu0
    %v2470 = vadd.f32 0.0, %v2469
    %2471 = vdwg.mxu0
    %v2472 = vadd.f32 %v588, %v2401
    %v2473 = vadd.f32 %v590, %v2403
    %v2474 = vadd.f32 %v781, %v2454
    %v2475 = vadd.f32 %v783, %v2456
    %v2476 = vadd.f32 %v592, %v2405
    %v2477 = vadd.f32 %v594, %v2407
    %v2478 = vadd.f32 %v785, %v2458
    %v2479 = vadd.f32 %v787, %v2460
    %v2480 = vadd.f32 %v598, %v2411
    %v2481 = vadd.f32 %v600, %v2413
    %v2482 = vadd.f32 %v791, %v2464
    %v2483 = vadd.f32 %v793, %v2466
    %v2484 = vadd.f32 %v602, %v2415
    %v2485 = vadd.f32 %v604, %v2417
    %v2486 = vadd.f32 %v795, %v2468
    %v2487 = vadd.f32 %v797, %v2470
    %v2488 = vmul.f32 %v2472, 0.5
    %v2489 = vmul.f32 %v2476, 0.5
    %v2490 = vmul.f32 %v2480, 0.5
    %v2491 = vmul.f32 %v2484, 0.5
    %v2492 = vtanh.pop %v2488
    %v2493 = vtanh.pop %v2489
    %v2494 = vtanh.pop %v2490
    %v2495 = vtanh.pop %v2491
    %v2496 = vmul.f32 %v2492, 0.5
    %v2497 = vmul.f32 %v2493, 0.5
    %v2498 = vmul.f32 %v2494, 0.5
    %v2499 = vmul.f32 %v2495, 0.5
    %v2500 = vadd.f32 %v2496, 0.5
    %v2501 = vadd.f32 %v2497, 0.5
    %v2502 = vadd.f32 %v2498, 0.5
    %v2503 = vadd.f32 %v2499, 0.5
    %v2504 = vmul.f32 %v2473, 0.5
    %v2505 = vmul.f32 %v2477, 0.5
    %v2506 = vmul.f32 %v2481, 0.5
    %v2507 = vmul.f32 %v2485, 0.5
    %v2508 = vtanh.pop %v2504
    %v2509 = vtanh.pop %v2505
    %v2510 = vtanh.pop %v2506
    %v2511 = vtanh.pop %v2507
    %v2512 = vmul.f32 %v2508, 0.5
    %v2513 = vmul.f32 %v2509, 0.5
    %v2514 = vmul.f32 %v2510, 0.5
    %v2515 = vmul.f32 %v2511, 0.5
    %v2516 = vadd.f32 %v2512, 0.5
    %v2517 = vadd.f32 %v2513, 0.5
    %v2518 = vadd.f32 %v2514, 0.5
    %v2519 = vadd.f32 %v2515, 0.5
    %v2520 = vtanh.pop %v2474
    %v2521 = vtanh.pop %v2478
    %v2522 = vtanh.pop %v2482
    %v2523 = vtanh.pop %v2486
    %v2524 = vmul.f32 %v2475, 0.5
    %v2525 = vmul.f32 %v2479, 0.5
    %v2526 = vmul.f32 %v2483, 0.5
    %v2527 = vmul.f32 %v2487, 0.5
    %v2528 = vtanh.pop %v2524
    %v2529 = vtanh.pop %v2525
    %v2530 = vtanh.pop %v2526
    %v2531 = vtanh.pop %v2527
    %v2532 = vmul.f32 %v2528, 0.5
    %v2533 = vmul.f32 %v2529, 0.5
    %v2534 = vmul.f32 %v2530, 0.5
    %v2535 = vmul.f32 %v2531, 0.5
    %v2536 = vadd.f32 %v2532, 0.5
    %v2537 = vadd.f32 %v2533, 0.5
    %v2538 = vadd.f32 %v2534, 0.5
    %v2539 = vadd.f32 %v2535, 0.5
    %v2540 = vmul.f32 %v2516, %v2275
    %v2541 = vmul.f32 %v2517, %v2276
    %v2542 = vmul.f32 %v2518, %v2277
    %v2543 = vmul.f32 %v2519, %v2278
    %v2544 = vmul.f32 %v2500, %v2520
    %v2545 = vmul.f32 %v2501, %v2521
    %v2546 = vmul.f32 %v2502, %v2522
    %v2547 = vmul.f32 %v2503, %v2523
    %v2548 = vadd.f32 %v2540, %v2544
    %v2549 = vadd.f32 %v2541, %v2545
    %v2550 = vadd.f32 %v2542, %v2546
    %v2551 = vadd.f32 %v2543, %v2547
    %v2552 = vtanh.pop %v2548
    %v2553 = vtanh.pop %v2549
    %v2554 = vtanh.pop %v2550
    %v2555 = vtanh.pop %v2551
    %v2556 = vmul.f32 %v2536, %v2552
    %v2557 = vmul.f32 %v2537, %v2553
    %v2558 = vmul.f32 %v2538, %v2554
    %v2559 = vmul.f32 %v2539, %v2555
    %2564 = vrot.lane.b32.xlu0 %v2556, 96
    %v2565 = vpop.permute.xlu0 %2564
    %2566 = vrot.lane.b32.xlu0 %v2557, 96
    %v2567 = vpop.permute.xlu0 %2566
    %2568 = vrot.lane.b32.xlu0 %v2558, 96
    %v2569 = vpop.permute.xlu0 %2568
    %2570 = vrot.lane.b32.xlu0 %v2559, 96
    %v2571 = vpop.permute.xlu0 %2570
    %v2576 = vadd.f32 %v2556, %v2565
    %v2577 = vadd.f32 %v2557, %v2567
    %v2578 = vadd.f32 %v2558, %v2569
    %v2579 = vadd.f32 %v2559, %v2571
    %2580 = vrot.lane.b32.xlu0 %v2556, 64
    %v2581 = vpop.permute.xlu0 %2580
    %2582 = vrot.lane.b32.xlu0 %v2557, 64
    %v2583 = vpop.permute.xlu0 %2582
    %2584 = vrot.lane.b32.xlu0 %v2558, 64
    %v2585 = vpop.permute.xlu0 %2584
    %2586 = vrot.lane.b32.xlu0 %v2559, 64
    %v2587 = vpop.permute.xlu0 %2586
    %v2592 = vadd.f32 %v2576, %v2581
    %v2593 = vadd.f32 %v2577, %v2583
    %v2594 = vadd.f32 %v2578, %v2585
    %v2595 = vadd.f32 %v2579, %v2587
    %2596 = vrot.lane.b32.xlu0 %v2556, 32
    %v2597 = vpop.permute.xlu0 %2596
    %2598 = vrot.lane.b32.xlu0 %v2557, 32
    %v2599 = vpop.permute.xlu0 %2598
    %2600 = vrot.lane.b32.xlu0 %v2558, 32
    %v2601 = vpop.permute.xlu0 %2600
    %2602 = vrot.lane.b32.xlu0 %v2559, 32
    %v2603 = vpop.permute.xlu0 %2602
    %v2608 = vadd.f32 %v2592, %v2597
    %v2609 = vadd.f32 %v2593, %v2599
    %v2610 = vadd.f32 %v2594, %v2601
    %v2611 = vadd.f32 %v2595, %v2603
    %s2612 = sadd.s32 %s140, 5
    %s2613 = scvt.s32.f32 %s2612
    %s2614 = smul.f32 %s2613, 0.032258064
    %v2615 = vstv %s2614
    %v2616 = vmul.f32 %v2615, %v95
    %v2618 = vlaneseq
    %v2619 = vshrl.u32 %v2618, 7
    %v2620 = vsub.s32 0, %v2619
    %v2621 = vrot.slane %v2616, %v2620
    %v2623 = vadd.f32 %v2608, %v2621
    %v2624 = vadd.f32 %v2609, %v2621
    %v2625 = vadd.f32 %v2610, %v2621
    %v2626 = vadd.f32 %v2611, %v2621
    %v2627 = vadd.f32 %v2623, %v122
    %v2628 = vadd.f32 %v2624, %v123
    %v2629 = vadd.f32 %v2625, %v124
    %v2630 = vadd.f32 %v2626, %v125
    %s2631 = smul.u32 %s2612, 32
    %s2632 = scalar_lea.vmem [#allocation2], %s2631
    %2633 = vst.msk [vmem:[%s2632] sm:$0xff] %vm1267, %v2627
    %2634 = vst.msk [vmem:[%s2632 + $0x8] sm:$0xff] %vm1267, %v2628
    %2635 = vst.msk [vmem:[%s2632 + $0x10] sm:$0xff] %vm1267, %v2629
    %2636 = vst.msk [vmem:[%s2632 + $0x18] sm:$0xff] %vm1267, %v2630
    %v2637 = vpack.c.bf16 %v2557, %v2556
    %v2638 = vpack.c.bf16 %v2559, %v2558
    %2639 = vmatprep.subr.bf16.mxu0 %v938
    %2640 = vmatpush1.bf16.msra.mxu0 %v937
    %2641 = vmatprep.subr.bf16.mxu0 %v942
    %2642 = vmatpush1.bf16.msra.mxu0 %v941
    %2643 = vmatprep.subr.bf16.mxu0 %v946
    %2644 = vmatpush1.bf16.msra.mxu0 %v945
    %2645 = vmatprep.subr.bf16.mxu0 %v950
    %2646 = vmatpush1.bf16.msra.mxu0 %v949
    %2647 = vmatprep.subr.bf16.mxu0 %v954
    %2648 = vmatpush1.bf16.msra.mxu0 %v953
    %2649 = vmatprep.subr.bf16.mxu0 %v958
    %2650 = vmatpush1.bf16.msra.mxu0 %v957
    %2651 = vmatprep.subr.bf16.mxu0 %v962
    %2652 = vmatpush1.bf16.msra.mxu0 %v961
    %2653 = vmatprep.subr.bf16.mxu0 %v966
    %2654 = vmatpush1.bf16.msra.mxu0 %v965
    %2655 = vmatprep.subr.bf16.mxu0 0
    %2656 = vmatpush1.bf16.msra.mxu0 0
    %2657 = vmatprep.subr.bf16.mxu0 0
    %2658 = vmatpush1.bf16.msra.mxu0 0
    %2659 = vmatprep.subr.bf16.mxu0 0
    %2660 = vmatpush1.bf16.msra.mxu0 0
    %2661 = vmatprep.subr.bf16.mxu0 0
    %2662 = vmatpush1.bf16.msra.mxu0 0
    %2663 = vmatprep.subr.bf16.mxu0 0
    %2664 = vmatpush1.bf16.msra.mxu0 0
    %2665 = vmatprep.subr.bf16.mxu0 0
    %2666 = vmatpush1.bf16.msra.mxu0 0
    %2667 = vmatprep.subr.bf16.mxu0 0
    %2668 = vmatpush1.bf16.msra.mxu0 0
    %2669 = vmatprep.subr.bf16.mxu0 0
    %2670 = vmatpush1.bf16.msra.mxu0 0
    %2671 = vmatprep.mubr.bf16.mxu0 0
    %2672 = vmatmul.mubr.bf16.gmra.mrb[0].mxu0 %v2637
    %v2673 = vpop.f32.mrb[0].mxu0
    %v2674 = vadd.f32 0.0, %v2673
    %v2675 = vpop.f32.mrb[0].mxu0
    %v2676 = vadd.f32 0.0, %v2675
    %v2677 = vpop.f32.mrb[0].mxu0
    %v2678 = vadd.f32 0.0, %v2677
    %v2679 = vpop.f32.mrb[0].mxu0
    %v2680 = vadd.f32 0.0, %v2679
    %2681 = vmatprep.mubr.bf16.mxu0 0
    %2682 = vmatmul.mubr.bf16.gmra.mrb[0].mxu0 %v2638
    %v2683 = vpop.f32.mrb[0].mxu0
    %v2684 = vadd.f32 0.0, %v2683
    %v2685 = vpop.f32.mrb[0].mxu0
    %v2686 = vadd.f32 0.0, %v2685
    %v2687 = vpop.f32.mrb[0].mxu0
    %v2688 = vadd.f32 0.0, %v2687
    %v2689 = vpop.f32.mrb[0].mxu0
    %v2690 = vadd.f32 0.0, %v2689
    %2691 = vdwg.mxu0
    %2692 = vmatprep.subr.bf16.mxu0 %v940
    %2693 = vmatpush1.bf16.msra.mxu0 %v939
    %2694 = vmatprep.subr.bf16.mxu0 %v944
    %2695 = vmatpush1.bf16.msra.mxu0 %v943
    %2696 = vmatprep.subr.bf16.mxu0 %v948
    %2697 = vmatpush1.bf16.msra.mxu0 %v947
    %2698 = vmatprep.subr.bf16.mxu0 %v952
    %2699 = vmatpush1.bf16.msra.mxu0 %v951
    %2700 = vmatprep.subr.bf16.mxu0 %v956
    %2701 = vmatpush1.bf16.msra.mxu0 %v955
    %2702 = vmatprep.subr.bf16.mxu0 %v960
    %2703 = vmatpush1.bf16.msra.mxu0 %v959
    %2704 = vmatprep.subr.bf16.mxu0 %v964
    %2705 = vmatpush1.bf16.msra.mxu0 %v963
    %2706 = vmatprep.subr.bf16.mxu0 %v968
    %2707 = vmatpush1.bf16.msra.mxu0 %v967
    %2708 = vmatprep.subr.bf16.mxu0 0
    %2709 = vmatpush1.bf16.msra.mxu0 0
    %2710 = vmatprep.subr.bf16.mxu0 0
    %2711 = vmatpush1.bf16.msra.mxu0 0
    %2712 = vmatprep.subr.bf16.mxu0 0
    %2713 = vmatpush1.bf16.msra.mxu0 0
    %2714 = vmatprep.subr.bf16.mxu0 0
    %2715 = vmatpush1.bf16.msra.mxu0 0
    %2716 = vmatprep.subr.bf16.mxu0 0
    %2717 = vmatpush1.bf16.msra.mxu0 0
    %2718 = vmatprep.subr.bf16.mxu0 0
    %2719 = vmatpush1.bf16.msra.mxu0 0
    %2720 = vmatprep.subr.bf16.mxu0 0
    %2721 = vmatpush1.bf16.msra.mxu0 0
    %2722 = vmatprep.subr.bf16.mxu0 0
    %2723 = vmatpush1.bf16.msra.mxu0 0
    %2724 = vmatprep.mubr.bf16.mxu0 0
    %2725 = vmatmul.mubr.bf16.gmra.mrb[0].mxu0 %v2637
    %v2726 = vpop.f32.mrb[0].mxu0
    %v2727 = vadd.f32 0.0, %v2726
    %v2728 = vpop.f32.mrb[0].mxu0
    %v2729 = vadd.f32 0.0, %v2728
    %v2730 = vpop.f32.mrb[0].mxu0
    %v2731 = vadd.f32 0.0, %v2730
    %v2732 = vpop.f32.mrb[0].mxu0
    %v2733 = vadd.f32 0.0, %v2732
    %2734 = vmatprep.mubr.bf16.mxu0 0
    %2735 = vmatmul.mubr.bf16.gmra.mrb[0].mxu0 %v2638
    %v2736 = vpop.f32.mrb[0].mxu0
    %v2737 = vadd.f32 0.0, %v2736
    %v2738 = vpop.f32.mrb[0].mxu0
    %v2739 = vadd.f32 0.0, %v2738
    %v2740 = vpop.f32.mrb[0].mxu0
    %v2741 = vadd.f32 0.0, %v2740
    %v2742 = vpop.f32.mrb[0].mxu0
    %v2743 = vadd.f32 0.0, %v2742
    %2744 = vdwg.mxu0
    %v2745 = vadd.f32 %v608, %v2674
    %v2746 = vadd.f32 %v610, %v2676
    %v2747 = vadd.f32 %v801, %v2727
    %v2748 = vadd.f32 %v803, %v2729
    %v2749 = vadd.f32 %v612, %v2678
    %v2750 = vadd.f32 %v614, %v2680
    %v2751 = vadd.f32 %v805, %v2731
    %v2752 = vadd.f32 %v807, %v2733
    %v2753 = vadd.f32 %v618, %v2684
    %v2754 = vadd.f32 %v620, %v2686
    %v2755 = vadd.f32 %v811, %v2737
    %v2756 = vadd.f32 %v813, %v2739
    %v2757 = vadd.f32 %v622, %v2688
    %v2758 = vadd.f32 %v624, %v2690
    %v2759 = vadd.f32 %v815, %v2741
    %v2760 = vadd.f32 %v817, %v2743
    %v2761 = vmul.f32 %v2745, 0.5
    %v2762 = vmul.f32 %v2749, 0.5
    %v2763 = vmul.f32 %v2753, 0.5
    %v2764 = vmul.f32 %v2757, 0.5
    %v2765 = vtanh.pop %v2761
    %v2766 = vtanh.pop %v2762
    %v2767 = vtanh.pop %v2763
    %v2768 = vtanh.pop %v2764
    %v2769 = vmul.f32 %v2765, 0.5
    %v2770 = vmul.f32 %v2766, 0.5
    %v2771 = vmul.f32 %v2767, 0.5
    %v2772 = vmul.f32 %v2768, 0.5
    %v2773 = vadd.f32 %v2769, 0.5
    %v2774 = vadd.f32 %v2770, 0.5
    %v2775 = vadd.f32 %v2771, 0.5
    %v2776 = vadd.f32 %v2772, 0.5
    %v2777 = vmul.f32 %v2746, 0.5
    %v2778 = vmul.f32 %v2750, 0.5
    %v2779 = vmul.f32 %v2754, 0.5
    %v2780 = vmul.f32 %v2758, 0.5
    %v2781 = vtanh.pop %v2777
    %v2782 = vtanh.pop %v2778
    %v2783 = vtanh.pop %v2779
    %v2784 = vtanh.pop %v2780
    %v2785 = vmul.f32 %v2781, 0.5
    %v2786 = vmul.f32 %v2782, 0.5
    %v2787 = vmul.f32 %v2783, 0.5
    %v2788 = vmul.f32 %v2784, 0.5
    %v2789 = vadd.f32 %v2785, 0.5
    %v2790 = vadd.f32 %v2786, 0.5
    %v2791 = vadd.f32 %v2787, 0.5
    %v2792 = vadd.f32 %v2788, 0.5
    %v2793 = vtanh.pop %v2747
    %v2794 = vtanh.pop %v2751
    %v2795 = vtanh.pop %v2755
    %v2796 = vtanh.pop %v2759
    %v2797 = vmul.f32 %v2748, 0.5
    %v2798 = vmul.f32 %v2752, 0.5
    %v2799 = vmul.f32 %v2756, 0.5
    %v2800 = vmul.f32 %v2760, 0.5
    %v2801 = vtanh.pop %v2797
    %v2802 = vtanh.pop %v2798
    %v2803 = vtanh.pop %v2799
    %v2804 = vtanh.pop %v2800
    %v2805 = vmul.f32 %v2801, 0.5
    %v2806 = vmul.f32 %v2802, 0.5
    %v2807 = vmul.f32 %v2803, 0.5
    %v2808 = vmul.f32 %v2804, 0.5
    %v2809 = vadd.f32 %v2805, 0.5
    %v2810 = vadd.f32 %v2806, 0.5
    %v2811 = vadd.f32 %v2807, 0.5
    %v2812 = vadd.f32 %v2808, 0.5
    %v2813 = vmul.f32 %v2789, %v2548
    %v2814 = vmul.f32 %v2790, %v2549
    %v2815 = vmul.f32 %v2791, %v2550
    %v2816 = vmul.f32 %v2792, %v2551
    %v2817 = vmul.f32 %v2773, %v2793
    %v2818 = vmul.f32 %v2774, %v2794
    %v2819 = vmul.f32 %v2775, %v2795
    %v2820 = vmul.f32 %v2776, %v2796
    %v2821 = vadd.f32 %v2813, %v2817
    %v2822 = vadd.f32 %v2814, %v2818
    %v2823 = vadd.f32 %v2815, %v2819
    %v2824 = vadd.f32 %v2816, %v2820
    %v2825 = vtanh.pop %v2821
    %v2826 = vtanh.pop %v2822
    %v2827 = vtanh.pop %v2823
    %v2828 = vtanh.pop %v2824
    %v2829 = vmul.f32 %v2809, %v2825
    %v2830 = vmul.f32 %v2810, %v2826
    %v2831 = vmul.f32 %v2811, %v2827
    %v2832 = vmul.f32 %v2812, %v2828
    %2837 = vrot.lane.b32.xlu0 %v2829, 96
    %v2838 = vpop.permute.xlu0 %2837
    %2839 = vrot.lane.b32.xlu0 %v2830, 96
    %v2840 = vpop.permute.xlu0 %2839
    %2841 = vrot.lane.b32.xlu0 %v2831, 96
    %v2842 = vpop.permute.xlu0 %2841
    %2843 = vrot.lane.b32.xlu0 %v2832, 96
    %v2844 = vpop.permute.xlu0 %2843
    %v2849 = vadd.f32 %v2829, %v2838
    %v2850 = vadd.f32 %v2830, %v2840
    %v2851 = vadd.f32 %v2831, %v2842
    %v2852 = vadd.f32 %v2832, %v2844
    %2853 = vrot.lane.b32.xlu0 %v2829, 64
    %v2854 = vpop.permute.xlu0 %2853
    %2855 = vrot.lane.b32.xlu0 %v2830, 64
    %v2856 = vpop.permute.xlu0 %2855
    %2857 = vrot.lane.b32.xlu0 %v2831, 64
    %v2858 = vpop.permute.xlu0 %2857
    %2859 = vrot.lane.b32.xlu0 %v2832, 64
    %v2860 = vpop.permute.xlu0 %2859
    %v2865 = vadd.f32 %v2849, %v2854
    %v2866 = vadd.f32 %v2850, %v2856
    %v2867 = vadd.f32 %v2851, %v2858
    %v2868 = vadd.f32 %v2852, %v2860
    %2869 = vrot.lane.b32.xlu0 %v2829, 32
    %v2870 = vpop.permute.xlu0 %2869
    %2871 = vrot.lane.b32.xlu0 %v2830, 32
    %v2872 = vpop.permute.xlu0 %2871
    %2873 = vrot.lane.b32.xlu0 %v2831, 32
    %v2874 = vpop.permute.xlu0 %2873
    %2875 = vrot.lane.b32.xlu0 %v2832, 32
    %v2876 = vpop.permute.xlu0 %2875
    %v2881 = vadd.f32 %v2865, %v2870
    %v2882 = vadd.f32 %v2866, %v2872
    %v2883 = vadd.f32 %v2867, %v2874
    %v2884 = vadd.f32 %v2868, %v2876
    %s2885 = sadd.s32 %s140, 6
    %s2886 = scvt.s32.f32 %s2885
    %s2887 = smul.f32 %s2886, 0.032258064
    %v2888 = vstv %s2887
    %v2889 = vmul.f32 %v2888, %v95
    %v2891 = vlaneseq
    %v2892 = vshrl.u32 %v2891, 7
    %v2893 = vsub.s32 0, %v2892
    %v2894 = vrot.slane %v2889, %v2893
    %v2896 = vadd.f32 %v2881, %v2894
    %v2897 = vadd.f32 %v2882, %v2894
    %v2898 = vadd.f32 %v2883, %v2894
    %v2899 = vadd.f32 %v2884, %v2894
    %v2900 = vadd.f32 %v2896, %v122
    %v2901 = vadd.f32 %v2897, %v123
    %v2902 = vadd.f32 %v2898, %v124
    %v2903 = vadd.f32 %v2899, %v125
    %s2904 = smul.u32 %s2885, 32
    %s2905 = scalar_lea.vmem [#allocation2], %s2904
    %2906 = vst.msk [vmem:[%s2905] sm:$0xff] %vm1267, %v2900
    %2907 = vst.msk [vmem:[%s2905 + $0x8] sm:$0xff] %vm1267, %v2901
    %2908 = vst.msk [vmem:[%s2905 + $0x10] sm:$0xff] %vm1267, %v2902
    %2909 = vst.msk [vmem:[%s2905 + $0x18] sm:$0xff] %vm1267, %v2903
    %v2910 = vpack.c.bf16 %v2830, %v2829
    %v2911 = vpack.c.bf16 %v2832, %v2831
    %2912 = vmatprep.subr.bf16.mxu0 %v938
    %2913 = vmatpush1.bf16.msra.mxu0 %v937
    %2914 = vmatprep.subr.bf16.mxu0 %v942
    %2915 = vmatpush1.bf16.msra.mxu0 %v941
    %2916 = vmatprep.subr.bf16.mxu0 %v946
    %2917 = vmatpush1.bf16.msra.mxu0 %v945
    %2918 = vmatprep.subr.bf16.mxu0 %v950
    %2919 = vmatpush1.bf16.msra.mxu0 %v949
    %2920 = vmatprep.subr.bf16.mxu0 %v954
    %2921 = vmatpush1.bf16.msra.mxu0 %v953
    %2922 = vmatprep.subr.bf16.mxu0 %v958
    %2923 = vmatpush1.bf16.msra.mxu0 %v957
    %2924 = vmatprep.subr.bf16.mxu0 %v962
    %2925 = vmatpush1.bf16.msra.mxu0 %v961
    %2926 = vmatprep.subr.bf16.mxu0 %v966
    %2927 = vmatpush1.bf16.msra.mxu0 %v965
    %2928 = vmatprep.subr.bf16.mxu0 0
    %2929 = vmatpush1.bf16.msra.mxu0 0
    %2930 = vmatprep.subr.bf16.mxu0 0
    %2931 = vmatpush1.bf16.msra.mxu0 0
    %2932 = vmatprep.subr.bf16.mxu0 0
    %2933 = vmatpush1.bf16.msra.mxu0 0
    %2934 = vmatprep.subr.bf16.mxu0 0
    %2935 = vmatpush1.bf16.msra.mxu0 0
    %2936 = vmatprep.subr.bf16.mxu0 0
    %2937 = vmatpush1.bf16.msra.mxu0 0
    %2938 = vmatprep.subr.bf16.mxu0 0
    %2939 = vmatpush1.bf16.msra.mxu0 0
    %2940 = vmatprep.subr.bf16.mxu0 0
    %2941 = vmatpush1.bf16.msra.mxu0 0
    %2942 = vmatprep.subr.bf16.mxu0 0
    %2943 = vmatpush1.bf16.msra.mxu0 0
    %2944 = vmatprep.mubr.bf16.mxu0 0
    %2945 = vmatmul.mubr.bf16.gmra.mrb[0].mxu0 %v2910
    %v2946 = vpop.f32.mrb[0].mxu0
    %v2947 = vadd.f32 0.0, %v2946
    %v2948 = vpop.f32.mrb[0].mxu0
    %v2949 = vadd.f32 0.0, %v2948
    %v2950 = vpop.f32.mrb[0].mxu0
    %v2951 = vadd.f32 0.0, %v2950
    %v2952 = vpop.f32.mrb[0].mxu0
    %v2953 = vadd.f32 0.0, %v2952
    %2954 = vmatprep.mubr.bf16.mxu0 0
    %2955 = vmatmul.mubr.bf16.gmra.mrb[0].mxu0 %v2911
    %v2956 = vpop.f32.mrb[0].mxu0
    %v2957 = vadd.f32 0.0, %v2956
    %v2958 = vpop.f32.mrb[0].mxu0
    %v2959 = vadd.f32 0.0, %v2958
    %v2960 = vpop.f32.mrb[0].mxu0
    %v2961 = vadd.f32 0.0, %v2960
    %v2962 = vpop.f32.mrb[0].mxu0
    %v2963 = vadd.f32 0.0, %v2962
    %2964 = vdwg.mxu0
    %2965 = vmatprep.subr.bf16.mxu0 %v940
    %2966 = vmatpush1.bf16.msra.mxu0 %v939
    %2967 = vmatprep.subr.bf16.mxu0 %v944
    %2968 = vmatpush1.bf16.msra.mxu0 %v943
    %2969 = vmatprep.subr.bf16.mxu0 %v948
    %2970 = vmatpush1.bf16.msra.mxu0 %v947
    %2971 = vmatprep.subr.bf16.mxu0 %v952
    %2972 = vmatpush1.bf16.msra.mxu0 %v951
    %2973 = vmatprep.subr.bf16.mxu0 %v956
    %2974 = vmatpush1.bf16.msra.mxu0 %v955
    %2975 = vmatprep.subr.bf16.mxu0 %v960
    %2976 = vmatpush1.bf16.msra.mxu0 %v959
    %2977 = vmatprep.subr.bf16.mxu0 %v964
    %2978 = vmatpush1.bf16.msra.mxu0 %v963
    %2979 = vmatprep.subr.bf16.mxu0 %v968
    %2980 = vmatpush1.bf16.msra.mxu0 %v967
    %2981 = vmatprep.subr.bf16.mxu0 0
    %2982 = vmatpush1.bf16.msra.mxu0 0
    %2983 = vmatprep.subr.bf16.mxu0 0
    %2984 = vmatpush1.bf16.msra.mxu0 0
    %2985 = vmatprep.subr.bf16.mxu0 0
    %2986 = vmatpush1.bf16.msra.mxu0 0
    %2987 = vmatprep.subr.bf16.mxu0 0
    %2988 = vmatpush1.bf16.msra.mxu0 0
    %2989 = vmatprep.subr.bf16.mxu0 0
    %2990 = vmatpush1.bf16.msra.mxu0 0
    %2991 = vmatprep.subr.bf16.mxu0 0
    %2992 = vmatpush1.bf16.msra.mxu0 0
    %2993 = vmatprep.subr.bf16.mxu0 0
    %2994 = vmatpush1.bf16.msra.mxu0 0
    %2995 = vmatprep.subr.bf16.mxu0 0
    %2996 = vmatpush1.bf16.msra.mxu0 0
    %2997 = vmatprep.mubr.bf16.mxu0 0
    %2998 = vmatmul.mubr.bf16.gmra.mrb[0].mxu0 %v2910
    %v2999 = vpop.f32.mrb[0].mxu0
    %v3000 = vadd.f32 0.0, %v2999
    %v3001 = vpop.f32.mrb[0].mxu0
    %v3002 = vadd.f32 0.0, %v3001
    %v3003 = vpop.f32.mrb[0].mxu0
    %v3004 = vadd.f32 0.0, %v3003
    %v3005 = vpop.f32.mrb[0].mxu0
    %v3006 = vadd.f32 0.0, %v3005
    %3007 = vmatprep.mubr.bf16.mxu0 0
    %3008 = vmatmul.mubr.bf16.gmra.mrb[0].mxu0 %v2911
    %v3009 = vpop.f32.mrb[0].mxu0
    %v3010 = vadd.f32 0.0, %v3009
    %v3011 = vpop.f32.mrb[0].mxu0
    %v3012 = vadd.f32 0.0, %v3011
    %v3013 = vpop.f32.mrb[0].mxu0
    %v3014 = vadd.f32 0.0, %v3013
    %v3015 = vpop.f32.mrb[0].mxu0
    %v3016 = vadd.f32 0.0, %v3015
    %3017 = vdwg.mxu0
    %v3018 = vadd.f32 %v628, %v2947
    %v3019 = vadd.f32 %v630, %v2949
    %v3020 = vadd.f32 %v821, %v3000
    %v3021 = vadd.f32 %v823, %v3002
    %v3022 = vadd.f32 %v632, %v2951
    %v3023 = vadd.f32 %v634, %v2953
    %v3024 = vadd.f32 %v825, %v3004
    %v3025 = vadd.f32 %v827, %v3006
    %v3026 = vadd.f32 %v638, %v2957
    %v3027 = vadd.f32 %v640, %v2959
    %v3028 = vadd.f32 %v831, %v3010
    %v3029 = vadd.f32 %v833, %v3012
    %v3030 = vadd.f32 %v642, %v2961
    %v3031 = vadd.f32 %v644, %v2963
    %v3032 = vadd.f32 %v835, %v3014
    %v3033 = vadd.f32 %v837, %v3016
    %v3034 = vmul.f32 %v3018, 0.5
    %v3035 = vmul.f32 %v3022, 0.5
    %v3036 = vmul.f32 %v3026, 0.5
    %v3037 = vmul.f32 %v3030, 0.5
    %v3038 = vtanh.pop %v3034
    %v3039 = vtanh.pop %v3035
    %v3040 = vtanh.pop %v3036
    %v3041 = vtanh.pop %v3037
    %v3042 = vmul.f32 %v3038, 0.5
    %v3043 = vmul.f32 %v3039, 0.5
    %v3044 = vmul.f32 %v3040, 0.5
    %v3045 = vmul.f32 %v3041, 0.5
    %v3046 = vadd.f32 %v3042, 0.5
    %v3047 = vadd.f32 %v3043, 0.5
    %v3048 = vadd.f32 %v3044, 0.5
    %v3049 = vadd.f32 %v3045, 0.5
    %v3050 = vmul.f32 %v3019, 0.5
    %v3051 = vmul.f32 %v3023, 0.5
    %v3052 = vmul.f32 %v3027, 0.5
    %v3053 = vmul.f32 %v3031, 0.5
    %v3054 = vtanh.pop %v3050
    %v3055 = vtanh.pop %v3051
    %v3056 = vtanh.pop %v3052
    %v3057 = vtanh.pop %v3053
    %v3058 = vmul.f32 %v3054, 0.5
    %v3059 = vmul.f32 %v3055, 0.5
    %v3060 = vmul.f32 %v3056, 0.5
    %v3061 = vmul.f32 %v3057, 0.5
    %v3062 = vadd.f32 %v3058, 0.5
    %v3063 = vadd.f32 %v3059, 0.5
    %v3064 = vadd.f32 %v3060, 0.5
    %v3065 = vadd.f32 %v3061, 0.5
    %v3066 = vtanh.pop %v3020
    %v3067 = vtanh.pop %v3024
    %v3068 = vtanh.pop %v3028
    %v3069 = vtanh.pop %v3032
    %v3070 = vmul.f32 %v3021, 0.5
    %v3071 = vmul.f32 %v3025, 0.5
    %v3072 = vmul.f32 %v3029, 0.5
    %v3073 = vmul.f32 %v3033, 0.5
    %v3074 = vtanh.pop %v3070
    %v3075 = vtanh.pop %v3071
    %v3076 = vtanh.pop %v3072
    %v3077 = vtanh.pop %v3073
    %v3078 = vmul.f32 %v3074, 0.5
    %v3079 = vmul.f32 %v3075, 0.5
    %v3080 = vmul.f32 %v3076, 0.5
    %v3081 = vmul.f32 %v3077, 0.5
    %v3082 = vadd.f32 %v3078, 0.5
    %v3083 = vadd.f32 %v3079, 0.5
    %v3084 = vadd.f32 %v3080, 0.5
    %v3085 = vadd.f32 %v3081, 0.5
    %v3086 = vmul.f32 %v3062, %v2821
    %v3087 = vmul.f32 %v3063, %v2822
    %v3088 = vmul.f32 %v3064, %v2823
    %v3089 = vmul.f32 %v3065, %v2824
    %v3090 = vmul.f32 %v3046, %v3066
    %v3091 = vmul.f32 %v3047, %v3067
    %v3092 = vmul.f32 %v3048, %v3068
    %v3093 = vmul.f32 %v3049, %v3069
    %v3094 = vadd.f32 %v3086, %v3090
    %v3095 = vadd.f32 %v3087, %v3091
    %v3096 = vadd.f32 %v3088, %v3092
    %v3097 = vadd.f32 %v3089, %v3093
    %v3098 = vtanh.pop %v3094
    %v3099 = vtanh.pop %v3095
    %v3100 = vtanh.pop %v3096
    %v3101 = vtanh.pop %v3097
    %v3102 = vmul.f32 %v3082, %v3098
    %v3103 = vmul.f32 %v3083, %v3099
    %v3104 = vmul.f32 %v3084, %v3100
    %v3105 = vmul.f32 %v3085, %v3101
    %3110 = vrot.lane.b32.xlu0 %v3102, 96
    %v3111 = vpop.permute.xlu0 %3110
    %3112 = vrot.lane.b32.xlu0 %v3103, 96
    %v3113 = vpop.permute.xlu0 %3112
    %3114 = vrot.lane.b32.xlu0 %v3104, 96
    %v3115 = vpop.permute.xlu0 %3114
    %3116 = vrot.lane.b32.xlu0 %v3105, 96
    %v3117 = vpop.permute.xlu0 %3116
    %v3122 = vadd.f32 %v3102, %v3111
    %v3123 = vadd.f32 %v3103, %v3113
    %v3124 = vadd.f32 %v3104, %v3115
    %v3125 = vadd.f32 %v3105, %v3117
    %3126 = vrot.lane.b32.xlu0 %v3102, 64
    %v3127 = vpop.permute.xlu0 %3126
    %3128 = vrot.lane.b32.xlu0 %v3103, 64
    %v3129 = vpop.permute.xlu0 %3128
    %3130 = vrot.lane.b32.xlu0 %v3104, 64
    %v3131 = vpop.permute.xlu0 %3130
    %3132 = vrot.lane.b32.xlu0 %v3105, 64
    %v3133 = vpop.permute.xlu0 %3132
    %v3138 = vadd.f32 %v3122, %v3127
    %v3139 = vadd.f32 %v3123, %v3129
    %v3140 = vadd.f32 %v3124, %v3131
    %v3141 = vadd.f32 %v3125, %v3133
    %3142 = vrot.lane.b32.xlu0 %v3102, 32
    %v3143 = vpop.permute.xlu0 %3142
    %3144 = vrot.lane.b32.xlu0 %v3103, 32
    %v3145 = vpop.permute.xlu0 %3144
    %3146 = vrot.lane.b32.xlu0 %v3104, 32
    %v3147 = vpop.permute.xlu0 %3146
    %3148 = vrot.lane.b32.xlu0 %v3105, 32
    %v3149 = vpop.permute.xlu0 %3148
    %v3154 = vadd.f32 %v3138, %v3143
    %v3155 = vadd.f32 %v3139, %v3145
    %v3156 = vadd.f32 %v3140, %v3147
    %v3157 = vadd.f32 %v3141, %v3149
    %s3158 = sadd.s32 %s140, 7
    %s3159 = scvt.s32.f32 %s3158
    %s3160 = smul.f32 %s3159, 0.032258064
    %v3161 = vstv %s3160
    %v3162 = vmul.f32 %v3161, %v95
    %v3164 = vlaneseq
    %v3165 = vshrl.u32 %v3164, 7
    %v3166 = vsub.s32 0, %v3165
    %v3167 = vrot.slane %v3162, %v3166
    %v3169 = vadd.f32 %v3154, %v3167
    %v3170 = vadd.f32 %v3155, %v3167
    %v3171 = vadd.f32 %v3156, %v3167
    %v3172 = vadd.f32 %v3157, %v3167
    %v3173 = vadd.f32 %v3169, %v122
    %v3174 = vadd.f32 %v3170, %v123
    %v3175 = vadd.f32 %v3171, %v124
    %v3176 = vadd.f32 %v3172, %v125
    %s3177 = smul.u32 %s3158, 32
    %s3178 = scalar_lea.vmem [#allocation2], %s3177
    %3179 = vst.msk [vmem:[%s3178] sm:$0xff] %vm1267, %v3173
    %3180 = vst.msk [vmem:[%s3178 + $0x8] sm:$0xff] %vm1267, %v3174
    %3181 = vst.msk [vmem:[%s3178 + $0x10] sm:$0xff] %vm1267, %v3175
    %3182 = vst.msk [vmem:[%s3178 + $0x18] sm:$0xff] %vm1267, %v3176
  $region38: #{dense_md_forward.1} parent=0 // loop_footer
    %s131 = sadd.s32 1, %s127
  $region39: #{dense_md_forward.1} parent=0 // loop_footer_branch
    %126 = sbr.rel target = $region35
  $region40: #{dense_md_forward.1} parent=0 // loop_exit
    _
  %v3183 = vld [vmem:[#allocation2] sm:$0xff]
  %v3184 = vld [vmem:[#allocation2 + $0x8] sm:$0xff]
  %v3185 = vld [vmem:[#allocation2 + $0x10] sm:$0xff]
  %v3186 = vld [vmem:[#allocation2 + $0x18] sm:$0xff]
  %v3187 = vld [vmem:[#allocation2 + $0x20] sm:$0xff]
  %v3188 = vld [vmem:[#allocation2 + $0x28] sm:$0xff]
  %v3189 = vld [vmem:[#allocation2 + $0x30] sm:$0xff]
  %v3190 = vld [vmem:[#allocation2 + $0x38] sm:$0xff]
  %v3191 = vld [vmem:[#allocation2 + $0x40] sm:$0xff]
  %v3192 = vld [vmem:[#allocation2 + $0x48] sm:$0xff]
  %v3193 = vld [vmem:[#allocation2 + $0x50] sm:$0xff]
  %v3194 = vld [vmem:[#allocation2 + $0x58] sm:$0xff]
  %v3195 = vld [vmem:[#allocation2 + $0x60] sm:$0xff]
  %v3196 = vld [vmem:[#allocation2 + $0x68] sm:$0xff]
  %v3197 = vld [vmem:[#allocation2 + $0x70] sm:$0xff]
  %v3198 = vld [vmem:[#allocation2 + $0x78] sm:$0xff]
  %v3199 = vld [vmem:[#allocation2 + $0x80] sm:$0xff]
  %v3200 = vld [vmem:[#allocation2 + $0x88] sm:$0xff]
  %v3201 = vld [vmem:[#allocation2 + $0x90] sm:$0xff]
  %v3202 = vld [vmem:[#allocation2 + $0x98] sm:$0xff]
  %v3203 = vld [vmem:[#allocation2 + $0xa0] sm:$0xff]
  %v3204 = vld [vmem:[#allocation2 + $0xa8] sm:$0xff]
  %v3205 = vld [vmem:[#allocation2 + $0xb0] sm:$0xff]
  %v3206 = vld [vmem:[#allocation2 + $0xb8] sm:$0xff]
  %v3207 = vld [vmem:[#allocation2 + $0xc0] sm:$0xff]
  %v3208 = vld [vmem:[#allocation2 + $0xc8] sm:$0xff]
  %v3209 = vld [vmem:[#allocation2 + $0xd0] sm:$0xff]
  %v3210 = vld [vmem:[#allocation2 + $0xd8] sm:$0xff]
  %v3211 = vld [vmem:[#allocation2 + $0xe0] sm:$0xff]
  %v3212 = vld [vmem:[#allocation2 + $0xe8] sm:$0xff]
  %v3213 = vld [vmem:[#allocation2 + $0xf0] sm:$0xff]
  %v3214 = vld [vmem:[#allocation2 + $0xf8] sm:$0xff]
  %v3215 = vld [vmem:[#allocation2 + $0x100] sm:$0xff]
  %v3216 = vld [vmem:[#allocation2 + $0x108] sm:$0xff]
  %v3217 = vld [vmem:[#allocation2 + $0x110] sm:$0xff]
  %v3218 = vld [vmem:[#allocation2 + $0x118] sm:$0xff]
  %v3219 = vld [vmem:[#allocation2 + $0x120] sm:$0xff]
  %v3220 = vld [vmem:[#allocation2 + $0x128] sm:$0xff]
  %v3221 = vld [vmem:[#allocation2 + $0x130] sm:$0xff]
  %v3222 = vld [vmem:[#allocation2 + $0x138] sm:$0xff]
  %v3223 = vld [vmem:[#allocation2 + $0x140] sm:$0xff]
  %v3224 = vld [vmem:[#allocation2 + $0x148] sm:$0xff]
  %v3225 = vld [vmem:[#allocation2 + $0x150] sm:$0xff]
  %v3226 = vld [vmem:[#allocation2 + $0x158] sm:$0xff]
  %v3227 = vld [vmem:[#allocation2 + $0x160] sm:$0xff]
  %v3228 = vld [vmem:[#allocation2 + $0x168] sm:$0xff]
  %v3229 = vld [vmem:[#allocation2 + $0x170] sm:$0xff]
  %v3230 = vld [vmem:[#allocation2 + $0x178] sm:$0xff]
  %v3231 = vld [vmem:[#allocation2 + $0x180] sm:$0xff]
  %v3232 = vld [vmem:[#allocation2 + $0x188] sm:$0xff]
  %v3233 = vld [vmem:[#allocation2 + $0x190] sm:$0xff]
  %v3234 = vld [vmem:[#allocation2 + $0x198] sm:$0xff]
  %v3235 = vld [vmem:[#allocation2 + $0x1a0] sm:$0xff]
  %v3236 = vld [vmem:[#allocation2 + $0x1a8] sm:$0xff]
  %v3237 = vld [vmem:[#allocation2 + $0x1b0] sm:$0xff]
  %v3238 = vld [vmem:[#allocation2 + $0x1b8] sm:$0xff]
  %v3239 = vld [vmem:[#allocation2 + $0x1c0] sm:$0xff]
  %v3240 = vld [vmem:[#allocation2 + $0x1c8] sm:$0xff]
  %v3241 = vld [vmem:[#allocation2 + $0x1d0] sm:$0xff]
  %v3242 = vld [vmem:[#allocation2 + $0x1d8] sm:$0xff]
  %v3243 = vld [vmem:[#allocation2 + $0x1e0] sm:$0xff]
  %v3244 = vld [vmem:[#allocation2 + $0x1e8] sm:$0xff]
  %v3245 = vld [vmem:[#allocation2 + $0x1f0] sm:$0xff]
  %v3246 = vld [vmem:[#allocation2 + $0x1f8] sm:$0xff]
  %v3247 = vld [vmem:[#allocation2 + $0x200] sm:$0xff]
  %v3248 = vld [vmem:[#allocation2 + $0x208] sm:$0xff]
  %v3249 = vld [vmem:[#allocation2 + $0x210] sm:$0xff]
  %v3250 = vld [vmem:[#allocation2 + $0x218] sm:$0xff]
  %v3251 = vld [vmem:[#allocation2 + $0x220] sm:$0xff]
  %v3252 = vld [vmem:[#allocation2 + $0x228] sm:$0xff]
  %v3253 = vld [vmem:[#allocation2 + $0x230] sm:$0xff]
  %v3254 = vld [vmem:[#allocation2 + $0x238] sm:$0xff]
  %v3255 = vld [vmem:[#allocation2 + $0x240] sm:$0xff]
  %v3256 = vld [vmem:[#allocation2 + $0x248] sm:$0xff]
  %v3257 = vld [vmem:[#allocation2 + $0x250] sm:$0xff]
  %v3258 = vld [vmem:[#allocation2 + $0x258] sm:$0xff]
  %v3259 = vld [vmem:[#allocation2 + $0x260] sm:$0xff]
  %v3260 = vld [vmem:[#allocation2 + $0x268] sm:$0xff]
  %v3261 = vld [vmem:[#allocation2 + $0x270] sm:$0xff]
  %v3262 = vld [vmem:[#allocation2 + $0x278] sm:$0xff]
  %v3263 = vld [vmem:[#allocation2 + $0x280] sm:$0xff]
  %v3264 = vld [vmem:[#allocation2 + $0x288] sm:$0xff]
  %v3265 = vld [vmem:[#allocation2 + $0x290] sm:$0xff]
  %v3266 = vld [vmem:[#allocation2 + $0x298] sm:$0xff]
  %v3267 = vld [vmem:[#allocation2 + $0x2a0] sm:$0xff]
  %v3268 = vld [vmem:[#allocation2 + $0x2a8] sm:$0xff]
  %v3269 = vld [vmem:[#allocation2 + $0x2b0] sm:$0xff]
  %v3270 = vld [vmem:[#allocation2 + $0x2b8] sm:$0xff]
  %v3271 = vld [vmem:[#allocation2 + $0x2c0] sm:$0xff]
  %v3272 = vld [vmem:[#allocation2 + $0x2c8] sm:$0xff]
  %v3273 = vld [vmem:[#allocation2 + $0x2d0] sm:$0xff]
  %v3274 = vld [vmem:[#allocation2 + $0x2d8] sm:$0xff]
  %v3275 = vld [vmem:[#allocation2 + $0x2e0] sm:$0xff]
  %v3276 = vld [vmem:[#allocation2 + $0x2e8] sm:$0xff]
  %v3277 = vld [vmem:[#allocation2 + $0x2f0] sm:$0xff]
  %v3278 = vld [vmem:[#allocation2 + $0x2f8] sm:$0xff]
  %v3279 = vld [vmem:[#allocation2 + $0x300] sm:$0xff]
  %v3280 = vld [vmem:[#allocation2 + $0x308] sm:$0xff]
  %v3281 = vld [vmem:[#allocation2 + $0x310] sm:$0xff]
  %v3282 = vld [vmem:[#allocation2 + $0x318] sm:$0xff]
  %v3283 = vld [vmem:[#allocation2 + $0x320] sm:$0xff]
  %v3284 = vld [vmem:[#allocation2 + $0x328] sm:$0xff]
  %v3285 = vld [vmem:[#allocation2 + $0x330] sm:$0xff]
  %v3286 = vld [vmem:[#allocation2 + $0x338] sm:$0xff]
  %v3287 = vld [vmem:[#allocation2 + $0x340] sm:$0xff]
  %v3288 = vld [vmem:[#allocation2 + $0x348] sm:$0xff]
  %v3289 = vld [vmem:[#allocation2 + $0x350] sm:$0xff]
  %v3290 = vld [vmem:[#allocation2 + $0x358] sm:$0xff]
  %v3291 = vld [vmem:[#allocation2 + $0x360] sm:$0xff]
  %v3292 = vld [vmem:[#allocation2 + $0x368] sm:$0xff]
  %v3293 = vld [vmem:[#allocation2 + $0x370] sm:$0xff]
  %v3294 = vld [vmem:[#allocation2 + $0x378] sm:$0xff]
  %v3295 = vld [vmem:[#allocation2 + $0x380] sm:$0xff]
  %v3296 = vld [vmem:[#allocation2 + $0x388] sm:$0xff]
  %v3297 = vld [vmem:[#allocation2 + $0x390] sm:$0xff]
  %v3298 = vld [vmem:[#allocation2 + $0x398] sm:$0xff]
  %v3299 = vld [vmem:[#allocation2 + $0x3a0] sm:$0xff]
  %v3300 = vld [vmem:[#allocation2 + $0x3a8] sm:$0xff]
  %v3301 = vld [vmem:[#allocation2 + $0x3b0] sm:$0xff]
  %v3302 = vld [vmem:[#allocation2 + $0x3b8] sm:$0xff]
  %v3303 = vld [vmem:[#allocation2 + $0x3c0] sm:$0xff]
  %v3304 = vld [vmem:[#allocation2 + $0x3c8] sm:$0xff]
  %v3305 = vld [vmem:[#allocation2 + $0x3d0] sm:$0xff]
  %v3306 = vld [vmem:[#allocation2 + $0x3d8] sm:$0xff]
  %v3307 = vld [vmem:[#allocation2 + $0x3e0] sm:$0xff]
  %v3308 = vld [vmem:[#allocation2 + $0x3e8] sm:$0xff]
  %v3309 = vld [vmem:[#allocation2 + $0x3f0] sm:$0xff]
  %v3310 = vld [vmem:[#allocation2 + $0x3f8] sm:$0xff]
  %v3311 = vcombine.low %v3183, %v3191
  %v3312 = vcombine.high %v3183, %v3191
  %v3314 = vunpack.c.l.s4 1983009808
  %v3315 = vunpack.c.0.s8 %v3314
  %v3316 = vlaneseq
  %v3317 = vshrl.u32 %v3316, 7
  %v3318 = vsub.s32 %v3315, %v3317
  %v3319 = vrot.slane %v3311, %v3318
  %v3321 = vunpack.c.l.s4 1983009808
  %v3322 = vunpack.c.0.s8 %v3321
  %v3323 = vlaneseq
  %v3324 = vshrl.u32 %v3323, 7
  %v3325 = vsub.s32 %v3322, %v3324
  %v3326 = vrot.slane %v3312, %v3325
  %v3327 = vcombine.low %v3187, %v3195
  %v3328 = vcombine.high %v3187, %v3195
  %v3330 = vunpack.c.l.s4 1983009808
  %v3331 = vunpack.c.0.s8 %v3330
  %v3332 = vlaneseq
  %v3333 = vshrl.u32 %v3332, 7
  %v3334 = vsub.s32 %v3331, %v3333
  %v3335 = vrot.slane %v3327, %v3334
  %v3337 = vunpack.c.l.s4 1983009808
  %v3338 = vunpack.c.0.s8 %v3337
  %v3339 = vlaneseq
  %v3340 = vshrl.u32 %v3339, 7
  %v3341 = vsub.s32 %v3338, %v3340
  %v3342 = vrot.slane %v3328, %v3341
  %v3343 = vcombine.low %v3199, %v3207
  %v3344 = vcombine.high %v3199, %v3207
  %v3346 = vunpack.c.l.s4 1983009808
  %v3347 = vunpack.c.0.s8 %v3346
  %v3348 = vlaneseq
  %v3349 = vshrl.u32 %v3348, 7
  %v3350 = vsub.s32 %v3347, %v3349
  %v3351 = vrot.slane %v3343, %v3350
  %v3353 = vunpack.c.l.s4 1983009808
  %v3354 = vunpack.c.0.s8 %v3353
  %v3355 = vlaneseq
  %v3356 = vshrl.u32 %v3355, 7
  %v3357 = vsub.s32 %v3354, %v3356
  %v3358 = vrot.slane %v3344, %v3357
  %v3359 = vcombine.low %v3203, %v3211
  %v3360 = vcombine.high %v3203, %v3211
  %v3362 = vunpack.c.l.s4 1983009808
  %v3363 = vunpack.c.0.s8 %v3362
  %v3364 = vlaneseq
  %v3365 = vshrl.u32 %v3364, 7
  %v3366 = vsub.s32 %v3363, %v3365
  %v3367 = vrot.slane %v3359, %v3366
  %v3369 = vunpack.c.l.s4 1983009808
  %v3370 = vunpack.c.0.s8 %v3369
  %v3371 = vlaneseq
  %v3372 = vshrl.u32 %v3371, 7
  %v3373 = vsub.s32 %v3370, %v3372
  %v3374 = vrot.slane %v3360, %v3373
  %v3375 = vcombine.low %v3319, %v3335
  %v3376 = vcombine.high %v3319, %v3335
  %v3378 = vunpack.c.l.s4 1934713408
  %v3379 = vunpack.c.0.s8 %v3378
  %v3380 = vlaneseq
  %v3381 = vshrl.u32 %v3380, 7
  %v3382 = vsub.s32 %v3379, %v3381
  %v3383 = vrot.slane %v3375, %v3382
  %v3385 = vunpack.c.l.s4 1934713408
  %v3386 = vunpack.c.0.s8 %v3385
  %v3387 = vlaneseq
  %v3388 = vshrl.u32 %v3387, 7
  %v3389 = vsub.s32 %v3386, %v3388
  %v3390 = vrot.slane %v3376, %v3389
  %v3391 = vcombine.low %v3326, %v3342
  %v3392 = vcombine.high %v3326, %v3342
  %v3394 = vunpack.c.l.s4 1934713408
  %v3395 = vunpack.c.0.s8 %v3394
  %v3396 = vlaneseq
  %v3397 = vshrl.u32 %v3396, 7
  %v3398 = vsub.s32 %v3395, %v3397
  %v3399 = vrot.slane %v3391, %v3398
  %v3401 = vunpack.c.l.s4 1934713408
  %v3402 = vunpack.c.0.s8 %v3401
  %v3403 = vlaneseq
  %v3404 = vshrl.u32 %v3403, 7
  %v3405 = vsub.s32 %v3402, %v3404
  %v3406 = vrot.slane %v3392, %v3405
  %v3407 = vcombine.low %v3351, %v3367
  %v3408 = vcombine.high %v3351, %v3367
  %v3410 = vunpack.c.l.s4 1934713408
  %v3411 = vunpack.c.0.s8 %v3410
  %v3412 = vlaneseq
  %v3413 = vshrl.u32 %v3412, 7
  %v3414 = vsub.s32 %v3411, %v3413
  %v3415 = vrot.slane %v3407, %v3414
  %v3417 = vunpack.c.l.s4 1934713408
  %v3418 = vunpack.c.0.s8 %v3417
  %v3419 = vlaneseq
  %v3420 = vshrl.u32 %v3419, 7
  %v3421 = vsub.s32 %v3418, %v3420
  %v3422 = vrot.slane %v3408, %v3421
  %v3423 = vcombine.low %v3358, %v3374
  %v3424 = vcombine.high %v3358, %v3374
  %v3426 = vunpack.c.l.s4 1934713408
  %v3427 = vunpack.c.0.s8 %v3426
  %v3428 = vlaneseq
  %v3429 = vshrl.u32 %v3428, 7
  %v3430 = vsub.s32 %v3427, %v3429
  %v3431 = vrot.slane %v3423, %v3430
  %v3433 = vunpack.c.l.s4 1934713408
  %v3434 = vunpack.c.0.s8 %v3433
  %v3435 = vlaneseq
  %v3436 = vshrl.u32 %v3435, 7
  %v3437 = vsub.s32 %v3434, %v3436
  %v3438 = vrot.slane %v3424, %v3437
  %v3439 = vcombine.low %v3383, %v3415
  %v3440 = vcombine.high %v3383, %v3415
  %v3441 = vcombine.low %v3390, %v3422
  %v3442 = vcombine.high %v3390, %v3422
  %v3443 = vcombine.low %v3399, %v3431
  %v3444 = vcombine.high %v3399, %v3431
  %v3445 = vcombine.low %v3406, %v3438
  %v3446 = vcombine.high %v3406, %v3438
  %v3447 = vcombine.low %v3215, %v3223
  %v3448 = vcombine.high %v3215, %v3223
  %v3450 = vunpack.c.l.s4 1983009808
  %v3451 = vunpack.c.0.s8 %v3450
  %v3452 = vlaneseq
  %v3453 = vshrl.u32 %v3452, 7
  %v3454 = vsub.s32 %v3451, %v3453
  %v3455 = vrot.slane %v3447, %v3454
  %v3457 = vunpack.c.l.s4 1983009808
  %v3458 = vunpack.c.0.s8 %v3457
  %v3459 = vlaneseq
  %v3460 = vshrl.u32 %v3459, 7
  %v3461 = vsub.s32 %v3458, %v3460
  %v3462 = vrot.slane %v3448, %v3461
  %v3463 = vcombine.low %v3219, %v3227
  %v3464 = vcombine.high %v3219, %v3227
  %v3466 = vunpack.c.l.s4 1983009808
  %v3467 = vunpack.c.0.s8 %v3466
  %v3468 = vlaneseq
  %v3469 = vshrl.u32 %v3468, 7
  %v3470 = vsub.s32 %v3467, %v3469
  %v3471 = vrot.slane %v3463, %v3470
  %v3473 = vunpack.c.l.s4 1983009808
  %v3474 = vunpack.c.0.s8 %v3473
  %v3475 = vlaneseq
  %v3476 = vshrl.u32 %v3475, 7
  %v3477 = vsub.s32 %v3474, %v3476
  %v3478 = vrot.slane %v3464, %v3477
  %v3479 = vcombine.low %v3231, %v3239
  %v3480 = vcombine.high %v3231, %v3239
  %v3482 = vunpack.c.l.s4 1983009808
  %v3483 = vunpack.c.0.s8 %v3482
  %v3484 = vlaneseq
  %v3485 = vshrl.u32 %v3484, 7
  %v3486 = vsub.s32 %v3483, %v3485
  %v3487 = vrot.slane %v3479, %v3486
  %v3489 = vunpack.c.l.s4 1983009808
  %v3490 = vunpack.c.0.s8 %v3489
  %v3491 = vlaneseq
  %v3492 = vshrl.u32 %v3491, 7
  %v3493 = vsub.s32 %v3490, %v3492
  %v3494 = vrot.slane %v3480, %v3493
  %v3495 = vcombine.low %v3235, %v3243
  %v3496 = vcombine.high %v3235, %v3243
  %v3498 = vunpack.c.l.s4 1983009808
  %v3499 = vunpack.c.0.s8 %v3498
  %v3500 = vlaneseq
  %v3501 = vshrl.u32 %v3500, 7
  %v3502 = vsub.s32 %v3499, %v3501
  %v3503 = vrot.slane %v3495, %v3502
  %v3505 = vunpack.c.l.s4 1983009808
  %v3506 = vunpack.c.0.s8 %v3505
  %v3507 = vlaneseq
  %v3508 = vshrl.u32 %v3507, 7
  %v3509 = vsub.s32 %v3506, %v3508
  %v3510 = vrot.slane %v3496, %v3509
  %v3511 = vcombine.low %v3455, %v3471
  %v3512 = vcombine.high %v3455, %v3471
  %v3514 = vunpack.c.l.s4 1934713408
  %v3515 = vunpack.c.0.s8 %v3514
  %v3516 = vlaneseq
  %v3517 = vshrl.u32 %v3516, 7
  %v3518 = vsub.s32 %v3515, %v3517
  %v3519 = vrot.slane %v3511, %v3518
  %v3521 = vunpack.c.l.s4 1934713408
  %v3522 = vunpack.c.0.s8 %v3521
  %v3523 = vlaneseq
  %v3524 = vshrl.u32 %v3523, 7
  %v3525 = vsub.s32 %v3522, %v3524
  %v3526 = vrot.slane %v3512, %v3525
  %v3527 = vcombine.low %v3462, %v3478
  %v3528 = vcombine.high %v3462, %v3478
  %v3530 = vunpack.c.l.s4 1934713408
  %v3531 = vunpack.c.0.s8 %v3530
  %v3532 = vlaneseq
  %v3533 = vshrl.u32 %v3532, 7
  %v3534 = vsub.s32 %v3531, %v3533
  %v3535 = vrot.slane %v3527, %v3534
  %v3537 = vunpack.c.l.s4 1934713408
  %v3538 = vunpack.c.0.s8 %v3537
  %v3539 = vlaneseq
  %v3540 = vshrl.u32 %v3539, 7
  %v3541 = vsub.s32 %v3538, %v3540
  %v3542 = vrot.slane %v3528, %v3541
  %v3543 = vcombine.low %v3487, %v3503
  %v3544 = vcombine.high %v3487, %v3503
  %v3546 = vunpack.c.l.s4 1934713408
  %v3547 = vunpack.c.0.s8 %v3546
  %v3548 = vlaneseq
  %v3549 = vshrl.u32 %v3548, 7
  %v3550 = vsub.s32 %v3547, %v3549
  %v3551 = vrot.slane %v3543, %v3550
  %v3553 = vunpack.c.l.s4 1934713408
  %v3554 = vunpack.c.0.s8 %v3553
  %v3555 = vlaneseq
  %v3556 = vshrl.u32 %v3555, 7
  %v3557 = vsub.s32 %v3554, %v3556
  %v3558 = vrot.slane %v3544, %v3557
  %v3559 = vcombine.low %v3494, %v3510
  %v3560 = vcombine.high %v3494, %v3510
  %v3562 = vunpack.c.l.s4 1934713408
  %v3563 = vunpack.c.0.s8 %v3562
  %v3564 = vlaneseq
  %v3565 = vshrl.u32 %v3564, 7
  %v3566 = vsub.s32 %v3563, %v3565
  %v3567 = vrot.slane %v3559, %v3566
  %v3569 = vunpack.c.l.s4 1934713408
  %v3570 = vunpack.c.0.s8 %v3569
  %v3571 = vlaneseq
  %v3572 = vshrl.u32 %v3571, 7
  %v3573 = vsub.s32 %v3570, %v3572
  %v3574 = vrot.slane %v3560, %v3573
  %v3575 = vcombine.low %v3519, %v3551
  %v3576 = vcombine.high %v3519, %v3551
  %v3577 = vcombine.low %v3526, %v3558
  %v3578 = vcombine.high %v3526, %v3558
  %v3579 = vcombine.low %v3535, %v3567
  %v3580 = vcombine.high %v3535, %v3567
  %v3581 = vcombine.low %v3542, %v3574
  %v3582 = vcombine.high %v3542, %v3574
  %v3583 = vcombine.low %v3247, %v3255
  %v3584 = vcombine.high %v3247, %v3255
  %v3586 = vunpack.c.l.s4 1983009808
  %v3587 = vunpack.c.0.s8 %v3586
  %v3588 = vlaneseq
  %v3589 = vshrl.u32 %v3588, 7
  %v3590 = vsub.s32 %v3587, %v3589
  %v3591 = vrot.slane %v3583, %v3590
  %v3593 = vunpack.c.l.s4 1983009808
  %v3594 = vunpack.c.0.s8 %v3593
  %v3595 = vlaneseq
  %v3596 = vshrl.u32 %v3595, 7
  %v3597 = vsub.s32 %v3594, %v3596
  %v3598 = vrot.slane %v3584, %v3597
  %v3599 = vcombine.low %v3251, %v3259
  %v3600 = vcombine.high %v3251, %v3259
  %v3602 = vunpack.c.l.s4 1983009808
  %v3603 = vunpack.c.0.s8 %v3602
  %v3604 = vlaneseq
  %v3605 = vshrl.u32 %v3604, 7
  %v3606 = vsub.s32 %v3603, %v3605
  %v3607 = vrot.slane %v3599, %v3606
  %v3609 = vunpack.c.l.s4 1983009808
  %v3610 = vunpack.c.0.s8 %v3609
  %v3611 = vlaneseq
  %v3612 = vshrl.u32 %v3611, 7
  %v3613 = vsub.s32 %v3610, %v3612
  %v3614 = vrot.slane %v3600, %v3613
  %v3615 = vcombine.low %v3263, %v3271
  %v3616 = vcombine.high %v3263, %v3271
  %v3618 = vunpack.c.l.s4 1983009808
  %v3619 = vunpack.c.0.s8 %v3618
  %v3620 = vlaneseq
  %v3621 = vshrl.u32 %v3620, 7
  %v3622 = vsub.s32 %v3619, %v3621
  %v3623 = vrot.slane %v3615, %v3622
  %v3625 = vunpack.c.l.s4 1983009808
  %v3626 = vunpack.c.0.s8 %v3625
  %v3627 = vlaneseq
  %v3628 = vshrl.u32 %v3627, 7
  %v3629 = vsub.s32 %v3626, %v3628
  %v3630 = vrot.slane %v3616, %v3629
  %v3631 = vcombine.low %v3267, %v3275
  %v3632 = vcombine.high %v3267, %v3275
  %v3634 = vunpack.c.l.s4 1983009808
  %v3635 = vunpack.c.0.s8 %v3634
  %v3636 = vlaneseq
  %v3637 = vshrl.u32 %v3636, 7
  %v3638 = vsub.s32 %v3635, %v3637
  %v3639 = vrot.slane %v3631, %v3638
  %v3641 = vunpack.c.l.s4 1983009808
  %v3642 = vunpack.c.0.s8 %v3641
  %v3643 = vlaneseq
  %v3644 = vshrl.u32 %v3643, 7
  %v3645 = vsub.s32 %v3642, %v3644
  %v3646 = vrot.slane %v3632, %v3645
  %v3647 = vcombine.low %v3591, %v3607
  %v3648 = vcombine.high %v3591, %v3607
  %v3650 = vunpack.c.l.s4 1934713408
  %v3651 = vunpack.c.0.s8 %v3650
  %v3652 = vlaneseq
  %v3653 = vshrl.u32 %v3652, 7
  %v3654 = vsub.s32 %v3651, %v3653
  %v3655 = vrot.slane %v3647, %v3654
  %v3657 = vunpack.c.l.s4 1934713408
  %v3658 = vunpack.c.0.s8 %v3657
  %v3659 = vlaneseq
  %v3660 = vshrl.u32 %v3659, 7
  %v3661 = vsub.s32 %v3658, %v3660
  %v3662 = vrot.slane %v3648, %v3661
  %v3663 = vcombine.low %v3598, %v3614
  %v3664 = vcombine.high %v3598, %v3614
  %v3666 = vunpack.c.l.s4 1934713408
  %v3667 = vunpack.c.0.s8 %v3666
  %v3668 = vlaneseq
  %v3669 = vshrl.u32 %v3668, 7
  %v3670 = vsub.s32 %v3667, %v3669
  %v3671 = vrot.slane %v3663, %v3670
  %v3673 = vunpack.c.l.s4 1934713408
  %v3674 = vunpack.c.0.s8 %v3673
  %v3675 = vlaneseq
  %v3676 = vshrl.u32 %v3675, 7
  %v3677 = vsub.s32 %v3674, %v3676
  %v3678 = vrot.slane %v3664, %v3677
  %v3679 = vcombine.low %v3623, %v3639
  %v3680 = vcombine.high %v3623, %v3639
  %v3682 = vunpack.c.l.s4 1934713408
  %v3683 = vunpack.c.0.s8 %v3682
  %v3684 = vlaneseq
  %v3685 = vshrl.u32 %v3684, 7
  %v3686 = vsub.s32 %v3683, %v3685
  %v3687 = vrot.slane %v3679, %v3686
  %v3689 = vunpack.c.l.s4 1934713408
  %v3690 = vunpack.c.0.s8 %v3689
  %v3691 = vlaneseq
  %v3692 = vshrl.u32 %v3691, 7
  %v3693 = vsub.s32 %v3690, %v3692
  %v3694 = vrot.slane %v3680, %v3693
  %v3695 = vcombine.low %v3630, %v3646
  %v3696 = vcombine.high %v3630, %v3646
  %v3698 = vunpack.c.l.s4 1934713408
  %v3699 = vunpack.c.0.s8 %v3698
  %v3700 = vlaneseq
  %v3701 = vshrl.u32 %v3700, 7
  %v3702 = vsub.s32 %v3699, %v3701
  %v3703 = vrot.slane %v3695, %v3702
  %v3705 = vunpack.c.l.s4 1934713408
  %v3706 = vunpack.c.0.s8 %v3705
  %v3707 = vlaneseq
  %v3708 = vshrl.u32 %v3707, 7
  %v3709 = vsub.s32 %v3706, %v3708
  %v3710 = vrot.slane %v3696, %v3709
  %v3711 = vcombine.low %v3655, %v3687
  %v3712 = vcombine.high %v3655, %v3687
  %v3713 = vcombine.low %v3662, %v3694
  %v3714 = vcombine.high %v3662, %v3694
  %v3715 = vcombine.low %v3671, %v3703
  %v3716 = vcombine.high %v3671, %v3703
  %v3717 = vcombine.low %v3678, %v3710
  %v3718 = vcombine.high %v3678, %v3710
  %v3719 = vcombine.low %v3279, %v3287
  %v3720 = vcombine.high %v3279, %v3287
  %v3722 = vunpack.c.l.s4 1983009808
  %v3723 = vunpack.c.0.s8 %v3722
  %v3724 = vlaneseq
  %v3725 = vshrl.u32 %v3724, 7
  %v3726 = vsub.s32 %v3723, %v3725
  %v3727 = vrot.slane %v3719, %v3726
  %v3729 = vunpack.c.l.s4 1983009808
  %v3730 = vunpack.c.0.s8 %v3729
  %v3731 = vlaneseq
  %v3732 = vshrl.u32 %v3731, 7
  %v3733 = vsub.s32 %v3730, %v3732
  %v3734 = vrot.slane %v3720, %v3733
  %v3735 = vcombine.low %v3283, %v3291
  %v3736 = vcombine.high %v3283, %v3291
  %v3738 = vunpack.c.l.s4 1983009808
  %v3739 = vunpack.c.0.s8 %v3738
  %v3740 = vlaneseq
  %v3741 = vshrl.u32 %v3740, 7
  %v3742 = vsub.s32 %v3739, %v3741
  %v3743 = vrot.slane %v3735, %v3742
  %v3745 = vunpack.c.l.s4 1983009808
  %v3746 = vunpack.c.0.s8 %v3745
  %v3747 = vlaneseq
  %v3748 = vshrl.u32 %v3747, 7
  %v3749 = vsub.s32 %v3746, %v3748
  %v3750 = vrot.slane %v3736, %v3749
  %v3751 = vcombine.low %v3295, %v3303
  %v3752 = vcombine.high %v3295, %v3303
  %v3754 = vunpack.c.l.s4 1983009808
  %v3755 = vunpack.c.0.s8 %v3754
  %v3756 = vlaneseq
  %v3757 = vshrl.u32 %v3756, 7
  %v3758 = vsub.s32 %v3755, %v3757
  %v3759 = vrot.slane %v3751, %v3758
  %v3761 = vunpack.c.l.s4 1983009808
  %v3762 = vunpack.c.0.s8 %v3761
  %v3763 = vlaneseq
  %v3764 = vshrl.u32 %v3763, 7
  %v3765 = vsub.s32 %v3762, %v3764
  %v3766 = vrot.slane %v3752, %v3765
  %v3767 = vcombine.low %v3299, %v3307
  %v3768 = vcombine.high %v3299, %v3307
  %v3770 = vunpack.c.l.s4 1983009808
  %v3771 = vunpack.c.0.s8 %v3770
  %v3772 = vlaneseq
  %v3773 = vshrl.u32 %v3772, 7
  %v3774 = vsub.s32 %v3771, %v3773
  %v3775 = vrot.slane %v3767, %v3774
  %v3777 = vunpack.c.l.s4 1983009808
  %v3778 = vunpack.c.0.s8 %v3777
  %v3779 = vlaneseq
  %v3780 = vshrl.u32 %v3779, 7
  %v3781 = vsub.s32 %v3778, %v3780
  %v3782 = vrot.slane %v3768, %v3781
  %v3783 = vcombine.low %v3727, %v3743
  %v3784 = vcombine.high %v3727, %v3743
  %v3786 = vunpack.c.l.s4 1934713408
  %v3787 = vunpack.c.0.s8 %v3786
  %v3788 = vlaneseq
  %v3789 = vshrl.u32 %v3788, 7
  %v3790 = vsub.s32 %v3787, %v3789
  %v3791 = vrot.slane %v3783, %v3790
  %v3793 = vunpack.c.l.s4 1934713408
  %v3794 = vunpack.c.0.s8 %v3793
  %v3795 = vlaneseq
  %v3796 = vshrl.u32 %v3795, 7
  %v3797 = vsub.s32 %v3794, %v3796
  %v3798 = vrot.slane %v3784, %v3797
  %v3799 = vcombine.low %v3734, %v3750
  %v3800 = vcombine.high %v3734, %v3750
  %v3802 = vunpack.c.l.s4 1934713408
  %v3803 = vunpack.c.0.s8 %v3802
  %v3804 = vlaneseq
  %v3805 = vshrl.u32 %v3804, 7
  %v3806 = vsub.s32 %v3803, %v3805
  %v3807 = vrot.slane %v3799, %v3806
  %v3809 = vunpack.c.l.s4 1934713408
  %v3810 = vunpack.c.0.s8 %v3809
  %v3811 = vlaneseq
  %v3812 = vshrl.u32 %v3811, 7
  %v3813 = vsub.s32 %v3810, %v3812
  %v3814 = vrot.slane %v3800, %v3813
  %v3815 = vcombine.low %v3759, %v3775
  %v3816 = vcombine.high %v3759, %v3775
  %v3818 = vunpack.c.l.s4 1934713408
  %v3819 = vunpack.c.0.s8 %v3818
  %v3820 = vlaneseq
  %v3821 = vshrl.u32 %v3820, 7
  %v3822 = vsub.s32 %v3819, %v3821
  %v3823 = vrot.slane %v3815, %v3822
  %v3825 = vunpack.c.l.s4 1934713408
  %v3826 = vunpack.c.0.s8 %v3825
  %v3827 = vlaneseq
  %v3828 = vshrl.u32 %v3827, 7
  %v3829 = vsub.s32 %v3826, %v3828
  %v3830 = vrot.slane %v3816, %v3829
  %v3831 = vcombine.low %v3766, %v3782
  %v3832 = vcombine.high %v3766, %v3782
  %v3834 = vunpack.c.l.s4 1934713408
  %v3835 = vunpack.c.0.s8 %v3834
  %v3836 = vlaneseq
  %v3837 = vshrl.u32 %v3836, 7
  %v3838 = vsub.s32 %v3835, %v3837
  %v3839 = vrot.slane %v3831, %v3838
  %v3841 = vunpack.c.l.s4 1934713408
  %v3842 = vunpack.c.0.s8 %v3841
  %v3843 = vlaneseq
  %v3844 = vshrl.u32 %v3843, 7
  %v3845 = vsub.s32 %v3842, %v3844
  %v3846 = vrot.slane %v3832, %v3845
  %v3847 = vcombine.low %v3791, %v3823
  %v3848 = vcombine.high %v3791, %v3823
  %v3849 = vcombine.low %v3798, %v3830
  %v3850 = vcombine.high %v3798, %v3830
  %v3851 = vcombine.low %v3807, %v3839
  %v3852 = vcombine.high %v3807, %v3839
  %v3853 = vcombine.low %v3814, %v3846
  %v3854 = vcombine.high %v3814, %v3846
  %v3855 = vcombine.low %v3184, %v3192
  %v3856 = vcombine.high %v3184, %v3192
  %v3858 = vunpack.c.l.s4 1983009808
  %v3859 = vunpack.c.0.s8 %v3858
  %v3860 = vlaneseq
  %v3861 = vshrl.u32 %v3860, 7
  %v3862 = vsub.s32 %v3859, %v3861
  %v3863 = vrot.slane %v3855, %v3862
  %v3865 = vunpack.c.l.s4 1983009808
  %v3866 = vunpack.c.0.s8 %v3865
  %v3867 = vlaneseq
  %v3868 = vshrl.u32 %v3867, 7
  %v3869 = vsub.s32 %v3866, %v3868
  %v3870 = vrot.slane %v3856, %v3869
  %v3871 = vcombine.low %v3188, %v3196
  %v3872 = vcombine.high %v3188, %v3196
  %v3874 = vunpack.c.l.s4 1983009808
  %v3875 = vunpack.c.0.s8 %v3874
  %v3876 = vlaneseq
  %v3877 = vshrl.u32 %v3876, 7
  %v3878 = vsub.s32 %v3875, %v3877
  %v3879 = vrot.slane %v3871, %v3878
  %v3881 = vunpack.c.l.s4 1983009808
  %v3882 = vunpack.c.0.s8 %v3881
  %v3883 = vlaneseq
  %v3884 = vshrl.u32 %v3883, 7
  %v3885 = vsub.s32 %v3882, %v3884
  %v3886 = vrot.slane %v3872, %v3885
  %v3887 = vcombine.low %v3200, %v3208
  %v3888 = vcombine.high %v3200, %v3208
  %v3890 = vunpack.c.l.s4 1983009808
  %v3891 = vunpack.c.0.s8 %v3890
  %v3892 = vlaneseq
  %v3893 = vshrl.u32 %v3892, 7
  %v3894 = vsub.s32 %v3891, %v3893
  %v3895 = vrot.slane %v3887, %v3894
  %v3897 = vunpack.c.l.s4 1983009808
  %v3898 = vunpack.c.0.s8 %v3897
  %v3899 = vlaneseq
  %v3900 = vshrl.u32 %v3899, 7
  %v3901 = vsub.s32 %v3898, %v3900
  %v3902 = vrot.slane %v3888, %v3901
  %v3903 = vcombine.low %v3204, %v3212
  %v3904 = vcombine.high %v3204, %v3212
  %v3906 = vunpack.c.l.s4 1983009808
  %v3907 = vunpack.c.0.s8 %v3906
  %v3908 = vlaneseq
  %v3909 = vshrl.u32 %v3908, 7
  %v3910 = vsub.s32 %v3907, %v3909
  %v3911 = vrot.slane %v3903, %v3910
  %v3913 = vunpack.c.l.s4 1983009808
  %v3914 = vunpack.c.0.s8 %v3913
  %v3915 = vlaneseq
  %v3916 = vshrl.u32 %v3915, 7
  %v3917 = vsub.s32 %v3914, %v3916
  %v3918 = vrot.slane %v3904, %v3917
  %v3919 = vcombine.low %v3863, %v3879
  %v3920 = vcombine.high %v3863, %v3879
  %v3922 = vunpack.c.l.s4 1934713408
  %v3923 = vunpack.c.0.s8 %v3922
  %v3924 = vlaneseq
  %v3925 = vshrl.u32 %v3924, 7
  %v3926 = vsub.s32 %v3923, %v3925
  %v3927 = vrot.slane %v3919, %v3926
  %v3929 = vunpack.c.l.s4 1934713408
  %v3930 = vunpack.c.0.s8 %v3929
  %v3931 = vlaneseq
  %v3932 = vshrl.u32 %v3931, 7
  %v3933 = vsub.s32 %v3930, %v3932
  %v3934 = vrot.slane %v3920, %v3933
  %v3935 = vcombine.low %v3870, %v3886
  %v3936 = vcombine.high %v3870, %v3886
  %v3938 = vunpack.c.l.s4 1934713408
  %v3939 = vunpack.c.0.s8 %v3938
  %v3940 = vlaneseq
  %v3941 = vshrl.u32 %v3940, 7
  %v3942 = vsub.s32 %v3939, %v3941
  %v3943 = vrot.slane %v3935, %v3942
  %v3945 = vunpack.c.l.s4 1934713408
  %v3946 = vunpack.c.0.s8 %v3945
  %v3947 = vlaneseq
  %v3948 = vshrl.u32 %v3947, 7
  %v3949 = vsub.s32 %v3946, %v3948
  %v3950 = vrot.slane %v3936, %v3949
  %v3951 = vcombine.low %v3895, %v3911
  %v3952 = vcombine.high %v3895, %v3911
  %v3954 = vunpack.c.l.s4 1934713408
  %v3955 = vunpack.c.0.s8 %v3954
  %v3956 = vlaneseq
  %v3957 = vshrl.u32 %v3956, 7
  %v3958 = vsub.s32 %v3955, %v3957
  %v3959 = vrot.slane %v3951, %v3958
  %v3961 = vunpack.c.l.s4 1934713408
  %v3962 = vunpack.c.0.s8 %v3961
  %v3963 = vlaneseq
  %v3964 = vshrl.u32 %v3963, 7
  %v3965 = vsub.s32 %v3962, %v3964
  %v3966 = vrot.slane %v3952, %v3965
  %v3967 = vcombine.low %v3902, %v3918
  %v3968 = vcombine.high %v3902, %v3918
  %v3970 = vunpack.c.l.s4 1934713408
  %v3971 = vunpack.c.0.s8 %v3970
  %v3972 = vlaneseq
  %v3973 = vshrl.u32 %v3972, 7
  %v3974 = vsub.s32 %v3971, %v3973
  %v3975 = vrot.slane %v3967, %v3974
  %v3977 = vunpack.c.l.s4 1934713408
  %v3978 = vunpack.c.0.s8 %v3977
  %v3979 = vlaneseq
  %v3980 = vshrl.u32 %v3979, 7
  %v3981 = vsub.s32 %v3978, %v3980
  %v3982 = vrot.slane %v3968, %v3981
  %v3983 = vcombine.low %v3927, %v3959
  %v3984 = vcombine.high %v3927, %v3959
  %v3985 = vcombine.low %v3934, %v3966
  %v3986 = vcombine.high %v3934, %v3966
  %v3987 = vcombine.low %v3943, %v3975
  %v3988 = vcombine.high %v3943, %v3975
  %v3989 = vcombine.low %v3950, %v3982
  %v3990 = vcombine.high %v3950, %v3982
  %v3991 = vcombine.low %v3216, %v3224
  %v3992 = vcombine.high %v3216, %v3224
  %v3994 = vunpack.c.l.s4 1983009808
  %v3995 = vunpack.c.0.s8 %v3994
  %v3996 = vlaneseq
  %v3997 = vshrl.u32 %v3996, 7
  %v3998 = vsub.s32 %v3995, %v3997
  %v3999 = vrot.slane %v3991, %v3998
  %v4001 = vunpack.c.l.s4 1983009808
  %v4002 = vunpack.c.0.s8 %v4001
  %v4003 = vlaneseq
  %v4004 = vshrl.u32 %v4003, 7
  %v4005 = vsub.s32 %v4002, %v4004
  %v4006 = vrot.slane %v3992, %v4005
  %v4007 = vcombine.low %v3220, %v3228
  %v4008 = vcombine.high %v3220, %v3228
  %v4010 = vunpack.c.l.s4 1983009808
  %v4011 = vunpack.c.0.s8 %v4010
  %v4012 = vlaneseq
  %v4013 = vshrl.u32 %v4012, 7
  %v4014 = vsub.s32 %v4011, %v4013
  %v4015 = vrot.slane %v4007, %v4014
  %v4017 = vunpack.c.l.s4 1983009808
  %v4018 = vunpack.c.0.s8 %v4017
  %v4019 = vlaneseq
  %v4020 = vshrl.u32 %v4019, 7
  %v4021 = vsub.s32 %v4018, %v4020
  %v4022 = vrot.slane %v4008, %v4021
  %v4023 = vcombine.low %v3232, %v3240
  %v4024 = vcombine.high %v3232, %v3240
  %v4026 = vunpack.c.l.s4 1983009808
  %v4027 = vunpack.c.0.s8 %v4026
  %v4028 = vlaneseq
  %v4029 = vshrl.u32 %v4028, 7
  %v4030 = vsub.s32 %v4027, %v4029
  %v4031 = vrot.slane %v4023, %v4030
  %v4033 = vunpack.c.l.s4 1983009808
  %v4034 = vunpack.c.0.s8 %v4033
  %v4035 = vlaneseq
  %v4036 = vshrl.u32 %v4035, 7
  %v4037 = vsub.s32 %v4034, %v4036
  %v4038 = vrot.slane %v4024, %v4037
  %v4039 = vcombine.low %v3236, %v3244
  %v4040 = vcombine.high %v3236, %v3244
  %v4042 = vunpack.c.l.s4 1983009808
  %v4043 = vunpack.c.0.s8 %v4042
  %v4044 = vlaneseq
  %v4045 = vshrl.u32 %v4044, 7
  %v4046 = vsub.s32 %v4043, %v4045
  %v4047 = vrot.slane %v4039, %v4046
  %v4049 = vunpack.c.l.s4 1983009808
  %v4050 = vunpack.c.0.s8 %v4049
  %v4051 = vlaneseq
  %v4052 = vshrl.u32 %v4051, 7
  %v4053 = vsub.s32 %v4050, %v4052
  %v4054 = vrot.slane %v4040, %v4053
  %v4055 = vcombine.low %v3999, %v4015
  %v4056 = vcombine.high %v3999, %v4015
  %v4058 = vunpack.c.l.s4 1934713408
  %v4059 = vunpack.c.0.s8 %v4058
  %v4060 = vlaneseq
  %v4061 = vshrl.u32 %v4060, 7
  %v4062 = vsub.s32 %v4059, %v4061
  %v4063 = vrot.slane %v4055, %v4062
  %v4065 = vunpack.c.l.s4 1934713408
  %v4066 = vunpack.c.0.s8 %v4065
  %v4067 = vlaneseq
  %v4068 = vshrl.u32 %v4067, 7
  %v4069 = vsub.s32 %v4066, %v4068
  %v4070 = vrot.slane %v4056, %v4069
  %v4071 = vcombine.low %v4006, %v4022
  %v4072 = vcombine.high %v4006, %v4022
  %v4074 = vunpack.c.l.s4 1934713408
  %v4075 = vunpack.c.0.s8 %v4074
  %v4076 = vlaneseq
  %v4077 = vshrl.u32 %v4076, 7
  %v4078 = vsub.s32 %v4075, %v4077
  %v4079 = vrot.slane %v4071, %v4078
  %v4081 = vunpack.c.l.s4 1934713408
  %v4082 = vunpack.c.0.s8 %v4081
  %v4083 = vlaneseq
  %v4084 = vshrl.u32 %v4083, 7
  %v4085 = vsub.s32 %v4082, %v4084
  %v4086 = vrot.slane %v4072, %v4085
  %v4087 = vcombine.low %v4031, %v4047
  %v4088 = vcombine.high %v4031, %v4047
  %v4090 = vunpack.c.l.s4 1934713408
  %v4091 = vunpack.c.0.s8 %v4090
  %v4092 = vlaneseq
  %v4093 = vshrl.u32 %v4092, 7
  %v4094 = vsub.s32 %v4091, %v4093
  %v4095 = vrot.slane %v4087, %v4094
  %v4097 = vunpack.c.l.s4 1934713408
  %v4098 = vunpack.c.0.s8 %v4097
  %v4099 = vlaneseq
  %v4100 = vshrl.u32 %v4099, 7
  %v4101 = vsub.s32 %v4098, %v4100
  %v4102 = vrot.slane %v4088, %v4101
  %v4103 = vcombine.low %v4038, %v4054
  %v4104 = vcombine.high %v4038, %v4054
  %v4106 = vunpack.c.l.s4 1934713408
  %v4107 = vunpack.c.0.s8 %v4106
  %v4108 = vlaneseq
  %v4109 = vshrl.u32 %v4108, 7
  %v4110 = vsub.s32 %v4107, %v4109
  %v4111 = vrot.slane %v4103, %v4110
  %v4113 = vunpack.c.l.s4 1934713408
  %v4114 = vunpack.c.0.s8 %v4113
  %v4115 = vlaneseq
  %v4116 = vshrl.u32 %v4115, 7
  %v4117 = vsub.s32 %v4114, %v4116
  %v4118 = vrot.slane %v4104, %v4117
  %v4119 = vcombine.low %v4063, %v4095
  %v4120 = vcombine.high %v4063, %v4095
  %v4121 = vcombine.low %v4070, %v4102
  %v4122 = vcombine.high %v4070, %v4102
  %v4123 = vcombine.low %v4079, %v4111
  %v4124 = vcombine.high %v4079, %v4111
  %v4125 = vcombine.low %v4086, %v4118
  %v4126 = vcombine.high %v4086, %v4118
  %v4127 = vcombine.low %v3248, %v3256
  %v4128 = vcombine.high %v3248, %v3256
  %v4130 = vunpack.c.l.s4 1983009808
  %v4131 = vunpack.c.0.s8 %v4130
  %v4132 = vlaneseq
  %v4133 = vshrl.u32 %v4132, 7
  %v4134 = vsub.s32 %v4131, %v4133
  %v4135 = vrot.slane %v4127, %v4134
  %v4137 = vunpack.c.l.s4 1983009808
  %v4138 = vunpack.c.0.s8 %v4137
  %v4139 = vlaneseq
  %v4140 = vshrl.u32 %v4139, 7
  %v4141 = vsub.s32 %v4138, %v4140
  %v4142 = vrot.slane %v4128, %v4141
  %v4143 = vcombine.low %v3252, %v3260
  %v4144 = vcombine.high %v3252, %v3260
  %v4146 = vunpack.c.l.s4 1983009808
  %v4147 = vunpack.c.0.s8 %v4146
  %v4148 = vlaneseq
  %v4149 = vshrl.u32 %v4148, 7
  %v4150 = vsub.s32 %v4147, %v4149
  %v4151 = vrot.slane %v4143, %v4150
  %v4153 = vunpack.c.l.s4 1983009808
  %v4154 = vunpack.c.0.s8 %v4153
  %v4155 = vlaneseq
  %v4156 = vshrl.u32 %v4155, 7
  %v4157 = vsub.s32 %v4154, %v4156
  %v4158 = vrot.slane %v4144, %v4157
  %v4159 = vcombine.low %v3264, %v3272
  %v4160 = vcombine.high %v3264, %v3272
  %v4162 = vunpack.c.l.s4 1983009808
  %v4163 = vunpack.c.0.s8 %v4162
  %v4164 = vlaneseq
  %v4165 = vshrl.u32 %v4164, 7
  %v4166 = vsub.s32 %v4163, %v4165
  %v4167 = vrot.slane %v4159, %v4166
  %v4169 = vunpack.c.l.s4 1983009808
  %v4170 = vunpack.c.0.s8 %v4169
  %v4171 = vlaneseq
  %v4172 = vshrl.u32 %v4171, 7
  %v4173 = vsub.s32 %v4170, %v4172
  %v4174 = vrot.slane %v4160, %v4173
  %v4175 = vcombine.low %v3268, %v3276
  %v4176 = vcombine.high %v3268, %v3276
  %v4178 = vunpack.c.l.s4 1983009808
  %v4179 = vunpack.c.0.s8 %v4178
  %v4180 = vlaneseq
  %v4181 = vshrl.u32 %v4180, 7
  %v4182 = vsub.s32 %v4179, %v4181
  %v4183 = vrot.slane %v4175, %v4182
  %v4185 = vunpack.c.l.s4 1983009808
  %v4186 = vunpack.c.0.s8 %v4185
  %v4187 = vlaneseq
  %v4188 = vshrl.u32 %v4187, 7
  %v4189 = vsub.s32 %v4186, %v4188
  %v4190 = vrot.slane %v4176, %v4189
  %v4191 = vcombine.low %v4135, %v4151
  %v4192 = vcombine.high %v4135, %v4151
  %v4194 = vunpack.c.l.s4 1934713408
  %v4195 = vunpack.c.0.s8 %v4194
  %v4196 = vlaneseq
  %v4197 = vshrl.u32 %v4196, 7
  %v4198 = vsub.s32 %v4195, %v4197
  %v4199 = vrot.slane %v4191, %v4198
  %v4201 = vunpack.c.l.s4 1934713408
  %v4202 = vunpack.c.0.s8 %v4201
  %v4203 = vlaneseq
  %v4204 = vshrl.u32 %v4203, 7
  %v4205 = vsub.s32 %v4202, %v4204
  %v4206 = vrot.slane %v4192, %v4205
  %v4207 = vcombine.low %v4142, %v4158
  %v4208 = vcombine.high %v4142, %v4158
  %v4210 = vunpack.c.l.s4 1934713408
  %v4211 = vunpack.c.0.s8 %v4210
  %v4212 = vlaneseq
  %v4213 = vshrl.u32 %v4212, 7
  %v4214 = vsub.s32 %v4211, %v4213
  %v4215 = vrot.slane %v4207, %v4214
  %v4217 = vunpack.c.l.s4 1934713408
  %v4218 = vunpack.c.0.s8 %v4217
  %v4219 = vlaneseq
  %v4220 = vshrl.u32 %v4219, 7
  %v4221 = vsub.s32 %v4218, %v4220
  %v4222 = vrot.slane %v4208, %v4221
  %v4223 = vcombine.low %v4167, %v4183
  %v4224 = vcombine.high %v4167, %v4183
  %v4226 = vunpack.c.l.s4 1934713408
  %v4227 = vunpack.c.0.s8 %v4226
  %v4228 = vlaneseq
  %v4229 = vshrl.u32 %v4228, 7
  %v4230 = vsub.s32 %v4227, %v4229
  %v4231 = vrot.slane %v4223, %v4230
  %v4233 = vunpack.c.l.s4 1934713408
  %v4234 = vunpack.c.0.s8 %v4233
  %v4235 = vlaneseq
  %v4236 = vshrl.u32 %v4235, 7
  %v4237 = vsub.s32 %v4234, %v4236
  %v4238 = vrot.slane %v4224, %v4237
  %v4239 = vcombine.low %v4174, %v4190
  %v4240 = vcombine.high %v4174, %v4190
  %v4242 = vunpack.c.l.s4 1934713408
  %v4243 = vunpack.c.0.s8 %v4242
  %v4244 = vlaneseq
  %v4245 = vshrl.u32 %v4244, 7
  %v4246 = vsub.s32 %v4243, %v4245
  %v4247 = vrot.slane %v4239, %v4246
  %v4249 = vunpack.c.l.s4 1934713408
  %v4250 = vunpack.c.0.s8 %v4249
  %v4251 = vlaneseq
  %v4252 = vshrl.u32 %v4251, 7
  %v4253 = vsub.s32 %v4250, %v4252
  %v4254 = vrot.slane %v4240, %v4253
  %v4255 = vcombine.low %v4199, %v4231
  %v4256 = vcombine.high %v4199, %v4231
  %v4257 = vcombine.low %v4206, %v4238
  %v4258 = vcombine.high %v4206, %v4238
  %v4259 = vcombine.low %v4215, %v4247
  %v4260 = vcombine.high %v4215, %v4247
  %v4261 = vcombine.low %v4222, %v4254
  %v4262 = vcombine.high %v4222, %v4254
  %v4263 = vcombine.low %v3280, %v3288
  %v4264 = vcombine.high %v3280, %v3288
  %v4266 = vunpack.c.l.s4 1983009808
  %v4267 = vunpack.c.0.s8 %v4266
  %v4268 = vlaneseq
  %v4269 = vshrl.u32 %v4268, 7
  %v4270 = vsub.s32 %v4267, %v4269
  %v4271 = vrot.slane %v4263, %v4270
  %v4273 = vunpack.c.l.s4 1983009808
  %v4274 = vunpack.c.0.s8 %v4273
  %v4275 = vlaneseq
  %v4276 = vshrl.u32 %v4275, 7
  %v4277 = vsub.s32 %v4274, %v4276
  %v4278 = vrot.slane %v4264, %v4277
  %v4279 = vcombine.low %v3284, %v3292
  %v4280 = vcombine.high %v3284, %v3292
  %v4282 = vunpack.c.l.s4 1983009808
  %v4283 = vunpack.c.0.s8 %v4282
  %v4284 = vlaneseq
  %v4285 = vshrl.u32 %v4284, 7
  %v4286 = vsub.s32 %v4283, %v4285
  %v4287 = vrot.slane %v4279, %v4286
  %v4289 = vunpack.c.l.s4 1983009808
  %v4290 = vunpack.c.0.s8 %v4289
  %v4291 = vlaneseq
  %v4292 = vshrl.u32 %v4291, 7
  %v4293 = vsub.s32 %v4290, %v4292
  %v4294 = vrot.slane %v4280, %v4293
  %v4295 = vcombine.low %v3296, %v3304
  %v4296 = vcombine.high %v3296, %v3304
  %v4298 = vunpack.c.l.s4 1983009808
  %v4299 = vunpack.c.0.s8 %v4298
  %v4300 = vlaneseq
  %v4301 = vshrl.u32 %v4300, 7
  %v4302 = vsub.s32 %v4299, %v4301
  %v4303 = vrot.slane %v4295, %v4302
  %v4305 = vunpack.c.l.s4 1983009808
  %v4306 = vunpack.c.0.s8 %v4305
  %v4307 = vlaneseq
  %v4308 = vshrl.u32 %v4307, 7
  %v4309 = vsub.s32 %v4306, %v4308
  %v4310 = vrot.slane %v4296, %v4309
  %v4311 = vcombine.low %v3300, %v3308
  %v4312 = vcombine.high %v3300, %v3308
  %v4314 = vunpack.c.l.s4 1983009808
  %v4315 = vunpack.c.0.s8 %v4314
  %v4316 = vlaneseq
  %v4317 = vshrl.u32 %v4316, 7
  %v4318 = vsub.s32 %v4315, %v4317
  %v4319 = vrot.slane %v4311, %v4318
  %v4321 = vunpack.c.l.s4 1983009808
  %v4322 = vunpack.c.0.s8 %v4321
  %v4323 = vlaneseq
  %v4324 = vshrl.u32 %v4323, 7
  %v4325 = vsub.s32 %v4322, %v4324
  %v4326 = vrot.slane %v4312, %v4325
  %v4327 = vcombine.low %v4271, %v4287
  %v4328 = vcombine.high %v4271, %v4287
  %v4330 = vunpack.c.l.s4 1934713408
  %v4331 = vunpack.c.0.s8 %v4330
  %v4332 = vlaneseq
  %v4333 = vshrl.u32 %v4332, 7
  %v4334 = vsub.s32 %v4331, %v4333
  %v4335 = vrot.slane %v4327, %v4334
  %v4337 = vunpack.c.l.s4 1934713408
  %v4338 = vunpack.c.0.s8 %v4337
  %v4339 = vlaneseq
  %v4340 = vshrl.u32 %v4339, 7
  %v4341 = vsub.s32 %v4338, %v4340
  %v4342 = vrot.slane %v4328, %v4341
  %v4343 = vcombine.low %v4278, %v4294
  %v4344 = vcombine.high %v4278, %v4294
  %v4346 = vunpack.c.l.s4 1934713408
  %v4347 = vunpack.c.0.s8 %v4346
  %v4348 = vlaneseq
  %v4349 = vshrl.u32 %v4348, 7
  %v4350 = vsub.s32 %v4347, %v4349
  %v4351 = vrot.slane %v4343, %v4350
  %v4353 = vunpack.c.l.s4 1934713408
  %v4354 = vunpack.c.0.s8 %v4353
  %v4355 = vlaneseq
  %v4356 = vshrl.u32 %v4355, 7
  %v4357 = vsub.s32 %v4354, %v4356
  %v4358 = vrot.slane %v4344, %v4357
  %v4359 = vcombine.low %v4303, %v4319
  %v4360 = vcombine.high %v4303, %v4319
  %v4362 = vunpack.c.l.s4 1934713408
  %v4363 = vunpack.c.0.s8 %v4362
  %v4364 = vlaneseq
  %v4365 = vshrl.u32 %v4364, 7
  %v4366 = vsub.s32 %v4363, %v4365
  %v4367 = vrot.slane %v4359, %v4366
  %v4369 = vunpack.c.l.s4 1934713408
  %v4370 = vunpack.c.0.s8 %v4369
  %v4371 = vlaneseq
  %v4372 = vshrl.u32 %v4371, 7
  %v4373 = vsub.s32 %v4370, %v4372
  %v4374 = vrot.slane %v4360, %v4373
  %v4375 = vcombine.low %v4310, %v4326
  %v4376 = vcombine.high %v4310, %v4326
  %v4378 = vunpack.c.l.s4 1934713408
  %v4379 = vunpack.c.0.s8 %v4378
  %v4380 = vlaneseq
  %v4381 = vshrl.u32 %v4380, 7
  %v4382 = vsub.s32 %v4379, %v4381
  %v4383 = vrot.slane %v4375, %v4382
  %v4385 = vunpack.c.l.s4 1934713408
  %v4386 = vunpack.c.0.s8 %v4385
  %v4387 = vlaneseq
  %v4388 = vshrl.u32 %v4387, 7
  %v4389 = vsub.s32 %v4386, %v4388
  %v4390 = vrot.slane %v4376, %v4389
  %v4391 = vcombine.low %v4335, %v4367
  %v4392 = vcombine.high %v4335, %v4367
  %v4393 = vcombine.low %v4342, %v4374
  %v4394 = vcombine.high %v4342, %v4374
  %v4395 = vcombine.low %v4351, %v4383
  %v4396 = vcombine.high %v4351, %v4383
  %v4397 = vcombine.low %v4358, %v4390
  %v4398 = vcombine.high %v4358, %v4390
  %v4399 = vcombine.low %v3185, %v3193
  %v4400 = vcombine.high %v3185, %v3193
  %v4402 = vunpack.c.l.s4 1983009808
  %v4403 = vunpack.c.0.s8 %v4402
  %v4404 = vlaneseq
  %v4405 = vshrl.u32 %v4404, 7
  %v4406 = vsub.s32 %v4403, %v4405
  %v4407 = vrot.slane %v4399, %v4406
  %v4409 = vunpack.c.l.s4 1983009808
  %v4410 = vunpack.c.0.s8 %v4409
  %v4411 = vlaneseq
  %v4412 = vshrl.u32 %v4411, 7
  %v4413 = vsub.s32 %v4410, %v4412
  %v4414 = vrot.slane %v4400, %v4413
  %v4415 = vcombine.low %v3189, %v3197
  %v4416 = vcombine.high %v3189, %v3197
  %v4418 = vunpack.c.l.s4 1983009808
  %v4419 = vunpack.c.0.s8 %v4418
  %v4420 = vlaneseq
  %v4421 = vshrl.u32 %v4420, 7
  %v4422 = vsub.s32 %v4419, %v4421
  %v4423 = vrot.slane %v4415, %v4422
  %v4425 = vunpack.c.l.s4 1983009808
  %v4426 = vunpack.c.0.s8 %v4425
  %v4427 = vlaneseq
  %v4428 = vshrl.u32 %v4427, 7
  %v4429 = vsub.s32 %v4426, %v4428
  %v4430 = vrot.slane %v4416, %v4429
  %v4431 = vcombine.low %v3201, %v3209
  %v4432 = vcombine.high %v3201, %v3209
  %v4434 = vunpack.c.l.s4 1983009808
  %v4435 = vunpack.c.0.s8 %v4434
  %v4436 = vlaneseq
  %v4437 = vshrl.u32 %v4436, 7
  %v4438 = vsub.s32 %v4435, %v4437
  %v4439 = vrot.slane %v4431, %v4438
  %v4441 = vunpack.c.l.s4 1983009808
  %v4442 = vunpack.c.0.s8 %v4441
  %v4443 = vlaneseq
  %v4444 = vshrl.u32 %v4443, 7
  %v4445 = vsub.s32 %v4442, %v4444
  %v4446 = vrot.slane %v4432, %v4445
  %v4447 = vcombine.low %v3205, %v3213
  %v4448 = vcombine.high %v3205, %v3213
  %v4450 = vunpack.c.l.s4 1983009808
  %v4451 = vunpack.c.0.s8 %v4450
  %v4452 = vlaneseq
  %v4453 = vshrl.u32 %v4452, 7
  %v4454 = vsub.s32 %v4451, %v4453
  %v4455 = vrot.slane %v4447, %v4454
  %v4457 = vunpack.c.l.s4 1983009808
  %v4458 = vunpack.c.0.s8 %v4457
  %v4459 = vlaneseq
  %v4460 = vshrl.u32 %v4459, 7
  %v4461 = vsub.s32 %v4458, %v4460
  %v4462 = vrot.slane %v4448, %v4461
  %v4463 = vcombine.low %v4407, %v4423
  %v4464 = vcombine.high %v4407, %v4423
  %v4466 = vunpack.c.l.s4 1934713408
  %v4467 = vunpack.c.0.s8 %v4466
  %v4468 = vlaneseq
  %v4469 = vshrl.u32 %v4468, 7
  %v4470 = vsub.s32 %v4467, %v4469
  %v4471 = vrot.slane %v4463, %v4470
  %v4473 = vunpack.c.l.s4 1934713408
  %v4474 = vunpack.c.0.s8 %v4473
  %v4475 = vlaneseq
  %v4476 = vshrl.u32 %v4475, 7
  %v4477 = vsub.s32 %v4474, %v4476
  %v4478 = vrot.slane %v4464, %v4477
  %v4479 = vcombine.low %v4414, %v4430
  %v4480 = vcombine.high %v4414, %v4430
  %v4482 = vunpack.c.l.s4 1934713408
  %v4483 = vunpack.c.0.s8 %v4482
  %v4484 = vlaneseq
  %v4485 = vshrl.u32 %v4484, 7
  %v4486 = vsub.s32 %v4483, %v4485
  %v4487 = vrot.slane %v4479, %v4486
  %v4489 = vunpack.c.l.s4 1934713408
  %v4490 = vunpack.c.0.s8 %v4489
  %v4491 = vlaneseq
  %v4492 = vshrl.u32 %v4491, 7
  %v4493 = vsub.s32 %v4490, %v4492
  %v4494 = vrot.slane %v4480, %v4493
  %v4495 = vcombine.low %v4439, %v4455
  %v4496 = vcombine.high %v4439, %v4455
  %v4498 = vunpack.c.l.s4 1934713408
  %v4499 = vunpack.c.0.s8 %v4498
  %v4500 = vlaneseq
  %v4501 = vshrl.u32 %v4500, 7
  %v4502 = vsub.s32 %v4499, %v4501
  %v4503 = vrot.slane %v4495, %v4502
  %v4505 = vunpack.c.l.s4 1934713408
  %v4506 = vunpack.c.0.s8 %v4505
  %v4507 = vlaneseq
  %v4508 = vshrl.u32 %v4507, 7
  %v4509 = vsub.s32 %v4506, %v4508
  %v4510 = vrot.slane %v4496, %v4509
  %v4511 = vcombine.low %v4446, %v4462
  %v4512 = vcombine.high %v4446, %v4462
  %v4514 = vunpack.c.l.s4 1934713408
  %v4515 = vunpack.c.0.s8 %v4514
  %v4516 = vlaneseq
  %v4517 = vshrl.u32 %v4516, 7
  %v4518 = vsub.s32 %v4515, %v4517
  %v4519 = vrot.slane %v4511, %v4518
  %v4521 = vunpack.c.l.s4 1934713408
  %v4522 = vunpack.c.0.s8 %v4521
  %v4523 = vlaneseq
  %v4524 = vshrl.u32 %v4523, 7
  %v4525 = vsub.s32 %v4522, %v4524
  %v4526 = vrot.slane %v4512, %v4525
  %v4527 = vcombine.low %v4471, %v4503
  %v4528 = vcombine.high %v4471, %v4503
  %v4529 = vcombine.low %v4478, %v4510
  %v4530 = vcombine.high %v4478, %v4510
  %v4531 = vcombine.low %v4487, %v4519
  %v4532 = vcombine.high %v4487, %v4519
  %v4533 = vcombine.low %v4494, %v4526
  %v4534 = vcombine.high %v4494, %v4526
  %v4535 = vcombine.low %v3217, %v3225
  %v4536 = vcombine.high %v3217, %v3225
  %v4538 = vunpack.c.l.s4 1983009808
  %v4539 = vunpack.c.0.s8 %v4538
  %v4540 = vlaneseq
  %v4541 = vshrl.u32 %v4540, 7
  %v4542 = vsub.s32 %v4539, %v4541
  %v4543 = vrot.slane %v4535, %v4542
  %v4545 = vunpack.c.l.s4 1983009808
  %v4546 = vunpack.c.0.s8 %v4545
  %v4547 = vlaneseq
  %v4548 = vshrl.u32 %v4547, 7
  %v4549 = vsub.s32 %v4546, %v4548
  %v4550 = vrot.slane %v4536, %v4549
  %v4551 = vcombine.low %v3221, %v3229
  %v4552 = vcombine.high %v3221, %v3229
  %v4554 = vunpack.c.l.s4 1983009808
  %v4555 = vunpack.c.0.s8 %v4554
  %v4556 = vlaneseq
  %v4557 = vshrl.u32 %v4556, 7
  %v4558 = vsub.s32 %v4555, %v4557
  %v4559 = vrot.slane %v4551, %v4558
  %v4561 = vunpack.c.l.s4 1983009808
  %v4562 = vunpack.c.0.s8 %v4561
  %v4563 = vlaneseq
  %v4564 = vshrl.u32 %v4563, 7
  %v4565 = vsub.s32 %v4562, %v4564
  %v4566 = vrot.slane %v4552, %v4565
  %v4567 = vcombine.low %v3233, %v3241
  %v4568 = vcombine.high %v3233, %v3241
  %v4570 = vunpack.c.l.s4 1983009808
  %v4571 = vunpack.c.0.s8 %v4570
  %v4572 = vlaneseq
  %v4573 = vshrl.u32 %v4572, 7
  %v4574 = vsub.s32 %v4571, %v4573
  %v4575 = vrot.slane %v4567, %v4574
  %v4577 = vunpack.c.l.s4 1983009808
  %v4578 = vunpack.c.0.s8 %v4577
  %v4579 = vlaneseq
  %v4580 = vshrl.u32 %v4579, 7
  %v4581 = vsub.s32 %v4578, %v4580
  %v4582 = vrot.slane %v4568, %v4581
  %v4583 = vcombine.low %v3237, %v3245
  %v4584 = vcombine.high %v3237, %v3245
  %v4586 = vunpack.c.l.s4 1983009808
  %v4587 = vunpack.c.0.s8 %v4586
  %v4588 = vlaneseq
  %v4589 = vshrl.u32 %v4588, 7
  %v4590 = vsub.s32 %v4587, %v4589
  %v4591 = vrot.slane %v4583, %v4590
  %v4593 = vunpack.c.l.s4 1983009808
  %v4594 = vunpack.c.0.s8 %v4593
  %v4595 = vlaneseq
  %v4596 = vshrl.u32 %v4595, 7
  %v4597 = vsub.s32 %v4594, %v4596
  %v4598 = vrot.slane %v4584, %v4597
  %v4599 = vcombine.low %v4543, %v4559
  %v4600 = vcombine.high %v4543, %v4559
  %v4602 = vunpack.c.l.s4 1934713408
  %v4603 = vunpack.c.0.s8 %v4602
  %v4604 = vlaneseq
  %v4605 = vshrl.u32 %v4604, 7
  %v4606 = vsub.s32 %v4603, %v4605
  %v4607 = vrot.slane %v4599, %v4606
  %v4609 = vunpack.c.l.s4 1934713408
  %v4610 = vunpack.c.0.s8 %v4609
  %v4611 = vlaneseq
  %v4612 = vshrl.u32 %v4611, 7
  %v4613 = vsub.s32 %v4610, %v4612
  %v4614 = vrot.slane %v4600, %v4613
  %v4615 = vcombine.low %v4550, %v4566
  %v4616 = vcombine.high %v4550, %v4566
  %v4618 = vunpack.c.l.s4 1934713408
  %v4619 = vunpack.c.0.s8 %v4618
  %v4620 = vlaneseq
  %v4621 = vshrl.u32 %v4620, 7
  %v4622 = vsub.s32 %v4619, %v4621
  %v4623 = vrot.slane %v4615, %v4622
  %v4625 = vunpack.c.l.s4 1934713408
  %v4626 = vunpack.c.0.s8 %v4625
  %v4627 = vlaneseq
  %v4628 = vshrl.u32 %v4627, 7
  %v4629 = vsub.s32 %v4626, %v4628
  %v4630 = vrot.slane %v4616, %v4629
  %v4631 = vcombine.low %v4575, %v4591
  %v4632 = vcombine.high %v4575, %v4591
  %v4634 = vunpack.c.l.s4 1934713408
  %v4635 = vunpack.c.0.s8 %v4634
  %v4636 = vlaneseq
  %v4637 = vshrl.u32 %v4636, 7
  %v4638 = vsub.s32 %v4635, %v4637
  %v4639 = vrot.slane %v4631, %v4638
  %v4641 = vunpack.c.l.s4 1934713408
  %v4642 = vunpack.c.0.s8 %v4641
  %v4643 = vlaneseq
  %v4644 = vshrl.u32 %v4643, 7
  %v4645 = vsub.s32 %v4642, %v4644
  %v4646 = vrot.slane %v4632, %v4645
  %v4647 = vcombine.low %v4582, %v4598
  %v4648 = vcombine.high %v4582, %v4598
  %v4650 = vunpack.c.l.s4 1934713408
  %v4651 = vunpack.c.0.s8 %v4650
  %v4652 = vlaneseq
  %v4653 = vshrl.u32 %v4652, 7
  %v4654 = vsub.s32 %v4651, %v4653
  %v4655 = vrot.slane %v4647, %v4654
  %v4657 = vunpack.c.l.s4 1934713408
  %v4658 = vunpack.c.0.s8 %v4657
  %v4659 = vlaneseq
  %v4660 = vshrl.u32 %v4659, 7
  %v4661 = vsub.s32 %v4658, %v4660
  %v4662 = vrot.slane %v4648, %v4661
  %v4663 = vcombine.low %v4607, %v4639
  %v4664 = vcombine.high %v4607, %v4639
  %v4665 = vcombine.low %v4614, %v4646
  %v4666 = vcombine.high %v4614, %v4646
  %v4667 = vcombine.low %v4623, %v4655
  %v4668 = vcombine.high %v4623, %v4655
  %v4669 = vcombine.low %v4630, %v4662
  %v4670 = vcombine.high %v4630, %v4662
  %v4671 = vcombine.low %v3249, %v3257
  %v4672 = vcombine.high %v3249, %v3257
  %v4674 = vunpack.c.l.s4 1983009808
  %v4675 = vunpack.c.0.s8 %v4674
  %v4676 = vlaneseq
  %v4677 = vshrl.u32 %v4676, 7
  %v4678 = vsub.s32 %v4675, %v4677
  %v4679 = vrot.slane %v4671, %v4678
  %v4681 = vunpack.c.l.s4 1983009808
  %v4682 = vunpack.c.0.s8 %v4681
  %v4683 = vlaneseq
  %v4684 = vshrl.u32 %v4683, 7
  %v4685 = vsub.s32 %v4682, %v4684
  %v4686 = vrot.slane %v4672, %v4685
  %v4687 = vcombine.low %v3253, %v3261
  %v4688 = vcombine.high %v3253, %v3261
  %v4690 = vunpack.c.l.s4 1983009808
  %v4691 = vunpack.c.0.s8 %v4690
  %v4692 = vlaneseq
  %v4693 = vshrl.u32 %v4692, 7
  %v4694 = vsub.s32 %v4691, %v4693
  %v4695 = vrot.slane %v4687, %v4694
  %v4697 = vunpack.c.l.s4 1983009808
  %v4698 = vunpack.c.0.s8 %v4697
  %v4699 = vlaneseq
  %v4700 = vshrl.u32 %v4699, 7
  %v4701 = vsub.s32 %v4698, %v4700
  %v4702 = vrot.slane %v4688, %v4701
  %v4703 = vcombine.low %v3265, %v3273
  %v4704 = vcombine.high %v3265, %v3273
  %v4706 = vunpack.c.l.s4 1983009808
  %v4707 = vunpack.c.0.s8 %v4706
  %v4708 = vlaneseq
  %v4709 = vshrl.u32 %v4708, 7
  %v4710 = vsub.s32 %v4707, %v4709
  %v4711 = vrot.slane %v4703, %v4710
  %v4713 = vunpack.c.l.s4 1983009808
  %v4714 = vunpack.c.0.s8 %v4713
  %v4715 = vlaneseq
  %v4716 = vshrl.u32 %v4715, 7
  %v4717 = vsub.s32 %v4714, %v4716
  %v4718 = vrot.slane %v4704, %v4717
  %v4719 = vcombine.low %v3269, %v3277
  %v4720 = vcombine.high %v3269, %v3277
  %v4722 = vunpack.c.l.s4 1983009808
  %v4723 = vunpack.c.0.s8 %v4722
  %v4724 = vlaneseq
  %v4725 = vshrl.u32 %v4724, 7
  %v4726 = vsub.s32 %v4723, %v4725
  %v4727 = vrot.slane %v4719, %v4726
  %v4729 = vunpack.c.l.s4 1983009808
  %v4730 = vunpack.c.0.s8 %v4729
  %v4731 = vlaneseq
  %v4732 = vshrl.u32 %v4731, 7
  %v4733 = vsub.s32 %v4730, %v4732
  %v4734 = vrot.slane %v4720, %v4733
  %v4735 = vcombine.low %v4679, %v4695
  %v4736 = vcombine.high %v4679, %v4695
  %v4738 = vunpack.c.l.s4 1934713408
  %v4739 = vunpack.c.0.s8 %v4738
  %v4740 = vlaneseq
  %v4741 = vshrl.u32 %v4740, 7
  %v4742 = vsub.s32 %v4739, %v4741
  %v4743 = vrot.slane %v4735, %v4742
  %v4745 = vunpack.c.l.s4 1934713408
  %v4746 = vunpack.c.0.s8 %v4745
  %v4747 = vlaneseq
  %v4748 = vshrl.u32 %v4747, 7
  %v4749 = vsub.s32 %v4746, %v4748
  %v4750 = vrot.slane %v4736, %v4749
  %v4751 = vcombine.low %v4686, %v4702
  %v4752 = vcombine.high %v4686, %v4702
  %v4754 = vunpack.c.l.s4 1934713408
  %v4755 = vunpack.c.0.s8 %v4754
  %v4756 = vlaneseq
  %v4757 = vshrl.u32 %v4756, 7
  %v4758 = vsub.s32 %v4755, %v4757
  %v4759 = vrot.slane %v4751, %v4758
  %v4761 = vunpack.c.l.s4 1934713408
  %v4762 = vunpack.c.0.s8 %v4761
  %v4763 = vlaneseq
  %v4764 = vshrl.u32 %v4763, 7
  %v4765 = vsub.s32 %v4762, %v4764
  %v4766 = vrot.slane %v4752, %v4765
  %v4767 = vcombine.low %v4711, %v4727
  %v4768 = vcombine.high %v4711, %v4727
  %v4770 = vunpack.c.l.s4 1934713408
  %v4771 = vunpack.c.0.s8 %v4770
  %v4772 = vlaneseq
  %v4773 = vshrl.u32 %v4772, 7
  %v4774 = vsub.s32 %v4771, %v4773
  %v4775 = vrot.slane %v4767, %v4774
  %v4777 = vunpack.c.l.s4 1934713408
  %v4778 = vunpack.c.0.s8 %v4777
  %v4779 = vlaneseq
  %v4780 = vshrl.u32 %v4779, 7
  %v4781 = vsub.s32 %v4778, %v4780
  %v4782 = vrot.slane %v4768, %v4781
  %v4783 = vcombine.low %v4718, %v4734
  %v4784 = vcombine.high %v4718, %v4734
  %v4786 = vunpack.c.l.s4 1934713408
  %v4787 = vunpack.c.0.s8 %v4786
  %v4788 = vlaneseq
  %v4789 = vshrl.u32 %v4788, 7
  %v4790 = vsub.s32 %v4787, %v4789
  %v4791 = vrot.slane %v4783, %v4790
  %v4793 = vunpack.c.l.s4 1934713408
  %v4794 = vunpack.c.0.s8 %v4793
  %v4795 = vlaneseq
  %v4796 = vshrl.u32 %v4795, 7
  %v4797 = vsub.s32 %v4794, %v4796
  %v4798 = vrot.slane %v4784, %v4797
  %v4799 = vcombine.low %v4743, %v4775
  %v4800 = vcombine.high %v4743, %v4775
  %v4801 = vcombine.low %v4750, %v4782
  %v4802 = vcombine.high %v4750, %v4782
  %v4803 = vcombine.low %v4759, %v4791
  %v4804 = vcombine.high %v4759, %v4791
  %v4805 = vcombine.low %v4766, %v4798
  %v4806 = vcombine.high %v4766, %v4798
  %v4807 = vcombine.low %v3281, %v3289
  %v4808 = vcombine.high %v3281, %v3289
  %v4810 = vunpack.c.l.s4 1983009808
  %v4811 = vunpack.c.0.s8 %v4810
  %v4812 = vlaneseq
  %v4813 = vshrl.u32 %v4812, 7
  %v4814 = vsub.s32 %v4811, %v4813
  %v4815 = vrot.slane %v4807, %v4814
  %v4817 = vunpack.c.l.s4 1983009808
  %v4818 = vunpack.c.0.s8 %v4817
  %v4819 = vlaneseq
  %v4820 = vshrl.u32 %v4819, 7
  %v4821 = vsub.s32 %v4818, %v4820
  %v4822 = vrot.slane %v4808, %v4821
  %v4823 = vcombine.low %v3285, %v3293
  %v4824 = vcombine.high %v3285, %v3293
  %v4826 = vunpack.c.l.s4 1983009808
  %v4827 = vunpack.c.0.s8 %v4826
  %v4828 = vlaneseq
  %v4829 = vshrl.u32 %v4828, 7
  %v4830 = vsub.s32 %v4827, %v4829
  %v4831 = vrot.slane %v4823, %v4830
  %v4833 = vunpack.c.l.s4 1983009808
  %v4834 = vunpack.c.0.s8 %v4833
  %v4835 = vlaneseq
  %v4836 = vshrl.u32 %v4835, 7
  %v4837 = vsub.s32 %v4834, %v4836
  %v4838 = vrot.slane %v4824, %v4837
  %v4839 = vcombine.low %v3297, %v3305
  %v4840 = vcombine.high %v3297, %v3305
  %v4842 = vunpack.c.l.s4 1983009808
  %v4843 = vunpack.c.0.s8 %v4842
  %v4844 = vlaneseq
  %v4845 = vshrl.u32 %v4844, 7
  %v4846 = vsub.s32 %v4843, %v4845
  %v4847 = vrot.slane %v4839, %v4846
  %v4849 = vunpack.c.l.s4 1983009808
  %v4850 = vunpack.c.0.s8 %v4849
  %v4851 = vlaneseq
  %v4852 = vshrl.u32 %v4851, 7
  %v4853 = vsub.s32 %v4850, %v4852
  %v4854 = vrot.slane %v4840, %v4853
  %v4855 = vcombine.low %v3301, %v3309
  %v4856 = vcombine.high %v3301, %v3309
  %v4858 = vunpack.c.l.s4 1983009808
  %v4859 = vunpack.c.0.s8 %v4858
  %v4860 = vlaneseq
  %v4861 = vshrl.u32 %v4860, 7
  %v4862 = vsub.s32 %v4859, %v4861
  %v4863 = vrot.slane %v4855, %v4862
  %v4865 = vunpack.c.l.s4 1983009808
  %v4866 = vunpack.c.0.s8 %v4865
  %v4867 = vlaneseq
  %v4868 = vshrl.u32 %v4867, 7
  %v4869 = vsub.s32 %v4866, %v4868
  %v4870 = vrot.slane %v4856, %v4869
  %v4871 = vcombine.low %v4815, %v4831
  %v4872 = vcombine.high %v4815, %v4831
  %v4874 = vunpack.c.l.s4 1934713408
  %v4875 = vunpack.c.0.s8 %v4874
  %v4876 = vlaneseq
  %v4877 = vshrl.u32 %v4876, 7
  %v4878 = vsub.s32 %v4875, %v4877
  %v4879 = vrot.slane %v4871, %v4878
  %v4881 = vunpack.c.l.s4 1934713408
  %v4882 = vunpack.c.0.s8 %v4881
  %v4883 = vlaneseq
  %v4884 = vshrl.u32 %v4883, 7
  %v4885 = vsub.s32 %v4882, %v4884
  %v4886 = vrot.slane %v4872, %v4885
  %v4887 = vcombine.low %v4822, %v4838
  %v4888 = vcombine.high %v4822, %v4838
  %v4890 = vunpack.c.l.s4 1934713408
  %v4891 = vunpack.c.0.s8 %v4890
  %v4892 = vlaneseq
  %v4893 = vshrl.u32 %v4892, 7
  %v4894 = vsub.s32 %v4891, %v4893
  %v4895 = vrot.slane %v4887, %v4894
  %v4897 = vunpack.c.l.s4 1934713408
  %v4898 = vunpack.c.0.s8 %v4897
  %v4899 = vlaneseq
  %v4900 = vshrl.u32 %v4899, 7
  %v4901 = vsub.s32 %v4898, %v4900
  %v4902 = vrot.slane %v4888, %v4901
  %v4903 = vcombine.low %v4847, %v4863
  %v4904 = vcombine.high %v4847, %v4863
  %v4906 = vunpack.c.l.s4 1934713408
  %v4907 = vunpack.c.0.s8 %v4906
  %v4908 = vlaneseq
  %v4909 = vshrl.u32 %v4908, 7
  %v4910 = vsub.s32 %v4907, %v4909
  %v4911 = vrot.slane %v4903, %v4910
  %v4913 = vunpack.c.l.s4 1934713408
  %v4914 = vunpack.c.0.s8 %v4913
  %v4915 = vlaneseq
  %v4916 = vshrl.u32 %v4915, 7
  %v4917 = vsub.s32 %v4914, %v4916
  %v4918 = vrot.slane %v4904, %v4917
  %v4919 = vcombine.low %v4854, %v4870
  %v4920 = vcombine.high %v4854, %v4870
  %v4922 = vunpack.c.l.s4 1934713408
  %v4923 = vunpack.c.0.s8 %v4922
  %v4924 = vlaneseq
  %v4925 = vshrl.u32 %v4924, 7
  %v4926 = vsub.s32 %v4923, %v4925
  %v4927 = vrot.slane %v4919, %v4926
  %v4929 = vunpack.c.l.s4 1934713408
  %v4930 = vunpack.c.0.s8 %v4929
  %v4931 = vlaneseq
  %v4932 = vshrl.u32 %v4931, 7
  %v4933 = vsub.s32 %v4930, %v4932
  %v4934 = vrot.slane %v4920, %v4933
  %v4935 = vcombine.low %v4879, %v4911
  %v4936 = vcombine.high %v4879, %v4911
  %v4937 = vcombine.low %v4886, %v4918
  %v4938 = vcombine.high %v4886, %v4918
  %v4939 = vcombine.low %v4895, %v4927
  %v4940 = vcombine.high %v4895, %v4927
  %v4941 = vcombine.low %v4902, %v4934
  %v4942 = vcombine.high %v4902, %v4934
  %v4943 = vcombine.low %v3186, %v3194
  %v4944 = vcombine.high %v3186, %v3194
  %v4946 = vunpack.c.l.s4 1983009808
  %v4947 = vunpack.c.0.s8 %v4946
  %v4948 = vlaneseq
  %v4949 = vshrl.u32 %v4948, 7
  %v4950 = vsub.s32 %v4947, %v4949
  %v4951 = vrot.slane %v4943, %v4950
  %v4953 = vunpack.c.l.s4 1983009808
  %v4954 = vunpack.c.0.s8 %v4953
  %v4955 = vlaneseq
  %v4956 = vshrl.u32 %v4955, 7
  %v4957 = vsub.s32 %v4954, %v4956
  %v4958 = vrot.slane %v4944, %v4957
  %v4959 = vcombine.low %v3190, %v3198
  %v4960 = vcombine.high %v3190, %v3198
  %v4962 = vunpack.c.l.s4 1983009808
  %v4963 = vunpack.c.0.s8 %v4962
  %v4964 = vlaneseq
  %v4965 = vshrl.u32 %v4964, 7
  %v4966 = vsub.s32 %v4963, %v4965
  %v4967 = vrot.slane %v4959, %v4966
  %v4969 = vunpack.c.l.s4 1983009808
  %v4970 = vunpack.c.0.s8 %v4969
  %v4971 = vlaneseq
  %v4972 = vshrl.u32 %v4971, 7
  %v4973 = vsub.s32 %v4970, %v4972
  %v4974 = vrot.slane %v4960, %v4973
  %v4975 = vcombine.low %v3202, %v3210
  %v4976 = vcombine.high %v3202, %v3210
  %v4978 = vunpack.c.l.s4 1983009808
  %v4979 = vunpack.c.0.s8 %v4978
  %v4980 = vlaneseq
  %v4981 = vshrl.u32 %v4980, 7
  %v4982 = vsub.s32 %v4979, %v4981
  %v4983 = vrot.slane %v4975, %v4982
  %v4985 = vunpack.c.l.s4 1983009808
  %v4986 = vunpack.c.0.s8 %v4985
  %v4987 = vlaneseq
  %v4988 = vshrl.u32 %v4987, 7
  %v4989 = vsub.s32 %v4986, %v4988
  %v4990 = vrot.slane %v4976, %v4989
  %v4991 = vcombine.low %v3206, %v3214
  %v4992 = vcombine.high %v3206, %v3214
  %v4994 = vunpack.c.l.s4 1983009808
  %v4995 = vunpack.c.0.s8 %v4994
  %v4996 = vlaneseq
  %v4997 = vshrl.u32 %v4996, 7
  %v4998 = vsub.s32 %v4995, %v4997
  %v4999 = vrot.slane %v4991, %v4998
  %v5001 = vunpack.c.l.s4 1983009808
  %v5002 = vunpack.c.0.s8 %v5001
  %v5003 = vlaneseq
  %v5004 = vshrl.u32 %v5003, 7
  %v5005 = vsub.s32 %v5002, %v5004
  %v5006 = vrot.slane %v4992, %v5005
  %v5007 = vcombine.low %v4951, %v4967
  %v5008 = vcombine.high %v4951, %v4967
  %v5010 = vunpack.c.l.s4 1934713408
  %v5011 = vunpack.c.0.s8 %v5010
  %v5012 = vlaneseq
  %v5013 = vshrl.u32 %v5012, 7
  %v5014 = vsub.s32 %v5011, %v5013
  %v5015 = vrot.slane %v5007, %v5014
  %v5017 = vunpack.c.l.s4 1934713408
  %v5018 = vunpack.c.0.s8 %v5017
  %v5019 = vlaneseq
  %v5020 = vshrl.u32 %v5019, 7
  %v5021 = vsub.s32 %v5018, %v5020
  %v5022 = vrot.slane %v5008, %v5021
  %v5023 = vcombine.low %v4958, %v4974
  %v5024 = vcombine.high %v4958, %v4974
  %v5026 = vunpack.c.l.s4 1934713408
  %v5027 = vunpack.c.0.s8 %v5026
  %v5028 = vlaneseq
  %v5029 = vshrl.u32 %v5028, 7
  %v5030 = vsub.s32 %v5027, %v5029
  %v5031 = vrot.slane %v5023, %v5030
  %v5033 = vunpack.c.l.s4 1934713408
  %v5034 = vunpack.c.0.s8 %v5033
  %v5035 = vlaneseq
  %v5036 = vshrl.u32 %v5035, 7
  %v5037 = vsub.s32 %v5034, %v5036
  %v5038 = vrot.slane %v5024, %v5037
  %v5039 = vcombine.low %v4983, %v4999
  %v5040 = vcombine.high %v4983, %v4999
  %v5042 = vunpack.c.l.s4 1934713408
  %v5043 = vunpack.c.0.s8 %v5042
  %v5044 = vlaneseq
  %v5045 = vshrl.u32 %v5044, 7
  %v5046 = vsub.s32 %v5043, %v5045
  %v5047 = vrot.slane %v5039, %v5046
  %v5049 = vunpack.c.l.s4 1934713408
  %v5050 = vunpack.c.0.s8 %v5049
  %v5051 = vlaneseq
  %v5052 = vshrl.u32 %v5051, 7
  %v5053 = vsub.s32 %v5050, %v5052
  %v5054 = vrot.slane %v5040, %v5053
  %v5055 = vcombine.low %v4990, %v5006
  %v5056 = vcombine.high %v4990, %v5006
  %v5058 = vunpack.c.l.s4 1934713408
  %v5059 = vunpack.c.0.s8 %v5058
  %v5060 = vlaneseq
  %v5061 = vshrl.u32 %v5060, 7
  %v5062 = vsub.s32 %v5059, %v5061
  %v5063 = vrot.slane %v5055, %v5062
  %v5065 = vunpack.c.l.s4 1934713408
  %v5066 = vunpack.c.0.s8 %v5065
  %v5067 = vlaneseq
  %v5068 = vshrl.u32 %v5067, 7
  %v5069 = vsub.s32 %v5066, %v5068
  %v5070 = vrot.slane %v5056, %v5069
  %v5071 = vcombine.low %v5015, %v5047
  %v5072 = vcombine.high %v5015, %v5047
  %v5073 = vcombine.low %v5022, %v5054
  %v5074 = vcombine.high %v5022, %v5054
  %v5075 = vcombine.low %v5031, %v5063
  %v5076 = vcombine.high %v5031, %v5063
  %v5077 = vcombine.low %v5038, %v5070
  %v5078 = vcombine.high %v5038, %v5070
  %v5079 = vcombine.low %v3218, %v3226
  %v5080 = vcombine.high %v3218, %v3226
  %v5082 = vunpack.c.l.s4 1983009808
  %v5083 = vunpack.c.0.s8 %v5082
  %v5084 = vlaneseq
  %v5085 = vshrl.u32 %v5084, 7
  %v5086 = vsub.s32 %v5083, %v5085
  %v5087 = vrot.slane %v5079, %v5086
  %v5089 = vunpack.c.l.s4 1983009808
  %v5090 = vunpack.c.0.s8 %v5089
  %v5091 = vlaneseq
  %v5092 = vshrl.u32 %v5091, 7
  %v5093 = vsub.s32 %v5090, %v5092
  %v5094 = vrot.slane %v5080, %v5093
  %v5095 = vcombine.low %v3222, %v3230
  %v5096 = vcombine.high %v3222, %v3230
  %v5098 = vunpack.c.l.s4 1983009808
  %v5099 = vunpack.c.0.s8 %v5098
  %v5100 = vlaneseq
  %v5101 = vshrl.u32 %v5100, 7
  %v5102 = vsub.s32 %v5099, %v5101
  %v5103 = vrot.slane %v5095, %v5102
  %v5105 = vunpack.c.l.s4 1983009808
  %v5106 = vunpack.c.0.s8 %v5105
  %v5107 = vlaneseq
  %v5108 = vshrl.u32 %v5107, 7
  %v5109 = vsub.s32 %v5106, %v5108
  %v5110 = vrot.slane %v5096, %v5109
  %v5111 = vcombine.low %v3234, %v3242
  %v5112 = vcombine.high %v3234, %v3242
  %v5114 = vunpack.c.l.s4 1983009808
  %v5115 = vunpack.c.0.s8 %v5114
  %v5116 = vlaneseq
  %v5117 = vshrl.u32 %v5116, 7
  %v5118 = vsub.s32 %v5115, %v5117
  %v5119 = vrot.slane %v5111, %v5118
  %v5121 = vunpack.c.l.s4 1983009808
  %v5122 = vunpack.c.0.s8 %v5121
  %v5123 = vlaneseq
  %v5124 = vshrl.u32 %v5123, 7
  %v5125 = vsub.s32 %v5122, %v5124
  %v5126 = vrot.slane %v5112, %v5125
  %v5127 = vcombine.low %v3238, %v3246
  %v5128 = vcombine.high %v3238, %v3246
  %v5130 = vunpack.c.l.s4 1983009808
  %v5131 = vunpack.c.0.s8 %v5130
  %v5132 = vlaneseq
  %v5133 = vshrl.u32 %v5132, 7
  %v5134 = vsub.s32 %v5131, %v5133
  %v5135 = vrot.slane %v5127, %v5134
  %v5137 = vunpack.c.l.s4 1983009808
  %v5138 = vunpack.c.0.s8 %v5137
  %v5139 = vlaneseq
  %v5140 = vshrl.u32 %v5139, 7
  %v5141 = vsub.s32 %v5138, %v5140
  %v5142 = vrot.slane %v5128, %v5141
  %v5143 = vcombine.low %v5087, %v5103
  %v5144 = vcombine.high %v5087, %v5103
  %v5146 = vunpack.c.l.s4 1934713408
  %v5147 = vunpack.c.0.s8 %v5146
  %v5148 = vlaneseq
  %v5149 = vshrl.u32 %v5148, 7
  %v5150 = vsub.s32 %v5147, %v5149
  %v5151 = vrot.slane %v5143, %v5150
  %v5153 = vunpack.c.l.s4 1934713408
  %v5154 = vunpack.c.0.s8 %v5153
  %v5155 = vlaneseq
  %v5156 = vshrl.u32 %v5155, 7
  %v5157 = vsub.s32 %v5154, %v5156
  %v5158 = vrot.slane %v5144, %v5157
  %v5159 = vcombine.low %v5094, %v5110
  %v5160 = vcombine.high %v5094, %v5110
  %v5162 = vunpack.c.l.s4 1934713408
  %v5163 = vunpack.c.0.s8 %v5162
  %v5164 = vlaneseq
  %v5165 = vshrl.u32 %v5164, 7
  %v5166 = vsub.s32 %v5163, %v5165
  %v5167 = vrot.slane %v5159, %v5166
  %v5169 = vunpack.c.l.s4 1934713408
  %v5170 = vunpack.c.0.s8 %v5169
  %v5171 = vlaneseq
  %v5172 = vshrl.u32 %v5171, 7
  %v5173 = vsub.s32 %v5170, %v5172
  %v5174 = vrot.slane %v5160, %v5173
  %v5175 = vcombine.low %v5119, %v5135
  %v5176 = vcombine.high %v5119, %v5135
  %v5178 = vunpack.c.l.s4 1934713408
  %v5179 = vunpack.c.0.s8 %v5178
  %v5180 = vlaneseq
  %v5181 = vshrl.u32 %v5180, 7
  %v5182 = vsub.s32 %v5179, %v5181
  %v5183 = vrot.slane %v5175, %v5182
  %v5185 = vunpack.c.l.s4 1934713408
  %v5186 = vunpack.c.0.s8 %v5185
  %v5187 = vlaneseq
  %v5188 = vshrl.u32 %v5187, 7
  %v5189 = vsub.s32 %v5186, %v5188
  %v5190 = vrot.slane %v5176, %v5189
  %v5191 = vcombine.low %v5126, %v5142
  %v5192 = vcombine.high %v5126, %v5142
  %v5194 = vunpack.c.l.s4 1934713408
  %v5195 = vunpack.c.0.s8 %v5194
  %v5196 = vlaneseq
  %v5197 = vshrl.u32 %v5196, 7
  %v5198 = vsub.s32 %v5195, %v5197
  %v5199 = vrot.slane %v5191, %v5198
  %v5201 = vunpack.c.l.s4 1934713408
  %v5202 = vunpack.c.0.s8 %v5201
  %v5203 = vlaneseq
  %v5204 = vshrl.u32 %v5203, 7
  %v5205 = vsub.s32 %v5202, %v5204
  %v5206 = vrot.slane %v5192, %v5205
  %v5207 = vcombine.low %v5151, %v5183
  %v5208 = vcombine.high %v5151, %v5183
  %v5209 = vcombine.low %v5158, %v5190
  %v5210 = vcombine.high %v5158, %v5190
  %v5211 = vcombine.low %v5167, %v5199
  %v5212 = vcombine.high %v5167, %v5199
  %v5213 = vcombine.low %v5174, %v5206
  %v5214 = vcombine.high %v5174, %v5206
  %v5215 = vcombine.low %v3250, %v3258
  %v5216 = vcombine.high %v3250, %v3258
  %v5218 = vunpack.c.l.s4 1983009808
  %v5219 = vunpack.c.0.s8 %v5218
  %v5220 = vlaneseq
  %v5221 = vshrl.u32 %v5220, 7
  %v5222 = vsub.s32 %v5219, %v5221
  %v5223 = vrot.slane %v5215, %v5222
  %v5225 = vunpack.c.l.s4 1983009808
  %v5226 = vunpack.c.0.s8 %v5225
  %v5227 = vlaneseq
  %v5228 = vshrl.u32 %v5227, 7
  %v5229 = vsub.s32 %v5226, %v5228
  %v5230 = vrot.slane %v5216, %v5229
  %v5231 = vcombine.low %v3254, %v3262
  %v5232 = vcombine.high %v3254, %v3262
  %v5234 = vunpack.c.l.s4 1983009808
  %v5235 = vunpack.c.0.s8 %v5234
  %v5236 = vlaneseq
  %v5237 = vshrl.u32 %v5236, 7
  %v5238 = vsub.s32 %v5235, %v5237
  %v5239 = vrot.slane %v5231, %v5238
  %v5241 = vunpack.c.l.s4 1983009808
  %v5242 = vunpack.c.0.s8 %v5241
  %v5243 = vlaneseq
  %v5244 = vshrl.u32 %v5243, 7
  %v5245 = vsub.s32 %v5242, %v5244
  %v5246 = vrot.slane %v5232, %v5245
  %v5247 = vcombine.low %v3266, %v3274
  %v5248 = vcombine.high %v3266, %v3274
  %v5250 = vunpack.c.l.s4 1983009808
  %v5251 = vunpack.c.0.s8 %v5250
  %v5252 = vlaneseq
  %v5253 = vshrl.u32 %v5252, 7
  %v5254 = vsub.s32 %v5251, %v5253
  %v5255 = vrot.slane %v5247, %v5254
  %v5257 = vunpack.c.l.s4 1983009808
  %v5258 = vunpack.c.0.s8 %v5257
  %v5259 = vlaneseq
  %v5260 = vshrl.u32 %v5259, 7
  %v5261 = vsub.s32 %v5258, %v5260
  %v5262 = vrot.slane %v5248, %v5261
  %v5263 = vcombine.low %v3270, %v3278
  %v5264 = vcombine.high %v3270, %v3278
  %v5266 = vunpack.c.l.s4 1983009808
  %v5267 = vunpack.c.0.s8 %v5266
  %v5268 = vlaneseq
  %v5269 = vshrl.u32 %v5268, 7
  %v5270 = vsub.s32 %v5267, %v5269
  %v5271 = vrot.slane %v5263, %v5270
  %v5273 = vunpack.c.l.s4 1983009808
  %v5274 = vunpack.c.0.s8 %v5273
  %v5275 = vlaneseq
  %v5276 = vshrl.u32 %v5275, 7
  %v5277 = vsub.s32 %v5274, %v5276
  %v5278 = vrot.slane %v5264, %v5277
  %v5279 = vcombine.low %v5223, %v5239
  %v5280 = vcombine.high %v5223, %v5239
  %v5282 = vunpack.c.l.s4 1934713408
  %v5283 = vunpack.c.0.s8 %v5282
  %v5284 = vlaneseq
  %v5285 = vshrl.u32 %v5284, 7
  %v5286 = vsub.s32 %v5283, %v5285
  %v5287 = vrot.slane %v5279, %v5286
  %v5289 = vunpack.c.l.s4 1934713408
  %v5290 = vunpack.c.0.s8 %v5289
  %v5291 = vlaneseq
  %v5292 = vshrl.u32 %v5291, 7
  %v5293 = vsub.s32 %v5290, %v5292
  %v5294 = vrot.slane %v5280, %v5293
  %v5295 = vcombine.low %v5230, %v5246
  %v5296 = vcombine.high %v5230, %v5246
  %v5298 = vunpack.c.l.s4 1934713408
  %v5299 = vunpack.c.0.s8 %v5298
  %v5300 = vlaneseq
  %v5301 = vshrl.u32 %v5300, 7
  %v5302 = vsub.s32 %v5299, %v5301
  %v5303 = vrot.slane %v5295, %v5302
  %v5305 = vunpack.c.l.s4 1934713408
  %v5306 = vunpack.c.0.s8 %v5305
  %v5307 = vlaneseq
  %v5308 = vshrl.u32 %v5307, 7
  %v5309 = vsub.s32 %v5306, %v5308
  %v5310 = vrot.slane %v5296, %v5309
  %v5311 = vcombine.low %v5255, %v5271
  %v5312 = vcombine.high %v5255, %v5271
  %v5314 = vunpack.c.l.s4 1934713408
  %v5315 = vunpack.c.0.s8 %v5314
  %v5316 = vlaneseq
  %v5317 = vshrl.u32 %v5316, 7
  %v5318 = vsub.s32 %v5315, %v5317
  %v5319 = vrot.slane %v5311, %v5318
  %v5321 = vunpack.c.l.s4 1934713408
  %v5322 = vunpack.c.0.s8 %v5321
  %v5323 = vlaneseq
  %v5324 = vshrl.u32 %v5323, 7
  %v5325 = vsub.s32 %v5322, %v5324
  %v5326 = vrot.slane %v5312, %v5325
  %v5327 = vcombine.low %v5262, %v5278
  %v5328 = vcombine.high %v5262, %v5278
  %v5330 = vunpack.c.l.s4 1934713408
  %v5331 = vunpack.c.0.s8 %v5330
  %v5332 = vlaneseq
  %v5333 = vshrl.u32 %v5332, 7
  %v5334 = vsub.s32 %v5331, %v5333
  %v5335 = vrot.slane %v5327, %v5334
  %v5337 = vunpack.c.l.s4 1934713408
  %v5338 = vunpack.c.0.s8 %v5337
  %v5339 = vlaneseq
  %v5340 = vshrl.u32 %v5339, 7
  %v5341 = vsub.s32 %v5338, %v5340
  %v5342 = vrot.slane %v5328, %v5341
  %v5343 = vcombine.low %v5287, %v5319
  %v5344 = vcombine.high %v5287, %v5319
  %v5345 = vcombine.low %v5294, %v5326
  %v5346 = vcombine.high %v5294, %v5326
  %v5347 = vcombine.low %v5303, %v5335
  %v5348 = vcombine.high %v5303, %v5335
  %v5349 = vcombine.low %v5310, %v5342
  %v5350 = vcombine.high %v5310, %v5342
  %v5351 = vcombine.low %v3282, %v3290
  %v5352 = vcombine.high %v3282, %v3290
  %v5354 = vunpack.c.l.s4 1983009808
  %v5355 = vunpack.c.0.s8 %v5354
  %v5356 = vlaneseq
  %v5357 = vshrl.u32 %v5356, 7
  %v5358 = vsub.s32 %v5355, %v5357
  %v5359 = vrot.slane %v5351, %v5358
  %v5361 = vunpack.c.l.s4 1983009808
  %v5362 = vunpack.c.0.s8 %v5361
  %v5363 = vlaneseq
  %v5364 = vshrl.u32 %v5363, 7
  %v5365 = vsub.s32 %v5362, %v5364
  %v5366 = vrot.slane %v5352, %v5365
  %v5367 = vcombine.low %v3286, %v3294
  %v5368 = vcombine.high %v3286, %v3294
  %v5370 = vunpack.c.l.s4 1983009808
  %v5371 = vunpack.c.0.s8 %v5370
  %v5372 = vlaneseq
  %v5373 = vshrl.u32 %v5372, 7
  %v5374 = vsub.s32 %v5371, %v5373
  %v5375 = vrot.slane %v5367, %v5374
  %v5377 = vunpack.c.l.s4 1983009808
  %v5378 = vunpack.c.0.s8 %v5377
  %v5379 = vlaneseq
  %v5380 = vshrl.u32 %v5379, 7
  %v5381 = vsub.s32 %v5378, %v5380
  %v5382 = vrot.slane %v5368, %v5381
  %v5383 = vcombine.low %v3298, %v3306
  %v5384 = vcombine.high %v3298, %v3306
  %v5386 = vunpack.c.l.s4 1983009808
  %v5387 = vunpack.c.0.s8 %v5386
  %v5388 = vlaneseq
  %v5389 = vshrl.u32 %v5388, 7
  %v5390 = vsub.s32 %v5387, %v5389
  %v5391 = vrot.slane %v5383, %v5390
  %v5393 = vunpack.c.l.s4 1983009808
  %v5394 = vunpack.c.0.s8 %v5393
  %v5395 = vlaneseq
  %v5396 = vshrl.u32 %v5395, 7
  %v5397 = vsub.s32 %v5394, %v5396
  %v5398 = vrot.slane %v5384, %v5397
  %v5399 = vcombine.low %v3302, %v3310
  %v5400 = vcombine.high %v3302, %v3310
  %v5402 = vunpack.c.l.s4 1983009808
  %v5403 = vunpack.c.0.s8 %v5402
  %v5404 = vlaneseq
  %v5405 = vshrl.u32 %v5404, 7
  %v5406 = vsub.s32 %v5403, %v5405
  %v5407 = vrot.slane %v5399, %v5406
  %v5409 = vunpack.c.l.s4 1983009808
  %v5410 = vunpack.c.0.s8 %v5409
  %v5411 = vlaneseq
  %v5412 = vshrl.u32 %v5411, 7
  %v5413 = vsub.s32 %v5410, %v5412
  %v5414 = vrot.slane %v5400, %v5413
  %v5415 = vcombine.low %v5359, %v5375
  %v5416 = vcombine.high %v5359, %v5375
  %v5418 = vunpack.c.l.s4 1934713408
  %v5419 = vunpack.c.0.s8 %v5418
  %v5420 = vlaneseq
  %v5421 = vshrl.u32 %v5420, 7
  %v5422 = vsub.s32 %v5419, %v5421
  %v5423 = vrot.slane %v5415, %v5422
  %v5425 = vunpack.c.l.s4 1934713408
  %v5426 = vunpack.c.0.s8 %v5425
  %v5427 = vlaneseq
  %v5428 = vshrl.u32 %v5427, 7
  %v5429 = vsub.s32 %v5426, %v5428
  %v5430 = vrot.slane %v5416, %v5429
  %v5431 = vcombine.low %v5366, %v5382
  %v5432 = vcombine.high %v5366, %v5382
  %v5434 = vunpack.c.l.s4 1934713408
  %v5435 = vunpack.c.0.s8 %v5434
  %v5436 = vlaneseq
  %v5437 = vshrl.u32 %v5436, 7
  %v5438 = vsub.s32 %v5435, %v5437
  %v5439 = vrot.slane %v5431, %v5438
  %v5441 = vunpack.c.l.s4 1934713408
  %v5442 = vunpack.c.0.s8 %v5441
  %v5443 = vlaneseq
  %v5444 = vshrl.u32 %v5443, 7
  %v5445 = vsub.s32 %v5442, %v5444
  %v5446 = vrot.slane %v5432, %v5445
  %v5447 = vcombine.low %v5391, %v5407
  %v5448 = vcombine.high %v5391, %v5407
  %v5450 = vunpack.c.l.s4 1934713408
  %v5451 = vunpack.c.0.s8 %v5450
  %v5452 = vlaneseq
  %v5453 = vshrl.u32 %v5452, 7
  %v5454 = vsub.s32 %v5451, %v5453
  %v5455 = vrot.slane %v5447, %v5454
  %v5457 = vunpack.c.l.s4 1934713408
  %v5458 = vunpack.c.0.s8 %v5457
  %v5459 = vlaneseq
  %v5460 = vshrl.u32 %v5459, 7
  %v5461 = vsub.s32 %v5458, %v5460
  %v5462 = vrot.slane %v5448, %v5461
  %v5463 = vcombine.low %v5398, %v5414
  %v5464 = vcombine.high %v5398, %v5414
  %v5466 = vunpack.c.l.s4 1934713408
  %v5467 = vunpack.c.0.s8 %v5466
  %v5468 = vlaneseq
  %v5469 = vshrl.u32 %v5468, 7
  %v5470 = vsub.s32 %v5467, %v5469
  %v5471 = vrot.slane %v5463, %v5470
  %v5473 = vunpack.c.l.s4 1934713408
  %v5474 = vunpack.c.0.s8 %v5473
  %v5475 = vlaneseq
  %v5476 = vshrl.u32 %v5475, 7
  %v5477 = vsub.s32 %v5474, %v5476
  %v5478 = vrot.slane %v5464, %v5477
  %v5479 = vcombine.low %v5423, %v5455
  %v5480 = vcombine.high %v5423, %v5455
  %v5481 = vcombine.low %v5430, %v5462
  %v5482 = vcombine.high %v5430, %v5462
  %v5483 = vcombine.low %v5439, %v5471
  %v5484 = vcombine.high %v5439, %v5471
  %v5485 = vcombine.low %v5446, %v5478
  %v5486 = vcombine.high %v5446, %v5478
  %5491 = vrot.lane.b32.xlu0 %v3440, 32
  %v5492 = vpop.permute.xlu0 %5491
  %5493 = vrot.lane.b32.xlu0 %v3576, 32
  %v5494 = vpop.permute.xlu0 %5493
  %5495 = vrot.lane.b32.xlu0 %v3712, 32
  %v5496 = vpop.permute.xlu0 %5495
  %5497 = vrot.lane.b32.xlu0 %v3848, 32
  %v5498 = vpop.permute.xlu0 %5497
  %5507 = vrot.lane.b32.xlu0 %v3441, 64
  %v5508 = vpop.permute.xlu0 %5507
  %5509 = vrot.lane.b32.xlu0 %v3577, 64
  %v5510 = vpop.permute.xlu0 %5509
  %5511 = vrot.lane.b32.xlu0 %v3713, 64
  %v5512 = vpop.permute.xlu0 %5511
  %5513 = vrot.lane.b32.xlu0 %v3849, 64
  %v5514 = vpop.permute.xlu0 %5513
  %5523 = vrot.lane.b32.xlu0 %v3442, 96
  %v5524 = vpop.permute.xlu0 %5523
  %5525 = vrot.lane.b32.xlu0 %v3578, 96
  %v5526 = vpop.permute.xlu0 %5525
  %5527 = vrot.lane.b32.xlu0 %v3714, 96
  %v5528 = vpop.permute.xlu0 %5527
  %5529 = vrot.lane.b32.xlu0 %v3850, 96
  %v5530 = vpop.permute.xlu0 %5529
  %5539 = vrot.lane.b32.xlu0 %v3444, 32
  %v5540 = vpop.permute.xlu0 %5539
  %5541 = vrot.lane.b32.xlu0 %v3580, 32
  %v5542 = vpop.permute.xlu0 %5541
  %5543 = vrot.lane.b32.xlu0 %v3716, 32
  %v5544 = vpop.permute.xlu0 %5543
  %5545 = vrot.lane.b32.xlu0 %v3852, 32
  %v5546 = vpop.permute.xlu0 %5545
  %5555 = vrot.lane.b32.xlu0 %v3445, 64
  %v5556 = vpop.permute.xlu0 %5555
  %5557 = vrot.lane.b32.xlu0 %v3581, 64
  %v5558 = vpop.permute.xlu0 %5557
  %5559 = vrot.lane.b32.xlu0 %v3717, 64
  %v5560 = vpop.permute.xlu0 %5559
  %5561 = vrot.lane.b32.xlu0 %v3853, 64
  %v5562 = vpop.permute.xlu0 %5561
  %5571 = vrot.lane.b32.xlu0 %v3446, 96
  %v5572 = vpop.permute.xlu0 %5571
  %5573 = vrot.lane.b32.xlu0 %v3582, 96
  %v5574 = vpop.permute.xlu0 %5573
  %5575 = vrot.lane.b32.xlu0 %v3718, 96
  %v5576 = vpop.permute.xlu0 %5575
  %5577 = vrot.lane.b32.xlu0 %v3854, 96
  %v5578 = vpop.permute.xlu0 %5577
  %5587 = vrot.lane.b32.xlu0 %v3984, 32
  %v5588 = vpop.permute.xlu0 %5587
  %5589 = vrot.lane.b32.xlu0 %v4120, 32
  %v5590 = vpop.permute.xlu0 %5589
  %5591 = vrot.lane.b32.xlu0 %v4256, 32
  %v5592 = vpop.permute.xlu0 %5591
  %5593 = vrot.lane.b32.xlu0 %v4392, 32
  %v5594 = vpop.permute.xlu0 %5593
  %5603 = vrot.lane.b32.xlu0 %v3985, 64
  %v5604 = vpop.permute.xlu0 %5603
  %5605 = vrot.lane.b32.xlu0 %v4121, 64
  %v5606 = vpop.permute.xlu0 %5605
  %5607 = vrot.lane.b32.xlu0 %v4257, 64
  %v5608 = vpop.permute.xlu0 %5607
  %5609 = vrot.lane.b32.xlu0 %v4393, 64
  %v5610 = vpop.permute.xlu0 %5609
  %5619 = vrot.lane.b32.xlu0 %v3986, 96
  %v5620 = vpop.permute.xlu0 %5619
  %5621 = vrot.lane.b32.xlu0 %v4122, 96
  %v5622 = vpop.permute.xlu0 %5621
  %5623 = vrot.lane.b32.xlu0 %v4258, 96
  %v5624 = vpop.permute.xlu0 %5623
  %5625 = vrot.lane.b32.xlu0 %v4394, 96
  %v5626 = vpop.permute.xlu0 %5625
  %5635 = vrot.lane.b32.xlu0 %v3988, 32
  %v5636 = vpop.permute.xlu0 %5635
  %5637 = vrot.lane.b32.xlu0 %v4124, 32
  %v5638 = vpop.permute.xlu0 %5637
  %5639 = vrot.lane.b32.xlu0 %v4260, 32
  %v5640 = vpop.permute.xlu0 %5639
  %5641 = vrot.lane.b32.xlu0 %v4396, 32
  %v5642 = vpop.permute.xlu0 %5641
  %5651 = vrot.lane.b32.xlu0 %v3989, 64
  %v5652 = vpop.permute.xlu0 %5651
  %5653 = vrot.lane.b32.xlu0 %v4125, 64
  %v5654 = vpop.permute.xlu0 %5653
  %5655 = vrot.lane.b32.xlu0 %v4261, 64
  %v5656 = vpop.permute.xlu0 %5655
  %5657 = vrot.lane.b32.xlu0 %v4397, 64
  %v5658 = vpop.permute.xlu0 %5657
  %5667 = vrot.lane.b32.xlu0 %v3990, 96
  %v5668 = vpop.permute.xlu0 %5667
  %5669 = vrot.lane.b32.xlu0 %v4126, 96
  %v5670 = vpop.permute.xlu0 %5669
  %5671 = vrot.lane.b32.xlu0 %v4262, 96
  %v5672 = vpop.permute.xlu0 %5671
  %5673 = vrot.lane.b32.xlu0 %v4398, 96
  %v5674 = vpop.permute.xlu0 %5673
  %5683 = vrot.lane.b32.xlu0 %v4528, 32
  %v5684 = vpop.permute.xlu0 %5683
  %5685 = vrot.lane.b32.xlu0 %v4664, 32
  %v5686 = vpop.permute.xlu0 %5685
  %5687 = vrot.lane.b32.xlu0 %v4800, 32
  %v5688 = vpop.permute.xlu0 %5687
  %5689 = vrot.lane.b32.xlu0 %v4936, 32
  %v5690 = vpop.permute.xlu0 %5689
  %5699 = vrot.lane.b32.xlu0 %v4529, 64
  %v5700 = vpop.permute.xlu0 %5699
  %5701 = vrot.lane.b32.xlu0 %v4665, 64
  %v5702 = vpop.permute.xlu0 %5701
  %5703 = vrot.lane.b32.xlu0 %v4801, 64
  %v5704 = vpop.permute.xlu0 %5703
  %5705 = vrot.lane.b32.xlu0 %v4937, 64
  %v5706 = vpop.permute.xlu0 %5705
  %5715 = vrot.lane.b32.xlu0 %v4530, 96
  %v5716 = vpop.permute.xlu0 %5715
  %5717 = vrot.lane.b32.xlu0 %v4666, 96
  %v5718 = vpop.permute.xlu0 %5717
  %5719 = vrot.lane.b32.xlu0 %v4802, 96
  %v5720 = vpop.permute.xlu0 %5719
  %5721 = vrot.lane.b32.xlu0 %v4938, 96
  %v5722 = vpop.permute.xlu0 %5721
  %5731 = vrot.lane.b32.xlu0 %v4532, 32
  %v5732 = vpop.permute.xlu0 %5731
  %5733 = vrot.lane.b32.xlu0 %v4668, 32
  %v5734 = vpop.permute.xlu0 %5733
  %5735 = vrot.lane.b32.xlu0 %v4804, 32
  %v5736 = vpop.permute.xlu0 %5735
  %5737 = vrot.lane.b32.xlu0 %v4940, 32
  %v5738 = vpop.permute.xlu0 %5737
  %5747 = vrot.lane.b32.xlu0 %v4533, 64
  %v5748 = vpop.permute.xlu0 %5747
  %5749 = vrot.lane.b32.xlu0 %v4669, 64
  %v5750 = vpop.permute.xlu0 %5749
  %5751 = vrot.lane.b32.xlu0 %v4805, 64
  %v5752 = vpop.permute.xlu0 %5751
  %5753 = vrot.lane.b32.xlu0 %v4941, 64
  %v5754 = vpop.permute.xlu0 %5753
  %5763 = vrot.lane.b32.xlu0 %v4534, 96
  %v5764 = vpop.permute.xlu0 %5763
  %5765 = vrot.lane.b32.xlu0 %v4670, 96
  %v5766 = vpop.permute.xlu0 %5765
  %5767 = vrot.lane.b32.xlu0 %v4806, 96
  %v5768 = vpop.permute.xlu0 %5767
  %5769 = vrot.lane.b32.xlu0 %v4942, 96
  %v5770 = vpop.permute.xlu0 %5769
  %5779 = vrot.lane.b32.xlu0 %v5072, 32
  %v5780 = vpop.permute.xlu0 %5779
  %5781 = vrot.lane.b32.xlu0 %v5208, 32
  %v5782 = vpop.permute.xlu0 %5781
  %5783 = vrot.lane.b32.xlu0 %v5344, 32
  %v5784 = vpop.permute.xlu0 %5783
  %5785 = vrot.lane.b32.xlu0 %v5480, 32
  %v5786 = vpop.permute.xlu0 %5785
  %5795 = vrot.lane.b32.xlu0 %v5073, 64
  %v5796 = vpop.permute.xlu0 %5795
  %5797 = vrot.lane.b32.xlu0 %v5209, 64
  %v5798 = vpop.permute.xlu0 %5797
  %5799 = vrot.lane.b32.xlu0 %v5345, 64
  %v5800 = vpop.permute.xlu0 %5799
  %5801 = vrot.lane.b32.xlu0 %v5481, 64
  %v5802 = vpop.permute.xlu0 %5801
  %5811 = vrot.lane.b32.xlu0 %v5074, 96
  %v5812 = vpop.permute.xlu0 %5811
  %5813 = vrot.lane.b32.xlu0 %v5210, 96
  %v5814 = vpop.permute.xlu0 %5813
  %5815 = vrot.lane.b32.xlu0 %v5346, 96
  %v5816 = vpop.permute.xlu0 %5815
  %5817 = vrot.lane.b32.xlu0 %v5482, 96
  %v5818 = vpop.permute.xlu0 %5817
  %5827 = vrot.lane.b32.xlu0 %v5076, 32
  %v5828 = vpop.permute.xlu0 %5827
  %5829 = vrot.lane.b32.xlu0 %v5212, 32
  %v5830 = vpop.permute.xlu0 %5829
  %5831 = vrot.lane.b32.xlu0 %v5348, 32
  %v5832 = vpop.permute.xlu0 %5831
  %5833 = vrot.lane.b32.xlu0 %v5484, 32
  %v5834 = vpop.permute.xlu0 %5833
  %5843 = vrot.lane.b32.xlu0 %v5077, 64
  %v5844 = vpop.permute.xlu0 %5843
  %5845 = vrot.lane.b32.xlu0 %v5213, 64
  %v5846 = vpop.permute.xlu0 %5845
  %5847 = vrot.lane.b32.xlu0 %v5349, 64
  %v5848 = vpop.permute.xlu0 %5847
  %5849 = vrot.lane.b32.xlu0 %v5485, 64
  %v5850 = vpop.permute.xlu0 %5849
  %5859 = vrot.lane.b32.xlu0 %v5078, 96
  %v5860 = vpop.permute.xlu0 %5859
  %5861 = vrot.lane.b32.xlu0 %v5214, 96
  %v5862 = vpop.permute.xlu0 %5861
  %5863 = vrot.lane.b32.xlu0 %v5350, 96
  %v5864 = vpop.permute.xlu0 %5863
  %5865 = vrot.lane.b32.xlu0 %v5486, 96
  %v5866 = vpop.permute.xlu0 %5865
  %vm5871 = vcmask 261120
  %v5872 = vsel %vm5871, %v3439, %v5492
  %v5873 = vsel %vm5871, %v3575, %v5494
  %v5874 = vsel %vm5871, %v3711, %v5496
  %v5875 = vsel %vm5871, %v3847, %v5498
  %vm5876 = vcmask 523264
  %v5877 = vsel %vm5876, %v5872, %v5508
  %v5878 = vsel %vm5876, %v5873, %v5510
  %v5879 = vsel %vm5876, %v5874, %v5512
  %v5880 = vsel %vm5876, %v5875, %v5514
  %vm5881 = vcmask 785408
  %v5882 = vsel %vm5881, %v5877, %v5524
  %v5883 = vsel %vm5881, %v5878, %v5526
  %v5884 = vsel %vm5881, %v5879, %v5528
  %v5885 = vsel %vm5881, %v5880, %v5530
  %v5886 = vsel %vm5871, %v3443, %v5540
  %v5887 = vsel %vm5871, %v3579, %v5542
  %v5888 = vsel %vm5871, %v3715, %v5544
  %v5889 = vsel %vm5871, %v3851, %v5546
  %v5890 = vsel %vm5876, %v5886, %v5556
  %v5891 = vsel %vm5876, %v5887, %v5558
  %v5892 = vsel %vm5876, %v5888, %v5560
  %v5893 = vsel %vm5876, %v5889, %v5562
  %v5894 = vsel %vm5881, %v5890, %v5572
  %v5895 = vsel %vm5881, %v5891, %v5574
  %v5896 = vsel %vm5881, %v5892, %v5576
  %v5897 = vsel %vm5881, %v5893, %v5578
  %v5898 = vsel %vm5871, %v3983, %v5588
  %v5899 = vsel %vm5871, %v4119, %v5590
  %v5900 = vsel %vm5871, %v4255, %v5592
  %v5901 = vsel %vm5871, %v4391, %v5594
  %v5902 = vsel %vm5876, %v5898, %v5604
  %v5903 = vsel %vm5876, %v5899, %v5606
  %v5904 = vsel %vm5876, %v5900, %v5608
  %v5905 = vsel %vm5876, %v5901, %v5610
  %v5906 = vsel %vm5881, %v5902, %v5620
  %v5907 = vsel %vm5881, %v5903, %v5622
  %v5908 = vsel %vm5881, %v5904, %v5624
  %v5909 = vsel %vm5881, %v5905, %v5626
  %v5910 = vsel %vm5871, %v3987, %v5636
  %v5911 = vsel %vm5871, %v4123, %v5638
  %v5912 = vsel %vm5871, %v4259, %v5640
  %v5913 = vsel %vm5871, %v4395, %v5642
  %v5914 = vsel %vm5876, %v5910, %v5652
  %v5915 = vsel %vm5876, %v5911, %v5654
  %v5916 = vsel %vm5876, %v5912, %v5656
  %v5917 = vsel %vm5876, %v5913, %v5658
  %v5918 = vsel %vm5881, %v5914, %v5668
  %v5919 = vsel %vm5881, %v5915, %v5670
  %v5920 = vsel %vm5881, %v5916, %v5672
  %v5921 = vsel %vm5881, %v5917, %v5674
  %v5922 = vsel %vm5871, %v4527, %v5684
  %v5923 = vsel %vm5871, %v4663, %v5686
  %v5924 = vsel %vm5871, %v4799, %v5688
  %v5925 = vsel %vm5871, %v4935, %v5690
  %v5926 = vsel %vm5876, %v5922, %v5700
  %v5927 = vsel %vm5876, %v5923, %v5702
  %v5928 = vsel %vm5876, %v5924, %v5704
  %v5929 = vsel %vm5876, %v5925, %v5706
  %v5930 = vsel %vm5881, %v5926, %v5716
  %v5931 = vsel %vm5881, %v5927, %v5718
  %v5932 = vsel %vm5881, %v5928, %v5720
  %v5933 = vsel %vm5881, %v5929, %v5722
  %v5934 = vsel %vm5871, %v4531, %v5732
  %v5935 = vsel %vm5871, %v4667, %v5734
  %v5936 = vsel %vm5871, %v4803, %v5736
  %v5937 = vsel %vm5871, %v4939, %v5738
  %v5938 = vsel %vm5876, %v5934, %v5748
  %v5939 = vsel %vm5876, %v5935, %v5750
  %v5940 = vsel %vm5876, %v5936, %v5752
  %v5941 = vsel %vm5876, %v5937, %v5754
  %v5942 = vsel %vm5881, %v5938, %v5764
  %v5943 = vsel %vm5881, %v5939, %v5766
  %v5944 = vsel %vm5881, %v5940, %v5768
  %v5945 = vsel %vm5881, %v5941, %v5770
  %v5946 = vsel %vm5871, %v5071, %v5780
  %v5947 = vsel %vm5871, %v5207, %v5782
  %v5948 = vsel %vm5871, %v5343, %v5784
  %v5949 = vsel %vm5871, %v5479, %v5786
  %v5950 = vsel %vm5876, %v5946, %v5796
  %v5951 = vsel %vm5876, %v5947, %v5798
  %v5952 = vsel %vm5876, %v5948, %v5800
  %v5953 = vsel %vm5876, %v5949, %v5802
  %v5954 = vsel %vm5881, %v5950, %v5812
  %v5955 = vsel %vm5881, %v5951, %v5814
  %v5956 = vsel %vm5881, %v5952, %v5816
  %v5957 = vsel %vm5881, %v5953, %v5818
  %v5958 = vsel %vm5871, %v5075, %v5828
  %v5959 = vsel %vm5871, %v5211, %v5830
  %v5960 = vsel %vm5871, %v5347, %v5832
  %v5961 = vsel %vm5871, %v5483, %v5834
  %v5962 = vsel %vm5876, %v5958, %v5844
  %v5963 = vsel %vm5876, %v5959, %v5846
  %v5964 = vsel %vm5876, %v5960, %v5848
  %v5965 = vsel %vm5876, %v5961, %v5850
  %v5966 = vsel %vm5881, %v5962, %v5860
  %v5967 = vsel %vm5881, %v5963, %v5862
  %v5968 = vsel %vm5881, %v5964, %v5864
  %v5969 = vsel %vm5881, %v5965, %v5866
  %v5970 = vpack.c.bf16 %v5883, %v5882
  %v5971 = vpack.c.bf16 %v5895, %v5894
  %v5972 = vpack.c.bf16 %v5907, %v5906
  %v5973 = vpack.c.bf16 %v5919, %v5918
  %v5974 = vpack.c.bf16 %v5931, %v5930
  %v5975 = vpack.c.bf16 %v5943, %v5942
  %v5976 = vpack.c.bf16 %v5955, %v5954
  %v5977 = vpack.c.bf16 %v5967, %v5966
  %v5978 = vpack.c.bf16 %v5885, %v5884
  %v5979 = vpack.c.bf16 %v5897, %v5896
  %v5980 = vpack.c.bf16 %v5909, %v5908
  %v5981 = vpack.c.bf16 %v5921, %v5920
  %v5982 = vpack.c.bf16 %v5933, %v5932
  %v5983 = vpack.c.bf16 %v5945, %v5944
  %v5984 = vpack.c.bf16 %v5957, %v5956
  %v5985 = vpack.c.bf16 %v5969, %v5968
  %v5986 = vld [vmem:[%s6] sm:$0xf]
  %v5987 = vld [vmem:[%s6 + $0x4] sm:$0xf]
  %v5988 = vld [vmem:[%s6 + $0x8] sm:$0xf]
  %v5989 = vld [vmem:[%s6 + $0xc] sm:$0xf]
  %v5990 = vld [vmem:[%s7] sm:$0xff]
  %v5991 = vld [vmem:[%s7 + $0x8] sm:$0xff]
  %v5992 = vld [vmem:[%s7 + $0x10] sm:$0xff]
  %v5993 = vld [vmem:[%s7 + $0x18] sm:$0xff]
  %5995 = vset.pattern.permute.xlu0 0
  %5996 = vperm.xlu0 %5995, %v5990
  %v5997 = vpop.permute.xlu0 %5996
  %6000 = vset.pattern.permute.xlu0 0
  %6001 = vperm.xlu0 %6000, %v5991
  %v6002 = vpop.permute.xlu0 %6001
  %6005 = vset.pattern.permute.xlu0 0
  %6006 = vperm.xlu0 %6005, %v5992
  %v6007 = vpop.permute.xlu0 %6006
  %6010 = vset.pattern.permute.xlu0 0
  %6011 = vperm.xlu0 %6010, %v5993
  %v6012 = vpop.permute.xlu0 %6011
  %v6018 = vunpack.c.l.b16 %v5986
  %v6019 = vunpack.c.l.b16 %v5987
  %v6020 = vunpack.c.l.b16 %v5988
  %v6021 = vunpack.c.l.b16 %v5989
  %v6022 = vpack.c.b16 %v6019, %v6018
  %v6023 = vpack.c.b16 %v6021, %v6020
  %v6025 = vsel %vm5871, %v6022, 0
  %v6028 = vsel %vm5871, %v6023, 0
  %6030 = vmatprep.subr.bf16.mxu0 %v5971
  %6031 = vmatpush1.bf16.msra.mxu0 %v5970
  %6032 = vmatprep.subr.bf16.mxu0 %v5979
  %6033 = vmatpush1.bf16.msra.mxu0 %v5978
  %6034 = vmatprep.subr.bf16.mxu0 0
  %6035 = vmatpush1.bf16.msra.mxu0 0
  %6036 = vmatprep.subr.bf16.mxu0 0
  %6037 = vmatpush1.bf16.msra.mxu0 0
  %6038 = vmatprep.subr.bf16.mxu0 0
  %6039 = vmatpush1.bf16.msra.mxu0 0
  %6040 = vmatprep.subr.bf16.mxu0 0
  %6041 = vmatpush1.bf16.msra.mxu0 0
  %6042 = vmatprep.subr.bf16.mxu0 0
  %6043 = vmatpush1.bf16.msra.mxu0 0
  %6044 = vmatprep.subr.bf16.mxu0 0
  %6045 = vmatpush1.bf16.msra.mxu0 0
  %6046 = vmatprep.subr.bf16.mxu0 0
  %6047 = vmatpush1.bf16.msra.mxu0 0
  %6048 = vmatprep.subr.bf16.mxu0 0
  %6049 = vmatpush1.bf16.msra.mxu0 0
  %6050 = vmatprep.subr.bf16.mxu0 0
  %6051 = vmatpush1.bf16.msra.mxu0 0
  %6052 = vmatprep.subr.bf16.mxu0 0
  %6053 = vmatpush1.bf16.msra.mxu0 0
  %6054 = vmatprep.subr.bf16.mxu0 0
  %6055 = vmatpush1.bf16.msra.mxu0 0
  %6056 = vmatprep.subr.bf16.mxu0 0
  %6057 = vmatpush1.bf16.msra.mxu0 0
  %6058 = vmatprep.subr.bf16.mxu0 0
  %6059 = vmatpush1.bf16.msra.mxu0 0
  %6060 = vmatprep.subr.bf16.mxu0 0
  %6061 = vmatpush1.bf16.msra.mxu0 0
  %6062 = vmatprep.mubr.bf16.mxu0 0
  %6063 = vmatmul.mubr.bf16.gmra.mrb[0].mxu0 %v6025
  %v6064 = vpop.f32.mrb[0].mxu0
  %v6065 = vadd.f32 %v5997, %v6064
  %v6066 = vpop.f32.mrb[0].mxu0
  %v6067 = vadd.f32 %v5997, %v6066
  %v6068 = vpop.f32.mrb[0].mxu0
  %v6069 = vadd.f32 %v6002, %v6068
  %v6070 = vpop.f32.mrb[0].mxu0
  %v6071 = vadd.f32 %v6002, %v6070
  %6072 = vmatprep.mubr.bf16.mxu0 0
  %6073 = vmatmul.mubr.bf16.gmra.mrb[0].mxu0 %v6028
  %v6074 = vpop.f32.mrb[0].mxu0
  %v6075 = vadd.f32 %v6007, %v6074
  %v6076 = vpop.f32.mrb[0].mxu0
  %v6077 = vadd.f32 %v6007, %v6076
  %v6078 = vpop.f32.mrb[0].mxu0
  %v6079 = vadd.f32 %v6012, %v6078
  %v6080 = vpop.f32.mrb[0].mxu0
  %v6081 = vadd.f32 %v6012, %v6080
  %6082 = vdwg.mxu0
  %6083 = vmatprep.subr.bf16.mxu0 %v5973
  %6084 = vmatpush1.bf16.msra.mxu0 %v5972
  %6085 = vmatprep.subr.bf16.mxu0 %v5981
  %6086 = vmatpush1.bf16.msra.mxu0 %v5980
  %6087 = vmatprep.subr.bf16.mxu0 0
  %6088 = vmatpush1.bf16.msra.mxu0 0
  %6089 = vmatprep.subr.bf16.mxu0 0
  %6090 = vmatpush1.bf16.msra.mxu0 0
  %6091 = vmatprep.subr.bf16.mxu0 0
  %6092 = vmatpush1.bf16.msra.mxu0 0
  %6093 = vmatprep.subr.bf16.mxu0 0
  %6094 = vmatpush1.bf16.msra.mxu0 0
  %6095 = vmatprep.subr.bf16.mxu0 0
  %6096 = vmatpush1.bf16.msra.mxu0 0
  %6097 = vmatprep.subr.bf16.mxu0 0
  %6098 = vmatpush1.bf16.msra.mxu0 0
  %6099 = vmatprep.subr.bf16.mxu0 0
  %6100 = vmatpush1.bf16.msra.mxu0 0
  %6101 = vmatprep.subr.bf16.mxu0 0
  %6102 = vmatpush1.bf16.msra.mxu0 0
  %6103 = vmatprep.subr.bf16.mxu0 0
  %6104 = vmatpush1.bf16.msra.mxu0 0
  %6105 = vmatprep.subr.bf16.mxu0 0
  %6106 = vmatpush1.bf16.msra.mxu0 0
  %6107 = vmatprep.subr.bf16.mxu0 0
  %6108 = vmatpush1.bf16.msra.mxu0 0
  %6109 = vmatprep.subr.bf16.mxu0 0
  %6110 = vmatpush1.bf16.msra.mxu0 0
  %6111 = vmatprep.subr.bf16.mxu0 0
  %6112 = vmatpush1.bf16.msra.mxu0 0
  %6113 = vmatprep.subr.bf16.mxu0 0
  %6114 = vmatpush1.bf16.msra.mxu0 0
  %6115 = vmatprep.mubr.bf16.mxu0 0
  %6116 = vmatmul.mubr.bf16.gmra.mrb[0].mxu0 %v6025
  %v6117 = vpop.f32.mrb[0].mxu0
  %v6118 = vadd.f32 %v5997, %v6117
  %v6119 = vpop.f32.mrb[0].mxu0
  %v6120 = vadd.f32 %v5997, %v6119
  %v6121 = vpop.f32.mrb[0].mxu0
  %v6122 = vadd.f32 %v6002, %v6121
  %v6123 = vpop.f32.mrb[0].mxu0
  %v6124 = vadd.f32 %v6002, %v6123
  %6125 = vmatprep.mubr.bf16.mxu0 0
  %6126 = vmatmul.mubr.bf16.gmra.mrb[0].mxu0 %v6028
  %v6127 = vpop.f32.mrb[0].mxu0
  %v6128 = vadd.f32 %v6007, %v6127
  %v6129 = vpop.f32.mrb[0].mxu0
  %v6130 = vadd.f32 %v6007, %v6129
  %v6131 = vpop.f32.mrb[0].mxu0
  %v6132 = vadd.f32 %v6012, %v6131
  %v6133 = vpop.f32.mrb[0].mxu0
  %v6134 = vadd.f32 %v6012, %v6133
  %6135 = vdwg.mxu0
  %6136 = vmatprep.subr.bf16.mxu0 %v5975
  %6137 = vmatpush1.bf16.msra.mxu0 %v5974
  %6138 = vmatprep.subr.bf16.mxu0 %v5983
  %6139 = vmatpush1.bf16.msra.mxu0 %v5982
  %6140 = vmatprep.subr.bf16.mxu0 0
  %6141 = vmatpush1.bf16.msra.mxu0 0
  %6142 = vmatprep.subr.bf16.mxu0 0
  %6143 = vmatpush1.bf16.msra.mxu0 0
  %6144 = vmatprep.subr.bf16.mxu0 0
  %6145 = vmatpush1.bf16.msra.mxu0 0
  %6146 = vmatprep.subr.bf16.mxu0 0
  %6147 = vmatpush1.bf16.msra.mxu0 0
  %6148 = vmatprep.subr.bf16.mxu0 0
  %6149 = vmatpush1.bf16.msra.mxu0 0
  %6150 = vmatprep.subr.bf16.mxu0 0
  %6151 = vmatpush1.bf16.msra.mxu0 0
  %6152 = vmatprep.subr.bf16.mxu0 0
  %6153 = vmatpush1.bf16.msra.mxu0 0
  %6154 = vmatprep.subr.bf16.mxu0 0
  %6155 = vmatpush1.bf16.msra.mxu0 0
  %6156 = vmatprep.subr.bf16.mxu0 0
  %6157 = vmatpush1.bf16.msra.mxu0 0
  %6158 = vmatprep.subr.bf16.mxu0 0
  %6159 = vmatpush1.bf16.msra.mxu0 0
  %6160 = vmatprep.subr.bf16.mxu0 0
  %6161 = vmatpush1.bf16.msra.mxu0 0
  %6162 = vmatprep.subr.bf16.mxu0 0
  %6163 = vmatpush1.bf16.msra.mxu0 0
  %6164 = vmatprep.subr.bf16.mxu0 0
  %6165 = vmatpush1.bf16.msra.mxu0 0
  %6166 = vmatprep.subr.bf16.mxu0 0
  %6167 = vmatpush1.bf16.msra.mxu0 0
  %6168 = vmatprep.mubr.bf16.mxu0 0
  %6169 = vmatmul.mubr.bf16.gmra.mrb[0].mxu0 %v6025
  %v6170 = vpop.f32.mrb[0].mxu0
  %v6171 = vadd.f32 %v5997, %v6170
  %v6172 = vpop.f32.mrb[0].mxu0
  %v6173 = vadd.f32 %v5997, %v6172
  %v6174 = vpop.f32.mrb[0].mxu0
  %v6175 = vadd.f32 %v6002, %v6174
  %v6176 = vpop.f32.mrb[0].mxu0
  %v6177 = vadd.f32 %v6002, %v6176
  %6178 = vmatprep.mubr.bf16.mxu0 0
  %6179 = vmatmul.mubr.bf16.gmra.mrb[0].mxu0 %v6028
  %v6180 = vpop.f32.mrb[0].mxu0
  %v6181 = vadd.f32 %v6007, %v6180
  %v6182 = vpop.f32.mrb[0].mxu0
  %v6183 = vadd.f32 %v6007, %v6182
  %v6184 = vpop.f32.mrb[0].mxu0
  %v6185 = vadd.f32 %v6012, %v6184
  %v6186 = vpop.f32.mrb[0].mxu0
  %v6187 = vadd.f32 %v6012, %v6186
  %6188 = vdwg.mxu0
  %6189 = vmatprep.subr.bf16.mxu0 %v5977
  %6190 = vmatpush1.bf16.msra.mxu0 %v5976
  %6191 = vmatprep.subr.bf16.mxu0 %v5985
  %6192 = vmatpush1.bf16.msra.mxu0 %v5984
  %6193 = vmatprep.subr.bf16.mxu0 0
  %6194 = vmatpush1.bf16.msra.mxu0 0
  %6195 = vmatprep.subr.bf16.mxu0 0
  %6196 = vmatpush1.bf16.msra.mxu0 0
  %6197 = vmatprep.subr.bf16.mxu0 0
  %6198 = vmatpush1.bf16.msra.mxu0 0
  %6199 = vmatprep.subr.bf16.mxu0 0
  %6200 = vmatpush1.bf16.msra.mxu0 0
  %6201 = vmatprep.subr.bf16.mxu0 0
  %6202 = vmatpush1.bf16.msra.mxu0 0
  %6203 = vmatprep.subr.bf16.mxu0 0
  %6204 = vmatpush1.bf16.msra.mxu0 0
  %6205 = vmatprep.subr.bf16.mxu0 0
  %6206 = vmatpush1.bf16.msra.mxu0 0
  %6207 = vmatprep.subr.bf16.mxu0 0
  %6208 = vmatpush1.bf16.msra.mxu0 0
  %6209 = vmatprep.subr.bf16.mxu0 0
  %6210 = vmatpush1.bf16.msra.mxu0 0
  %6211 = vmatprep.subr.bf16.mxu0 0
  %6212 = vmatpush1.bf16.msra.mxu0 0
  %6213 = vmatprep.subr.bf16.mxu0 0
  %6214 = vmatpush1.bf16.msra.mxu0 0
  %6215 = vmatprep.subr.bf16.mxu0 0
  %6216 = vmatpush1.bf16.msra.mxu0 0
  %6217 = vmatprep.subr.bf16.mxu0 0
  %6218 = vmatpush1.bf16.msra.mxu0 0
  %6219 = vmatprep.subr.bf16.mxu0 0
  %6220 = vmatpush1.bf16.msra.mxu0 0
  %6221 = vmatprep.mubr.bf16.mxu0 0
  %6222 = vmatmul.mubr.bf16.gmra.mrb[0].mxu0 %v6025
  %v6223 = vpop.f32.mrb[0].mxu0
  %v6224 = vadd.f32 %v5997, %v6223
  %v6225 = vpop.f32.mrb[0].mxu0
  %v6226 = vadd.f32 %v5997, %v6225
  %v6227 = vpop.f32.mrb[0].mxu0
  %v6228 = vadd.f32 %v6002, %v6227
  %v6229 = vpop.f32.mrb[0].mxu0
  %v6230 = vadd.f32 %v6002, %v6229
  %6231 = vmatprep.mubr.bf16.mxu0 0
  %6232 = vmatmul.mubr.bf16.gmra.mrb[0].mxu0 %v6028
  %v6233 = vpop.f32.mrb[0].mxu0
  %v6234 = vadd.f32 %v6007, %v6233
  %v6235 = vpop.f32.mrb[0].mxu0
  %v6236 = vadd.f32 %v6007, %v6235
  %v6237 = vpop.f32.mrb[0].mxu0
  %v6238 = vadd.f32 %v6012, %v6237
  %v6239 = vpop.f32.mrb[0].mxu0
  %v6240 = vadd.f32 %v6012, %v6239
  %6241 = vdwg.mxu0
  %6242 = vst [vmem:[%s8] sm:$0xff] %v6065
  %6243 = vst [vmem:[%s8 + $0x8] sm:$0xff] %v6067
  %6244 = vst [vmem:[%s8 + $0x10] sm:$0xff] %v6118
  %6245 = vst [vmem:[%s8 + $0x18] sm:$0xff] %v6120
  %6246 = vst [vmem:[%s8 + $0x20] sm:$0xff] %v6171
  %6247 = vst [vmem:[%s8 + $0x28] sm:$0xff] %v6173
  %6248 = vst [vmem:[%s8 + $0x30] sm:$0xff] %v6224
  %6249 = vst [vmem:[%s8 + $0x38] sm:$0xff] %v6226
  %6250 = vst [vmem:[%s8 + $0x40] sm:$0xff] %v6069
  %6251 = vst [vmem:[%s8 + $0x48] sm:$0xff] %v6071
  %6252 = vst [vmem:[%s8 + $0x50] sm:$0xff] %v6122
  %6253 = vst [vmem:[%s8 + $0x58] sm:$0xff] %v6124
  %6254 = vst [vmem:[%s8 + $0x60] sm:$0xff] %v6175
  %6255 = vst [vmem:[%s8 + $0x68] sm:$0xff] %v6177
  %6256 = vst [vmem:[%s8 + $0x70] sm:$0xff] %v6228
  %6257 = vst [vmem:[%s8 + $0x78] sm:$0xff] %v6230
  %6258 = vst [vmem:[%s8 + $0x80] sm:$0xff] %v6075
  %6259 = vst [vmem:[%s8 + $0x88] sm:$0xff] %v6077
  %6260 = vst [vmem:[%s8 + $0x90] sm:$0xff] %v6128
  %6261 = vst [vmem:[%s8 + $0x98] sm:$0xff] %v6130
  %6262 = vst [vmem:[%s8 + $0xa0] sm:$0xff] %v6181
  %6263 = vst [vmem:[%s8 + $0xa8] sm:$0xff] %v6183
  %6264 = vst [vmem:[%s8 + $0xb0] sm:$0xff] %v6234
  %6265 = vst [vmem:[%s8 + $0xb8] sm:$0xff] %v6236
  %6266 = vst [vmem:[%s8 + $0xc0] sm:$0xff] %v6079
  %6267 = vst [vmem:[%s8 + $0xc8] sm:$0xff] %v6081
  %6268 = vst [vmem:[%s8 + $0xd0] sm:$0xff] %v6132
  %6269 = vst [vmem:[%s8 + $0xd8] sm:$0xff] %v6134
  %6270 = vst [vmem:[%s8 + $0xe0] sm:$0xff] %v6185
  %6271 = vst [vmem:[%s8 + $0xe8] sm:$0xff] %v6187
  %6272 = vst [vmem:[%s8 + $0xf0] sm:$0xff] %v6238
  %6273 = vst [vmem:[%s8 + $0xf8] sm:$0xff] %v6240
  // Predicated region
  $region41: #{dense_md_forward.1} parent=0 // pred_check
    _
  $region42: #{dense_md_forward.1} parent=0 // pred_check_branch
    %6275 = sbr.rel (0) target = $region44
  $region43: #{dense_md_forward.1} parent=0 // pred_region
    _
  $region44: #{dense_md_forward.1} parent=0 // pred_fallthru
    _
  // Predicated region
  $region45: #{dense_md_forward.1} parent=0 // pred_check
    _
  $region46: #{dense_md_forward.1} parent=0 // pred_check_branch
    %6277 = sbr.rel (0) target = $region48
  $region47: #{dense_md_forward.1} parent=0 // pred_region
    _
  $region48: #{dense_md_forward.1} parent=0 // pred_fallthru
    _

</llo_original>
